<compile_context>
chip_gen: v7x
topology: tpu7x:2x2x1
jax: 0.10.0
libtpu: 0.0.40
codegen_flags: <defaults>
</compile_context>

<pallas_src>
import functools

import jax
import jax.numpy as jnp
from jax import lax
from jax.experimental import pallas as pl
from jax.experimental.pallas import tpu as pltpu


# ---------------------------------------------------------------------------
# small helpers
# ---------------------------------------------------------------------------
def _round_up(x, m):
    return (x + m - 1) // m * m


def _largest_div(x, cands):
    for c in cands:
        if x % c == 0:
            return c
    return 128


# ---------------------------------------------------------------------------
# Pallas kernels
# ---------------------------------------------------------------------------
def _mm_bias_kernel(a_ref, w_ref, b_ref, *refs, relu, has_res):
    """out = act(A @ W + bias [+ residual]); K accumulated in f32 scratch."""
    if has_res:
        r_ref, o_ref, acc_ref = refs
    else:
        r_ref = None
        o_ref, acc_ref = refs

    k = pl.program_id(2)

    @pl.when(k == 0)
    def _():
        acc_ref[...] = jnp.zeros_like(acc_ref)

    acc_ref[...] += jnp.dot(a_ref[...], w_ref[...],
                            preferred_element_type=jnp.float32)

    @pl.when(k == pl.num_programs(2) - 1)
    def _():
        y = acc_ref[...] + b_ref[...]
        if has_res:
            y = y + r_ref[...].astype(jnp.float32)
        if relu:
            y = jnp.maximum(y, 0.0)
        o_ref[...] = y.astype(o_ref.dtype)


def _expand_group_weight(w_scr, wc, col_grp, Cpg):
    """Expand compact (Cpg, 128) group weight to block-diagonal (128, 128).

    Done with masked stores into a VMEM scratch (no reshapes needed)."""
    gc = 128 // Cpg
    for g in range(gc):
        w_scr[g * Cpg:(g + 1) * Cpg, :] = jnp.where(
            col_grp == g, wc, jnp.zeros_like(wc))


def _grouped_fused_kernel(x_ref, w_ref, b_ref, o_ref, a_scr, w_scr,
                          *, B, Ho, Wo, Cpg, cps, relu):
    """64-group 3x3 conv, stride 1, pad 1, fused window extraction.

    x_ref: (B, Ho+2, Wo+2, cps*128) padded activations (this chunk-step)
    w_ref: (cps, 9, Cpg, 128) compact per-group weights (BN folded)
    """
    col_grp = lax.broadcasted_iota(jnp.int32, (1, 128), 1) // Cpg
    Ma = a_scr.shape[0]
    for c in range(cps):
        acc = jnp.zeros((Ma, 128), jnp.float32)
        for t in range(9):
            dy, dx = t // 3, t % 3
            # flatten the shifted 3x3 tap window into the (M, 128) scratch
            for b in range(B):
                for h in range(Ho):
                    r0 = (b * Ho + h) * Wo
                    a_scr[r0:r0 + Wo, :] = x_ref[
                        b, h + dy, dx:dx + Wo, c * 128:(c + 1) * 128]
            _expand_group_weight(w_scr, w_ref[c, t], col_grp, Cpg)
            acc = acc + jnp.dot(a_scr[...], w_scr[...],
                                preferred_element_type=jnp.float32)
        y = acc + b_ref[:, c * 128:(c + 1) * 128]
        if relu:
            y = jnp.maximum(y, 0.0)
        o_ref[:, c * 128:(c + 1) * 128] = y.astype(o_ref.dtype)


def _grouped_taps_kernel(taps_ref, w_ref, b_ref, o_ref, w_scr,
                         *, Cpg, cps, relu):
    """Grouped 3x3 conv from a pre-materialized tap tensor (stride-2 layers)."""
    col_grp = lax.broadcasted_iota(jnp.int32, (1, 128), 1) // Cpg
    TM = o_ref.shape[0]
    for c in range(cps):
        acc = jnp.zeros((TM, 128), jnp.float32)
        for t in range(9):
            _expand_group_weight(w_scr, w_ref[c, t], col_grp, Cpg)
            acc = acc + jnp.dot(taps_ref[t, :, c * 128:(c + 1) * 128],
                                w_scr[...],
                                preferred_element_type=jnp.float32)
        y = acc + b_ref[:, c * 128:(c + 1) * 128]
        if relu:
            y = jnp.maximum(y, 0.0)
        o_ref[:, c * 128:(c + 1) * 128] = y.astype(o_ref.dtype)


def _max9_kernel(x_ref, o_ref):
    m = x_ref[0]
    for i in range(1, 9):
        m = jnp.maximum(m, x_ref[i])
    o_ref[...] = m


# ---------------------------------------------------------------------------
# Pallas wrappers
# ---------------------------------------------------------------------------
def matmul_bias(a, w_p, b_p, n_out, *, relu, residual=None,
                out_dtype=jnp.bfloat16):
    """a:[M,K] bf16 @ pre-padded w_p:[Kp,Np] bf16 + bias (+ residual), act."""
    M, K = a.shape
    Kp, Np = w_p.shape

    if M <= 128:
        # weight-streaming bound: big tiles so the grid collapses to few steps
        TM = _round_up(M, 8)
        Mp = TM
        TN = _largest_div(Np, (512, 256, 128))
        if Np // TN == 1 and Np >= 256:
            TN = Np // 2            # keep a parallel axis of extent >= 2
        TK = _largest_div(Kp, (2048, 1024, 512, 256, 128))
    else:
        TM = 256
        Mp = _round_up(M, TM)
        TN = _largest_div(Np, (256, 128))
        TK = _largest_div(Kp, (512, 256, 128))

    a = a.astype(jnp.bfloat16)
    if (Mp != M) or (Kp != K):
        a = jnp.pad(a, ((0, Mp - M), (0, Kp - K)))

    has_res = residual is not None
    inputs = [a, w_p, b_p]
    in_specs = [
        pl.BlockSpec((TM, TK), lambda i, j, k: (i, k)),
        pl.BlockSpec((TK, TN), lambda i, j, k: (k, j)),
        pl.BlockSpec((1, TN), lambda i, j, k: (0, j)),
    ]
    if has_res:
        r = residual.astype(jnp.bfloat16)
        Mr, Nr = r.shape
        if (Mp != Mr) or (Np != Nr):
            r = jnp.pad(r, ((0, Mp - Mr), (0, Np - Nr)))
        inputs.append(r)
        in_specs.append(pl.BlockSpec((TM, TN), lambda i, j, k: (i, j)))

    grid = (Mp // TM, Np // TN, Kp // TK)
    out_isz = jnp.dtype(out_dtype).itemsize
    out = pl.pallas_call(
        functools.partial(_mm_bias_kernel, relu=relu, has_res=has_res),
        out_shape=jax.ShapeDtypeStruct((Mp, Np), out_dtype),
        grid_spec=pltpu.PrefetchScalarGridSpec(
            num_scalar_prefetch=0,
            grid=grid,
            in_specs=in_specs,
            out_specs=pl.BlockSpec((TM, TN), lambda i, j, k: (i, j)),
            scratch_shapes=[pltpu.VMEM((TM, TN), jnp.float32)],
        ),
        compiler_params=pltpu.CompilerParams(
            dimension_semantics=("parallel", "parallel", "arbitrary")),
        cost_estimate=pl.CostEstimate(
            flops=2 * Mp * Np * Kp,
            transcendentals=0,
            bytes_accessed=Mp * Kp * 2 + Kp * Np * 2 + Mp * Np * out_isz + Np * 4),
    )(*inputs)
    if (Mp != M) or (Np != n_out):
        out = out[:M, :n_out]
    return out


def grouped_conv_bn_relu(x, prep, stride):
    """64-group 3x3 conv (pad=1) + fused BN + ReLU.  NHWC bf16 in/out."""
    B, H, W, C = x.shape
    n_chunks = C // 128
    cps = max(1, n_chunks // 2)           # chunks per grid step
    n_steps = n_chunks // cps
    Cpg = prep['w'].shape[2]

    if stride == 1:
        Ho, Wo = H, W
        M = B * Ho * Wo
        Ma = _round_up(M, 8)
        xp = jnp.pad(x, ((0, 0), (1, 1), (1, 1), (0, 0))).astype(jnp.bfloat16)
        Hp, Wp = H + 2, W + 2
        out = pl.pallas_call(
            functools.partial(_grouped_fused_kernel, B=B, Ho=Ho, Wo=Wo,
                              Cpg=Cpg, cps=cps, relu=True),
            out_shape=jax.ShapeDtypeStruct((Ma, C), jnp.bfloat16),
            grid_spec=pltpu.PrefetchScalarGridSpec(
                num_scalar_prefetch=0,
                grid=(n_steps,),
                in_specs=[
                    pl.BlockSpec((B, Hp, Wp, cps * 128),
                                 lambda c: (0, 0, 0, c)),
                    pl.BlockSpec((cps, 9, Cpg, 128), lambda c: (c, 0, 0, 0)),
                    pl.BlockSpec((1, cps * 128), lambda c: (0, c)),
                ],
                out_specs=pl.BlockSpec((Ma, cps * 128), lambda c: (0, c)),
                scratch_shapes=[pltpu.VMEM((Ma, 128), jnp.bfloat16),
                                pltpu.VMEM((128, 128), jnp.bfloat16)],
            ),
            compiler_params=pltpu.CompilerParams(
                dimension_semantics=("parallel",)),
        )(xp, prep['w'], prep['b'])
        return out[:M].reshape(B, Ho, Wo, C)

    # stride-2 path (3 layers, tiny spatial): pre-materialized tap tensor
    taps, Ho, Wo = im2col_taps(x, 3, 3, stride, 1)      # (9, M, C)
    M = B * Ho * Wo
    Ma = _round_up(M, 8)
    if Ma != M:
        taps = jnp.pad(taps, ((0, 0), (0, Ma - M), (0, 0)))
    out = pl.pallas_call(
        functools.partial(_grouped_taps_kernel, Cpg=Cpg, cps=cps, relu=True),
        out_shape=jax.ShapeDtypeStruct((Ma, C), jnp.bfloat16),
        grid_spec=pltpu.PrefetchScalarGridSpec(
            num_scalar_prefetch=0,
            grid=(n_steps,),
            in_specs=[
                pl.BlockSpec((9, Ma, cps * 128), lambda c: (0, 0, c)),
                pl.BlockSpec((cps, 9, Cpg, 128), lambda c: (c, 0, 0, 0)),
                pl.BlockSpec((1, cps * 128), lambda c: (0, c)),
            ],
            out_specs=pl.BlockSpec((Ma, cps * 128), lambda c: (0, c)),
            scratch_shapes=[pltpu.VMEM((128, 128), jnp.bfloat16)],
        ),
        compiler_params=pltpu.CompilerParams(
            dimension_semantics=("parallel",)),
    )(taps.astype(jnp.bfloat16), prep['w'], prep['b'])
    return out[:M].reshape(B, Ho, Wo, C)


def maxpool_3x3_s2(x):
    """MaxPool2d(kernel=3, stride=2, padding=1) on NHWC bf16 (post-ReLU)."""
    B, H, W, C = x.shape
    Ho = (H + 2 - 3) // 2 + 1
    Wo = (W + 2 - 3) // 2 + 1
    xp = jnp.pad(x, ((0, 0), (1, 1), (1, 1), (0, 0)))   # 0-pad safe post-ReLU
    slices = []
    for i in range(3):
        for j in range(3):
            slices.append(xp[:, i:i + 2 * (Ho - 1) + 1:2,
                             j:j + 2 * (Wo - 1) + 1:2, :])
    M = B * Ho * Wo
    stacked = jnp.stack(slices, 0).reshape(9, M, C)
    RT = 256 if M % 256 == 0 else _round_up(M, 8)
    Mp = _round_up(M, RT)
    if Mp != M:
        stacked = jnp.pad(stacked, ((0, 0), (0, Mp - M), (0, 0)))
    out = pl.pallas_call(
        _max9_kernel,
        out_shape=jax.ShapeDtypeStruct((Mp, C), jnp.bfloat16),
        grid_spec=pltpu.PrefetchScalarGridSpec(
            num_scalar_prefetch=0,
            grid=(Mp // RT,),
            in_specs=[pl.BlockSpec((9, RT, C), lambda i: (0, i, 0))],
            out_specs=pl.BlockSpec((RT, C), lambda i: (i, 0)),
        ),
        compiler_params=pltpu.CompilerParams(
            dimension_semantics=("parallel",)),
    )(stacked)
    return out[:M].reshape(B, Ho, Wo, C)


# ---------------------------------------------------------------------------
# Conv lowering helpers (plain-JAX glue inside the per-stage jits)
# ---------------------------------------------------------------------------
def im2col(x, kh, kw, stride, pad):
    B, H, W, C = x.shape
    Ho = (H + 2 * pad - kh) // stride + 1
    Wo = (W + 2 * pad - kw) // stride + 1
    xp = jnp.pad(x, ((0, 0), (pad, pad), (pad, pad), (0, 0)))
    cols = []
    for i in range(kh):
        for j in range(kw):
            cols.append(xp[:, i:i + stride * (Ho - 1) + 1:stride,
                           j:j + stride * (Wo - 1) + 1:stride, :])
    patches = jnp.concatenate(cols, axis=-1)             # [B,Ho,Wo,kh*kw*C]
    return patches.reshape(B * Ho * Wo, kh * kw * C), Ho, Wo


def im2col_taps(x, kh, kw, stride, pad):
    """Tap-major patches [kh*kw, B*Ho*Wo, C] (stride-2 grouped convs only)."""
    B, H, W, C = x.shape
    Ho = (H + 2 * pad - kh) // stride + 1
    Wo = (W + 2 * pad - kw) // stride + 1
    xp = jnp.pad(x, ((0, 0), (pad, pad), (pad, pad), (0, 0)))
    taps = []
    for i in range(kh):
        for j in range(kw):
            taps.append(xp[:, i:i + stride * (Ho - 1) + 1:stride,
                           j:j + stride * (Wo - 1) + 1:stride, :])
    return jnp.stack(taps, 0).reshape(kh * kw, B * Ho * Wo, C), Ho, Wo


def conv_general(x, prep, n_out, kh, kw, stride, pad, *, relu,
                 out_dtype=jnp.bfloat16):
    B = x.shape[0]
    patches, ho, wo = im2col(x, kh, kw, stride, pad)
    out = matmul_bias(patches, prep['w'], prep['b'], n_out,
                      relu=relu, out_dtype=out_dtype)
    return out.reshape(B, ho, wo, n_out)


def conv1x1(x, prep, n_out, *, stride=1, relu, residual=None,
            out_dtype=jnp.bfloat16):
    if stride > 1:
        x = x[:, ::stride, ::stride, :]
    B, H, W, C = x.shape
    res = None
    if residual is not None:
        res = residual.reshape(B * H * W, -1)
    out = matmul_bias(x.reshape(B * H * W, C), prep['w'], prep['b'], n_out,
                      relu=relu, residual=res, out_dtype=out_dtype)
    return out.reshape(B, H, W, n_out)


# ---------------------------------------------------------------------------
# Weight preparation (done once in build_params)
# ---------------------------------------------------------------------------
def conv_w_to_mat(w):
    """torch conv weight (Cout,Cin,kh,kw) -> matmul weight (kh*kw*Cin, Cout)."""
    Cout, Cin, kh, kw = w.shape
    return jnp.transpose(w, (2, 3, 1, 0)).reshape(kh * kw * Cin, Cout)


def prep_dense(w_mat, scale, bias):
    """Fold BN scale into columns, pad to 128-multiples, cast bf16."""
    K, N = w_mat.shape
    Kp, Np = _round_up(K, 128), _round_up(N, 128)
    w = w_mat * scale[None, :]
    w = jnp.pad(w, ((0, Kp - K), (0, Np - N))).astype(jnp.bfloat16)
    b = jnp.pad(bias, (0, Np - N)).reshape(1, Np).astype(jnp.float32)
    return {'w': w, 'b': b}


def prep_grouped(w, scale, bias):
    """groups=64 weight (C, C//64, 3, 3) -> compact (C//128, 9, Cpg, 128)."""
    C, Cpg, kh, kw = w.shape
    assert C % 128 == 0 and 128 % Cpg == 0, (C, Cpg)
    n_chunks = C // 128
    wt = jnp.transpose(w, (2, 3, 1, 0)).reshape(kh * kw, Cpg, C)  # (t, ci, o)
    wt = wt * scale[None, None, :]
    wt = wt.reshape(kh * kw, Cpg, n_chunks, 128)
    wt = jnp.transpose(wt, (2, 0, 1, 3))                          # (c, t, ci, o)
    return {'w': wt.astype(jnp.bfloat16),
            'b': bias.reshape(1, C).astype(jnp.float32)}


def prep_deconv(w, scale, bias):
    """ConvTranspose2d(4,2,1) weight (Cin,Cout,4,4) -> 4 phase matmul weights."""
    Cin, Cout = w.shape[0], w.shape[1]
    phases = []
    for py in (0, 1):
        for px in (0, 1):
            ky = (3, 1) if py == 0 else (2, 0)
            kx = (3, 1) if px == 0 else (2, 0)
            wp = jnp.take(w, jnp.array(ky), axis=2)
            wp = jnp.take(wp, jnp.array(kx), axis=3)       # (Cin, Cout, 2, 2)
            w_mat = jnp.transpose(wp, (2, 3, 0, 1)).reshape(4 * Cin, Cout)
            phases.append(prep_dense(w_mat, scale, bias))
    return phases


# ---------------------------------------------------------------------------
# Deterministic parameter construction
# ---------------------------------------------------------------------------
class ParamGen:
    def __init__(self, seed=0):
        self.key = jax.random.PRNGKey(seed)
        self.i = 0

    def next(self):
        self.i += 1
        return jax.random.fold_in(self.key, self.i)

    def conv(self, cout, cin, kh, kw):
        fan_in = cin * kh * kw
        return (jax.random.normal(self.next(), (cout, cin, kh, kw),
                                  jnp.float32) / jnp.sqrt(float(fan_in)))

    def conv_t(self, cin, cout, kh, kw):
        fan_in = cin * kh * kw
        return (jax.random.normal(self.next(), (cin, cout, kh, kw),
                                  jnp.float32) / jnp.sqrt(float(fan_in)))

    def bn(self, c):
        gamma = 1.0 + 0.1 * jax.random.normal(self.next(), (c,), jnp.float32)
        beta = 0.1 * jax.random.normal(self.next(), (c,), jnp.float32)
        mean = jnp.zeros((c,), jnp.float32)
        var = jnp.ones((c,), jnp.float32)
        scale = gamma / jnp.sqrt(var + 1e-5)
        bias = beta - mean * scale
        return scale, bias


def make_block(pg, cin, cmid, downsample):
    p = {
        'w1': prep_dense(conv_w_to_mat(pg.conv(cmid, cin, 1, 1)), *pg.bn(cmid)),
        'wg': prep_grouped(pg.conv(cmid, cmid // 64, 3, 3), *pg.bn(cmid)),
        'w3': prep_dense(conv_w_to_mat(pg.conv(cmid, cmid, 1, 1)), *pg.bn(cmid)),
    }
    if downsample:
        p['wd'] = prep_dense(conv_w_to_mat(pg.conv(cmid, cin, 1, 1)),
                             *pg.bn(cmid))
    return p


def make_stage(pg, cin, cmid, nblocks):
    blocks = [make_block(pg, cin, cmid, True)]
    for _ in range(nblocks - 1):
        blocks.append(make_block(pg, cmid, cmid, False))
    return blocks


STAGE_CFG = ((64, 256, 3, 1), (256, 512, 4, 2),
             (512, 1024, 23, 2), (1024, 2048, 3, 2))   # (cin, cmid, nblocks, stride)


def build_params(seed=0):
    pg = ParamGen(seed)
    params = {
        'stem': prep_dense(conv_w_to_mat(pg.conv(64, 3, 7, 7)), *pg.bn(64)),
        'stages': [make_stage(pg, cin, cmid, nb)
                   for (cin, cmid, nb, _) in STAGE_CFG],
    }
    deconv = []
    cin = 2048
    for _ in range(3):
        w = pg.conv_t(cin, 256, 4, 4)
        sc, bi = pg.bn(256)
        deconv.append(prep_deconv(w, sc, bi))
        cin = 256
    params['deconv'] = deconv
    wf = 0.001 * jax.random.normal(pg.next(), (15, 256, 1, 1), jnp.float32)
    params['final'] = prep_dense(conv_w_to_mat(wf),
                                 jnp.ones((15,), jnp.float32),
                                 jnp.zeros((15,), jnp.float32))
    return params


# ---------------------------------------------------------------------------
# Forward pass (per-structural-unit jit so identical blocks compile once)
# ---------------------------------------------------------------------------
@jax.jit
def stem_forward(x_nchw, stem_p):
    x = jnp.transpose(x_nchw, (0, 2, 3, 1)).astype(jnp.bfloat16)   # NCHW->NHWC
    # keep output padded to 128 channels (cols 64..127 are exactly 0): stays
    # lane-dense through the maxpool; downstream weights have zero K-rows there.
    x = conv_general(x, stem_p, 128, 7, 7, 2, 3, relu=True)
    return maxpool_3x3_s2(x)


@functools.partial(jax.jit, static_argnames=("stride",))
def block_forward(x, p, *, stride):
    cmid = p['w3']['b'].shape[1]
    y = conv1x1(x, p['w1'], cmid, relu=True)
    y = grouped_conv_bn_relu(y, p['wg'], stride)
    if 'wd' in p:
        sc = conv1x1(x, p['wd'], cmid, stride=stride, relu=False)
    else:
        sc = x
    # w3 1x1 conv with the residual add + ReLU fused into the matmul epilogue
    return conv1x1(y, p['w3'], cmid, relu=True, residual=sc)


@jax.jit
def deconv_forward(x, phase_preps):
    """ConvTranspose2d(k=4, s=2, p=1) + BN + ReLU via 4-phase decomposition."""
    B, H, W, _ = x.shape
    cout = phase_preps[0]['b'].shape[1]
    outs = []
    for idx, (py, px) in enumerate(((0, 0), (0, 1), (1, 0), (1, 1))):
        pad_t, pad_b = (1, 0) if py == 0 else (0, 1)
        pad_l, pad_r = (1, 0) if px == 0 else (0, 1)
        xp = jnp.pad(x, ((0, 0), (pad_t, pad_b), (pad_l, pad_r), (0, 0)))
        patches, ho, wo = im2col(xp, 2, 2, 1, 0)          # ho=H, wo=W
        o = matmul_bias(patches, phase_preps[idx]['w'], phase_preps[idx]['b'],
                        cout, relu=True)
        outs.append(o.reshape(B, ho, wo, cout))
    ph = jnp.stack(outs, 0).reshape(2, 2, B, H, W, cout)
    y = jnp.transpose(ph, (2, 3, 0, 4, 1, 5))             # (B, H, py, W, px, C)
    return y.reshape(B, 2 * H, 2 * W, cout)


@jax.jit
def final_forward(x, final_p):
    y = conv1x1(x, final_p, 15, relu=False, out_dtype=jnp.float32)
    return jnp.transpose(y, (0, 3, 1, 2))                 # NHWC -> NCHW


def pose_resnext_forward(params, x_nchw):
    x = stem_forward(x_nchw, params['stem'])
    for (_, _, _, stage_stride), stage in zip(STAGE_CFG, params['stages']):
        for bi, blk in enumerate(stage):
            x = block_forward(x, blk, stride=(stage_stride if bi == 0 else 1))
    for phase_preps in params['deconv']:
        x = deconv_forward(x, phase_preps)
    return final_forward(x, params['final'])


# ---------------------------------------------------------------------------
if __name__ == "__main__":
    key = jax.random.PRNGKey(0)
    # Small input consistent with the module: NCHW, 3 input channels.
    x = jax.random.normal(key, (2, 3, 64, 64), jnp.float32)

    params = build_params(seed=0)
    out = pose_resnext_forward(params, x)
    out = jax.block_until_ready(out)

    assert out.shape == (2, 15, 16, 16), out.shape
    assert bool(jnp.all(jnp.isfinite(out)))
    print("KERNEL_OK")
</pallas_src>

<mosaic_0001>
module attributes {stable_mosaic.version = 11 : i64} {
  func.func @_mm_bias_kernel(%arg0: i32, %arg1: i32, %arg2: i32, %arg3: memref<256x256xbf16, #tpu.memory_space<vmem>>, %arg4: memref<256x128xbf16, #tpu.memory_space<vmem>>, %arg5: memref<1x128xf32, #tpu.memory_space<vmem>>, %arg6: memref<256x128xbf16, #tpu.memory_space<vmem>>, %arg7: memref<256x128xf32, #tpu.memory_space<vmem>>) attributes {dimension_semantics = [#tpu.dimension_semantics<parallel>, #tpu.dimension_semantics<parallel>, #tpu.dimension_semantics<arbitrary>], iteration_bounds = array<i64: 8, 1, 1>, scalar_prefetch = 0 : i64, scratch_operands = 1 : i64, tpu.core_type = #tpu.core_type<tc>, window_params = [{transform_indices = @transform_0, window_bounds = array<i64: 256, 256>}, {transform_indices = @transform_1, window_bounds = array<i64: 256, 128>}, {transform_indices = @transform_2, window_bounds = array<i64: 1, 128>}, {transform_indices = @transform_3, window_bounds = array<i64: 256, 128>}]} {
    %c0_i32 = arith.constant 0 : i32
    %0 = arith.cmpi eq, %arg2, %c0_i32 : i32
    %1 = arith.extui %0 : i1 to i32
    %c0_i32_0 = arith.constant 0 : i32
    %2 = arith.cmpi ne, %1, %c0_i32_0 : i32
    scf.if %2 {
      %cst_10 = arith.constant 0.000000e+00 : f32
      %12 = vector.broadcast %cst_10 : f32 to vector<256x128xf32>
      %c0_11 = arith.constant 0 : index
      %c0_12 = arith.constant 0 : index
      %13 = vector.load %arg7[%c0_11, %c0_12] : memref<256x128xf32, #tpu.memory_space<vmem>>, vector<256x128xf32>
      tpu.vector_store %arg7[%c0_11, %c0_12], %12 {strides = array<i32>} : memref<256x128xf32, #tpu.memory_space<vmem>>, vector<256x128xf32>,
    } else {
    }
    %c0 = arith.constant 0 : index
    %c0_1 = arith.constant 0 : index
    %3 = vector.load %arg7[%c0, %c0_1] : memref<256x128xf32, #tpu.memory_space<vmem>>, vector<256x128xf32>
    %c0_2 = arith.constant 0 : index
    %c0_3 = arith.constant 0 : index
    %4 = vector.load %arg3[%c0_2, %c0_3] : memref<256x256xbf16, #tpu.memory_space<vmem>>, vector<256x256xbf16>
    %c0_4 = arith.constant 0 : index
    %c0_5 = arith.constant 0 : index
    %5 = vector.load %arg4[%c0_4, %c0_5] : memref<256x128xbf16, #tpu.memory_space<vmem>>, vector<256x128xbf16>
    %cst = arith.constant dense<0.000000e+00> : vector<256x128xf32>
    %6 = tpu.matmul %4, %5, %cst {dimension_numbers = #tpu.dot_dimension_numbers<[1], [0], [0], [1], [0, 0, 1, 1], [], []>} : vector<256x256xbf16>, vector<256x128xbf16>, vector<256x128xf32> -> vector<256x128xf32>
    %7 = arith.addf %3, %6 : vector<256x128xf32>
    %c0_6 = arith.constant 0 : index
    %c0_7 = arith.constant 0 : index
    %8 = vector.load %arg7[%c0_6, %c0_7] : memref<256x128xf32, #tpu.memory_space<vmem>>, vector<256x128xf32>
    tpu.vector_store %arg7[%c0_6, %c0_7], %7 {strides = array<i32>} : memref<256x128xf32, #tpu.memory_space<vmem>>, vector<256x128xf32>,
    %c0_i32_8 = arith.constant 0 : i32
    %9 = arith.cmpi eq, %arg2, %c0_i32_8 : i32
    %10 = arith.extui %9 : i1 to i32
    %c0_i32_9 = arith.constant 0 : i32
    %11 = arith.cmpi ne, %10, %c0_i32_9 : i32
    scf.if %11 {
      %c0_10 = arith.constant 0 : index
      %c0_11 = arith.constant 0 : index
      %12 = vector.load %arg7[%c0_10, %c0_11] : memref<256x128xf32, #tpu.memory_space<vmem>>, vector<256x128xf32>
      %c0_12 = arith.constant 0 : index
      %c0_13 = arith.constant 0 : index
      %13 = vector.load %arg5[%c0_12, %c0_13] : memref<1x128xf32, #tpu.memory_space<vmem>>, vector<1x128xf32>
      %14 = vector.broadcast %13 : vector<1x128xf32> to vector<256x128xf32>
      %15 = arith.addf %12, %14 : vector<256x128xf32>
      %cst_14 = arith.constant 0.000000e+00 : f32
      %16 = vector.broadcast %cst_14 : f32 to vector<256x128xf32>
      %17 = arith.maximumf %15, %16 : vector<256x128xf32>
      %18 = arith.truncf %17 : vector<256x128xf32> to vector<256x128xbf16>
      %c0_15 = arith.constant 0 : index
      %c0_16 = arith.constant 0 : index
      %19 = vector.load %arg6[%c0_15, %c0_16] : memref<256x128xbf16, #tpu.memory_space<vmem>>, vector<256x128xbf16>
      tpu.vector_store %arg6[%c0_15, %c0_16], %18 {strides = array<i32>} : memref<256x128xbf16, #tpu.memory_space<vmem>>, vector<256x128xbf16>,
    } else {
    }
    return
  }
  func.func @transform_0(%arg0: i32, %arg1: i32, %arg2: i32) -> (i32, i32) {
    %c0_i32 = arith.constant 0 : i32
    return %arg0, %arg2 : i32, i32
  }
  func.func @transform_1(%arg0: i32, %arg1: i32, %arg2: i32) -> (i32, i32) {
    %c0_i32 = arith.constant 0 : i32
    return %arg2, %arg1 : i32, i32
  }
  func.func @transform_2(%arg0: i32, %arg1: i32, %arg2: i32) -> (i32, i32) {
    %c0_i32 = arith.constant 0 : i32
    %c0_i32_0 = arith.constant 0 : i32
    return %c0_i32, %arg1 : i32, i32
  }
  func.func @transform_3(%arg0: i32, %arg1: i32, %arg2: i32) -> (i32, i32) {
    %c0_i32 = arith.constant 0 : i32
    return %arg0, %arg1 : i32, i32
  }
}

module attributes {stable_mosaic.version = 11 : i64} {
  func.func @_max9_kernel(%arg0: i32, %arg1: memref<9x256x128xbf16, #tpu.memory_space<vmem>>, %arg2: memref<256x128xbf16, #tpu.memory_space<vmem>>) attributes {dimension_semantics = [#tpu.dimension_semantics<parallel>], iteration_bounds = array<i64: 2>, scalar_prefetch = 0 : i64, scratch_operands = 0 : i64, tpu.core_type = #tpu.core_type<tc>, window_params = [{transform_indices = @transform_0, window_bounds = array<i64: 9, 256, 128>}, {transform_indices = @transform_1, window_bounds = array<i64: 256, 128>}]} {
    %c0 = arith.constant 0 : index
    %c0_0 = arith.constant 0 : index
    %c0_1 = arith.constant 0 : index
    %0 = vector.load %arg1[%c0, %c0_0, %c0_1] : memref<9x256x128xbf16, #tpu.memory_space<vmem>>, vector<1x256x128xbf16>
    %1 = vector.shape_cast %0 : vector<1x256x128xbf16> to vector<256x128xbf16>
    %c1 = arith.constant 1 : index
    %c0_2 = arith.constant 0 : index
    %c0_3 = arith.constant 0 : index
    %2 = vector.load %arg1[%c1, %c0_2, %c0_3] : memref<9x256x128xbf16, #tpu.memory_space<vmem>>, vector<1x256x128xbf16>
    %3 = vector.shape_cast %2 : vector<1x256x128xbf16> to vector<256x128xbf16>
    %4 = arith.maximumf %1, %3 : vector<256x128xbf16>
    %c2 = arith.constant 2 : index
    %c0_4 = arith.constant 0 : index
    %c0_5 = arith.constant 0 : index
    %5 = vector.load %arg1[%c2, %c0_4, %c0_5] : memref<9x256x128xbf16, #tpu.memory_space<vmem>>, vector<1x256x128xbf16>
    %6 = vector.shape_cast %5 : vector<1x256x128xbf16> to vector<256x128xbf16>
    %7 = arith.maximumf %4, %6 : vector<256x128xbf16>
    %c3 = arith.constant 3 : index
    %c0_6 = arith.constant 0 : index
    %c0_7 = arith.constant 0 : index
    %8 = vector.load %arg1[%c3, %c0_6, %c0_7] : memref<9x256x128xbf16, #tpu.memory_space<vmem>>, vector<1x256x128xbf16>
    %9 = vector.shape_cast %8 : vector<1x256x128xbf16> to vector<256x128xbf16>
    %10 = arith.maximumf %7, %9 : vector<256x128xbf16>
    %c4 = arith.constant 4 : index
    %c0_8 = arith.constant 0 : index
    %c0_9 = arith.constant 0 : index
    %11 = vector.load %arg1[%c4, %c0_8, %c0_9] : memref<9x256x128xbf16, #tpu.memory_space<vmem>>, vector<1x256x128xbf16>
    %12 = vector.shape_cast %11 : vector<1x256x128xbf16> to vector<256x128xbf16>
    %13 = arith.maximumf %10, %12 : vector<256x128xbf16>
    %c5 = arith.constant 5 : index
    %c0_10 = arith.constant 0 : index
    %c0_11 = arith.constant 0 : index
    %14 = vector.load %arg1[%c5, %c0_10, %c0_11] : memref<9x256x128xbf16, #tpu.memory_space<vmem>>, vector<1x256x128xbf16>
    %15 = vector.shape_cast %14 : vector<1x256x128xbf16> to vector<256x128xbf16>
    %16 = arith.maximumf %13, %15 : vector<256x128xbf16>
    %c6 = arith.constant 6 : index
    %c0_12 = arith.constant 0 : index
    %c0_13 = arith.constant 0 : index
    %17 = vector.load %arg1[%c6, %c0_12, %c0_13] : memref<9x256x128xbf16, #tpu.memory_space<vmem>>, vector<1x256x128xbf16>
    %18 = vector.shape_cast %17 : vector<1x256x128xbf16> to vector<256x128xbf16>
    %19 = arith.maximumf %16, %18 : vector<256x128xbf16>
    %c7 = arith.constant 7 : index
    %c0_14 = arith.constant 0 : index
    %c0_15 = arith.constant 0 : index
    %20 = vector.load %arg1[%c7, %c0_14, %c0_15] : memref<9x256x128xbf16, #tpu.memory_space<vmem>>, vector<1x256x128xbf16>
    %21 = vector.shape_cast %20 : vector<1x256x128xbf16> to vector<256x128xbf16>
    %22 = arith.maximumf %19, %21 : vector<256x128xbf16>
    %c8 = arith.constant 8 : index
    %c0_16 = arith.constant 0 : index
    %c0_17 = arith.constant 0 : index
    %23 = vector.load %arg1[%c8, %c0_16, %c0_17] : memref<9x256x128xbf16, #tpu.memory_space<vmem>>, vector<1x256x128xbf16>
    %24 = vector.shape_cast %23 : vector<1x256x128xbf16> to vector<256x128xbf16>
    %25 = arith.maximumf %22, %24 : vector<256x128xbf16>
    %c0_18 = arith.constant 0 : index
    %c0_19 = arith.constant 0 : index
    %26 = vector.load %arg2[%c0_18, %c0_19] : memref<256x128xbf16, #tpu.memory_space<vmem>>, vector<256x128xbf16>
    tpu.vector_store %arg2[%c0_18, %c0_19], %25 {strides = array<i32>} : memref<256x128xbf16, #tpu.memory_space<vmem>>, vector<256x128xbf16>,
    return
  }
  func.func @transform_0(%arg0: i32) -> (i32, i32, i32) {
    %c0_i32 = arith.constant 0 : i32
    %c0_i32_0 = arith.constant 0 : i32
    %c0_i32_1 = arith.constant 0 : i32
    return %c0_i32, %arg0, %c0_i32_0 : i32, i32, i32
  }
  func.func @transform_1(%arg0: i32) -> (i32, i32) {
    %c0_i32 = arith.constant 0 : i32
    %c0_i32_0 = arith.constant 0 : i32
    return %arg0, %c0_i32 : i32, i32
  }
}

</mosaic_0001>

<llo_original>
// kernel: stem_forward.2
$region0: #{stem_forward.2}
  #allocation0 [shape = 'u32[]', space=smem, size = 0x4, offset = 0x4, fixed_abs, tag = 'smem constant byte address 0x4 - core index']
  #allocation1 [shape = 'u32[144,128]{1,0:T(1,128)}', space=vmem, size = 0x12000, scoped, tag = 'internal scratch']
  #allocation2 [shape = 'f32[256,128]{1,0:T(8,128)}', space=vmem, size = 0x20000, scoped, tag = 'scratch operand']
  %s0 = inlined_call_operand.vmem [shape: bf16[2048,256], index: 0, kind: input, shape index: {}]
  %s1 = inlined_call_operand.vmem [shape: bf16[256,128], index: 1, kind: input, shape index: {}]
  %s2 = inlined_call_operand.vmem [shape: f32[1,128], index: 2, kind: input, shape index: {}]
  %s3 = inlined_call_operand.vmem [shape: bf16[2048,128], index: 3, kind: output, shape index: {}]
  %s4 = sld [smem:[#allocation0]]
  $region53: #{stem_forward.2} parent=0
    _
  %s6 = ssub.s32 1, %s4
  %s7 = scalar_select 0, %s6, %s4
  loop: start=0, step=1, limit=10
  $region2: #{stem_forward.2} parent=0 // loop_pre_header
    _
  $region3: #{stem_forward.2} parent=0 // loop_header
    %s9 = sphi 0, %s13
    %p10 = scmp.ge.s32.totalorder %s9, 10
    %s16 = sphi 0, %s35
    %s17 = sphi 0, %s31
    %s18 = sphi 0, %s27
    %s19 = sphi 0, %s16
    %s20 = sphi 0, %s17
    %s21 = sphi 0, %s18
    %s22 = sphi 0, %s19
    %s23 = sphi 0, %s20
    %s24 = sphi 0, %s21
    %s40 = sphi 0, %s42
    %s43 = sphi 0, %s40
    %s44 = sphi 0, %s43
    %s60 = sphi 0, %s44
    %s68 = sphi 0, %s70
    %s71 = sphi 0, %s68
    %s72 = sphi 0, %s71
    %s88 = sphi 0, %s72
    %s94 = sphi 0, %s96
    %s97 = sphi 0, %s94
    %s98 = sphi 0, %s97
    %s114 = sphi 0, %s98
    %s122 = sphi 0, %s124
    %s125 = sphi 0, %s122
    %s126 = sphi 0, %s125
    %s142 = sphi 0, %s126
  $region4: #{stem_forward.2} parent=0 // loop_header_branch
    %12 = sbr.rel (%p10) target = $region8
  $region5: #{stem_forward.2} parent=0 // loop_body
    %s14 = ssub.s32 %s9, 1
    %s15 = ssub.s32 %s9, 2
    %s25 = sadd.s32 1, %s18
    %p26 = scmp.ge.s32.totalorder %s25, 1
    %s27 = scalar_select %p26, 0, %s25
    %s28 = sadd.s32 1, %s17
    %s29 = scalar_select %p26, %s28, %s17
    %p30 = scmp.ge.s32.totalorder %s29, 1
    %s31 = scalar_select %p30, 0, %s29
    %s32 = sadd.s32 1, %s16
    %s33 = scalar_select %p30, %s32, %s16
    %p34 = scmp.ge.s32.totalorder %s33, 8
    %s35 = scalar_select %p34, 0, %s33
    %s36 = ssub.s32 %s16, %s35
    %s37 = ssub.s32 %s18, %s27
    %s38 = sor.u32 %s36, %s37
    %p39 = scmp.eq.s32.totalorder %s38, 0
    %s41 = sadd.s32 %s40, 1
    %s42 = scalar_select %p39, %s40, %s41
    %p45 = pneg %p39
    %p46 = scmp.eq.s32.totalorder %s9, 7
    %p47 = por %p45, %p46
    %p48 = scmp.ne.s32.totalorder %s40, %s43
    %p49 = scmp.eq.s32.totalorder %s9, 0
    %p50 = por %p48, %p49
    %p51 = scmp.ne.s32.totalorder %s40, %s43
    %p52 = scmp.eq.s32.totalorder %s14, 7
    %p53 = por %p51, %p52
    %p54 = scmp.ne.s32.totalorder %s43, %s44
    %p55 = scmp.eq.s32.totalorder %s14, 0
    %p56 = por %p54, %p55
    %p57 = scmp.ne.s32.totalorder %s43, %s44
    %p58 = scmp.eq.s32.totalorder %s15, 7
    %p59 = por %p57, %p58
    %p61 = scmp.ne.s32.totalorder %s44, %s60
    %p62 = scmp.eq.s32.totalorder %s15, 0
    %p63 = por %p61, %p62
    %s64 = ssub.s32 %s18, %s27
    %s65 = ssub.s32 %s17, %s31
    %s66 = sor.u32 %s64, %s65
    %p67 = scmp.eq.s32.totalorder %s66, 0
    %s69 = sadd.s32 %s68, 1
    %s70 = scalar_select %p67, %s68, %s69
    %p73 = pneg %p67
    %p74 = scmp.eq.s32.totalorder %s9, 7
    %p75 = por %p73, %p74
    %p76 = scmp.ne.s32.totalorder %s68, %s71
    %p77 = scmp.eq.s32.totalorder %s9, 0
    %p78 = por %p76, %p77
    %p79 = scmp.ne.s32.totalorder %s68, %s71
    %p80 = scmp.eq.s32.totalorder %s14, 7
    %p81 = por %p79, %p80
    %p82 = scmp.ne.s32.totalorder %s71, %s72
    %p83 = scmp.eq.s32.totalorder %s14, 0
    %p84 = por %p82, %p83
    %p85 = scmp.ne.s32.totalorder %s71, %s72
    %p86 = scmp.eq.s32.totalorder %s15, 7
    %p87 = por %p85, %p86
    %p89 = scmp.ne.s32.totalorder %s72, %s88
    %p90 = scmp.eq.s32.totalorder %s15, 0
    %p91 = por %p89, %p90
    %s92 = ssub.s32 %s17, %s31
    %p93 = scmp.eq.s32.totalorder %s92, 0
    %s95 = sadd.s32 %s94, 1
    %s96 = scalar_select %p93, %s94, %s95
    %p99 = pneg %p93
    %p100 = scmp.eq.s32.totalorder %s9, 7
    %p101 = por %p99, %p100
    %p102 = scmp.ne.s32.totalorder %s94, %s97
    %p103 = scmp.eq.s32.totalorder %s9, 0
    %p104 = por %p102, %p103
    %p105 = scmp.ne.s32.totalorder %s94, %s97
    %p106 = scmp.eq.s32.totalorder %s14, 7
    %p107 = por %p105, %p106
    %p108 = scmp.ne.s32.totalorder %s97, %s98
    %p109 = scmp.eq.s32.totalorder %s14, 0
    %p110 = por %p108, %p109
    %p111 = scmp.ne.s32.totalorder %s97, %s98
    %p112 = scmp.eq.s32.totalorder %s15, 7
    %p113 = por %p111, %p112
    %p115 = scmp.ne.s32.totalorder %s98, %s114
    %p116 = scmp.eq.s32.totalorder %s15, 0
    %p117 = por %p115, %p116
    %s118 = ssub.s32 %s16, %s35
    %s119 = ssub.s32 %s17, %s31
    %s120 = sor.u32 %s118, %s119
    %p121 = scmp.eq.s32.totalorder %s120, 0
    %s123 = sadd.s32 %s122, 1
    %s124 = scalar_select %p121, %s122, %s123
    %p127 = pneg %p121
    %p128 = scmp.eq.s32.totalorder %s9, 7
    %p129 = por %p127, %p128
    %p130 = scmp.ne.s32.totalorder %s122, %s125
    %p131 = scmp.eq.s32.totalorder %s9, 0
    %p132 = por %p130, %p131
    %p133 = scmp.ne.s32.totalorder %s122, %s125
    %p134 = scmp.eq.s32.totalorder %s14, 7
    %p135 = por %p133, %p134
    %p136 = scmp.ne.s32.totalorder %s125, %s126
    %p137 = scmp.eq.s32.totalorder %s14, 0
    %p138 = por %p136, %p137
    %p139 = scmp.ne.s32.totalorder %s125, %s126
    %p140 = scmp.eq.s32.totalorder %s15, 7
    %p141 = por %p139, %p140
    %p143 = scmp.ne.s32.totalorder %s126, %s142
    %p144 = scmp.eq.s32.totalorder %s15, 0
    %p145 = por %p143, %p144
    %p146 = scmp.le.s32.totalorder 1, %s9
    %p147 = scmp.lt.s32.totalorder %s9, 9
    %p148 = pnand %p146, %p147
    %p149 = pneg %p148
    // Predicated region
    $region9: #{stem_forward.2} parent=5 // pred_check
      _
    $region10: #{stem_forward.2} parent=5 // pred_check_branch
      %151 = sbr.rel (%p148) target = $region12
    $region11: #{stem_forward.2} parent=5 // pred_region
      %s152 = ssub.s32 %s9, 1
      // Predicated region
      $region13: #{stem_forward.2} parent=11 // pred_check
        %p153 = pneg %p84
      $region14: #{stem_forward.2} parent=11 // pred_check_branch
        %155 = sbr.rel (%p153) target = $region16
      $region15: #{stem_forward.2} parent=11 // pred_region
        %s156 = smul.u32 32, %s21
        %p157 = scmp.lt.s32.totalorder %s156, 31
        %s158 = scalar_select %p157, %s156, 31
        %p159 = scmp.lt.s32.totalorder %s20, 0
        %s160 = scalar_select %p159, %s20, 0
        %s161 = sadd.s32 %s160, %s158
        %s162 = smul.addr %s161, 4
        %s163 = scalar_lea.vmem %s1, %s162
        %s164 = smul.u32 32, %s21
      $region16: #{stem_forward.2} parent=11 // pred_fallthru
        _
      // Predicated region
      $region17: #{stem_forward.2} parent=11 // pred_check
        %p165 = pneg %p110
      $region18: #{stem_forward.2} parent=11 // pred_check_branch
        %167 = sbr.rel (%p165) target = $region20
      $region19: #{stem_forward.2} parent=11 // pred_region
        %p168 = scmp.lt.s32.totalorder %s20, 0
        %s169 = scalar_select %p168, %s20, 0
        %s170 = scalar_lea.vmem %s2, %s169
      $region20: #{stem_forward.2} parent=11 // pred_fallthru
        _
    $region12: #{stem_forward.2} parent=5 // pred_fallthru
      _
    %p171 = scmp.lt.s32.totalorder %s9, 8
    // Predicated region
    $region21: #{stem_forward.2} parent=5 // pred_check
      %p172 = pneg %p171
    $region22: #{stem_forward.2} parent=5 // pred_check_branch
      %174 = sbr.rel (%p172) target = $region24
    $region23: #{stem_forward.2} parent=5 // pred_region
      // Predicated region
      $region25: #{stem_forward.2} parent=23 // pred_check
        %p175 = pneg %p50
      $region26: #{stem_forward.2} parent=23 // pred_check_branch
        %177 = sbr.rel (%p175) target = $region28
      $region27: #{stem_forward.2} parent=23 // pred_region
        %s178 = smul.u32 32, %s16
        %s179 = smul.u32 2, %s18
        %p180 = scmp.lt.s32.totalorder %s178, 255
        %s181 = scalar_select %p180, %s178, 255
        %p182 = scmp.lt.s32.totalorder %s179, 1
        %s183 = scalar_select %p182, %s179, 1
        %s184 = smul.addr %s181, 2
        %s185 = sadd.s32 %s183, %s184
        %s186 = smul.addr %s185, 4
        %s187 = scalar_lea.vmem %s0, %s186
        %s188 = smul.u32 32, %s16
        %s189 = smul.u32 2, %s18
      $region28: #{stem_forward.2} parent=23 // pred_fallthru
        _
    $region24: #{stem_forward.2} parent=5 // pred_fallthru
      _
    %p190 = scmp.le.s32.totalorder 1, %s9
    %p191 = scmp.lt.s32.totalorder %s9, 9
    %p192 = pnand %p190, %p191
    %p193 = pneg %p192
    // Predicated region
    $region29: #{stem_forward.2} parent=5 // pred_check
      _
    $region30: #{stem_forward.2} parent=5 // pred_check_branch
      %195 = sbr.rel (%p192) target = $region32
    $region31: #{stem_forward.2} parent=5 // pred_region
      %s196 = ssub.s32 %s9, 1
      %s197 = smul.u32 32, %s19
      %s198 = smul.u32 2, %s21
      %p199 = scmp.lt.s32.totalorder %s197, 255
      %s200 = scalar_select %p199, %s197, 255
      %p201 = scmp.lt.s32.totalorder %s198, 1
      %s202 = scalar_select %p201, %s198, 1
      %s203 = smul.addr %s200, 2
      %s204 = sadd.s32 %s202, %s203
      %s205 = smul.addr %s204, 4
      %s206 = scalar_lea.vmem %s0, %s205
      %p207 = pneg %p56
      %p208 = pneg %p53
      %s209 = smul.u32 32, %s21
      %p210 = scmp.lt.s32.totalorder %s209, 31
      %s211 = scalar_select %p210, %s209, 31
      %p212 = scmp.lt.s32.totalorder %s20, 0
      %s213 = scalar_select %p212, %s20, 0
      %s214 = sadd.s32 %s213, %s211
      %s215 = smul.addr %s214, 4
      %s216 = scalar_lea.vmem %s1, %s215
      %p217 = pneg %p84
      %p218 = pneg %p81
      %p219 = scmp.lt.s32.totalorder %s20, 0
      %s220 = scalar_select %p219, %s20, 0
      %s221 = scalar_lea.vmem %s2, %s220
      %p222 = pneg %p110
      %p223 = pneg %p107
      %p224 = pneg %p138
      %p225 = pneg %p135
      %s226 = smul.u32 32, %s19
      %p227 = scmp.lt.s32.totalorder %s226, 255
      %s228 = scalar_select %p227, %s226, 255
      %p229 = scmp.lt.s32.totalorder %s20, 0
      %s230 = scalar_select %p229, %s20, 0
      %s231 = sadd.s32 %s230, %s228
      %s232 = smul.addr %s231, 4
      %s233 = scalar_lea.vmem %s3, %s232
      %s234 = smul.u32 32, %s19
      %s235 = smul.u32 2, %s21
      %p236 = scmp.lt.s32.totalorder %s234, 255
      %s237 = scalar_select %p236, %s234, 255
      %p238 = scmp.lt.s32.totalorder %s235, 1
      %s239 = scalar_select %p238, %s235, 1
      %s240 = smul.addr %s237, 2
      %s241 = sadd.s32 %s239, %s240
      %s242 = smul.addr %s241, 4
      %s243 = scalar_lea.vmem %s0, %s242
      %s244 = smul.u32 32, %s19
      %s245 = smul.u32 2, %s21
      %s246 = smul.u32 32, %s21
      %p247 = scmp.lt.s32.totalorder %s246, 31
      %s248 = scalar_select %p247, %s246, 31
      %p249 = scmp.lt.s32.totalorder %s20, 0
      %s250 = scalar_select %p249, %s20, 0
      %s251 = sadd.s32 %s250, %s248
      %s252 = smul.addr %s251, 4
      %s253 = scalar_lea.vmem %s1, %s252
      %s254 = smul.u32 32, %s21
      %p255 = scmp.lt.s32.totalorder %s20, 0
      %s256 = scalar_select %p255, %s20, 0
      %s257 = scalar_lea.vmem %s2, %s256
      %s258 = smul.u32 32, %s19
      %p259 = scmp.lt.s32.totalorder %s258, 255
      %s260 = scalar_select %p259, %s258, 255
      %p261 = scmp.lt.s32.totalorder %s20, 0
      %s262 = scalar_select %p261, %s20, 0
      %s263 = sadd.s32 %s262, %s260
      %s264 = smul.addr %s263, 4
      %s265 = scalar_lea.vmem %s3, %s264
      %s266 = smul.u32 32, %s19
      %p268 = scmp.eq.s32.totalorder %s21, 0
      // Predicated region
      $region33: #{stem_forward.2} parent=31 // pred_check
        %p269 = pneg %p268
      $region34: #{stem_forward.2} parent=31 // pred_check_branch
        %271 = sbr.rel (%p269) target = $region36
      $region35: #{stem_forward.2} parent=31 // pred_region
        %272 = vst [vmem:[#allocation2] sm:$0xff] 0.0
        %273 = vst [vmem:[#allocation2 + $0x8] sm:$0xff] 0.0
        %274 = vst [vmem:[#allocation2 + $0x10] sm:$0xff] 0.0
        %275 = vst [vmem:[#allocation2 + $0x18] sm:$0xff] 0.0
        %276 = vst [vmem:[#allocation2 + $0x20] sm:$0xff] 0.0
        %277 = vst [vmem:[#allocation2 + $0x28] sm:$0xff] 0.0
        %278 = vst [vmem:[#allocation2 + $0x30] sm:$0xff] 0.0
        %279 = vst [vmem:[#allocation2 + $0x38] sm:$0xff] 0.0
        %280 = vst [vmem:[#allocation2 + $0x40] sm:$0xff] 0.0
        %281 = vst [vmem:[#allocation2 + $0x48] sm:$0xff] 0.0
        %282 = vst [vmem:[#allocation2 + $0x50] sm:$0xff] 0.0
        %283 = vst [vmem:[#allocation2 + $0x58] sm:$0xff] 0.0
        %284 = vst [vmem:[#allocation2 + $0x60] sm:$0xff] 0.0
        %285 = vst [vmem:[#allocation2 + $0x68] sm:$0xff] 0.0
        %286 = vst [vmem:[#allocation2 + $0x70] sm:$0xff] 0.0
        %287 = vst [vmem:[#allocation2 + $0x78] sm:$0xff] 0.0
        %288 = vst [vmem:[#allocation2 + $0x80] sm:$0xff] 0.0
        %289 = vst [vmem:[#allocation2 + $0x88] sm:$0xff] 0.0
        %290 = vst [vmem:[#allocation2 + $0x90] sm:$0xff] 0.0
        %291 = vst [vmem:[#allocation2 + $0x98] sm:$0xff] 0.0
        %292 = vst [vmem:[#allocation2 + $0xa0] sm:$0xff] 0.0
        %293 = vst [vmem:[#allocation2 + $0xa8] sm:$0xff] 0.0
        %294 = vst [vmem:[#allocation2 + $0xb0] sm:$0xff] 0.0
        %295 = vst [vmem:[#allocation2 + $0xb8] sm:$0xff] 0.0
        %296 = vst [vmem:[#allocation2 + $0xc0] sm:$0xff] 0.0
        %297 = vst [vmem:[#allocation2 + $0xc8] sm:$0xff] 0.0
        %298 = vst [vmem:[#allocation2 + $0xd0] sm:$0xff] 0.0
        %299 = vst [vmem:[#allocation2 + $0xd8] sm:$0xff] 0.0
        %300 = vst [vmem:[#allocation2 + $0xe0] sm:$0xff] 0.0
        %301 = vst [vmem:[#allocation2 + $0xe8] sm:$0xff] 0.0
        %302 = vst [vmem:[#allocation2 + $0xf0] sm:$0xff] 0.0
        %303 = vst [vmem:[#allocation2 + $0xf8] sm:$0xff] 0.0
      $region36: #{stem_forward.2} parent=31 // pred_fallthru
        _
      %v304 = vld [vmem:[#allocation2] sm:$0xff]
      %v305 = vld [vmem:[#allocation2 + $0x8] sm:$0xff]
      %v306 = vld [vmem:[#allocation2 + $0x10] sm:$0xff]
      %v307 = vld [vmem:[#allocation2 + $0x18] sm:$0xff]
      %v308 = vld [vmem:[#allocation2 + $0x20] sm:$0xff]
      %v309 = vld [vmem:[#allocation2 + $0x28] sm:$0xff]
      %v310 = vld [vmem:[#allocation2 + $0x30] sm:$0xff]
      %v311 = vld [vmem:[#allocation2 + $0x38] sm:$0xff]
      %v312 = vld [vmem:[#allocation2 + $0x40] sm:$0xff]
      %v313 = vld [vmem:[#allocation2 + $0x48] sm:$0xff]
      %v314 = vld [vmem:[#allocation2 + $0x50] sm:$0xff]
      %v315 = vld [vmem:[#allocation2 + $0x58] sm:$0xff]
      %v316 = vld [vmem:[#allocation2 + $0x60] sm:$0xff]
      %v317 = vld [vmem:[#allocation2 + $0x68] sm:$0xff]
      %v318 = vld [vmem:[#allocation2 + $0x70] sm:$0xff]
      %v319 = vld [vmem:[#allocation2 + $0x78] sm:$0xff]
      %v320 = vld [vmem:[#allocation2 + $0x80] sm:$0xff]
      %v321 = vld [vmem:[#allocation2 + $0x88] sm:$0xff]
      %v322 = vld [vmem:[#allocation2 + $0x90] sm:$0xff]
      %v323 = vld [vmem:[#allocation2 + $0x98] sm:$0xff]
      %v324 = vld [vmem:[#allocation2 + $0xa0] sm:$0xff]
      %v325 = vld [vmem:[#allocation2 + $0xa8] sm:$0xff]
      %v326 = vld [vmem:[#allocation2 + $0xb0] sm:$0xff]
      %v327 = vld [vmem:[#allocation2 + $0xb8] sm:$0xff]
      %v328 = vld [vmem:[#allocation2 + $0xc0] sm:$0xff]
      %v329 = vld [vmem:[#allocation2 + $0xc8] sm:$0xff]
      %v330 = vld [vmem:[#allocation2 + $0xd0] sm:$0xff]
      %v331 = vld [vmem:[#allocation2 + $0xd8] sm:$0xff]
      %v332 = vld [vmem:[#allocation2 + $0xe0] sm:$0xff]
      %v333 = vld [vmem:[#allocation2 + $0xe8] sm:$0xff]
      %v334 = vld [vmem:[#allocation2 + $0xf0] sm:$0xff]
      %v335 = vld [vmem:[#allocation2 + $0xf8] sm:$0xff]
      %v336 = vld [vmem:[%s243] sm:$0xff]
      %v337 = vld [vmem:[%s243 + $0x8] sm:$0xff]
      %v338 = vld [vmem:[%s243 + $0x10] sm:$0xff]
      %v339 = vld [vmem:[%s243 + $0x18] sm:$0xff]
      %v340 = vld [vmem:[%s243 + $0x20] sm:$0xff]
      %v341 = vld [vmem:[%s243 + $0x28] sm:$0xff]
      %v342 = vld [vmem:[%s243 + $0x30] sm:$0xff]
      %v343 = vld [vmem:[%s243 + $0x38] sm:$0xff]
      %v344 = vld [vmem:[%s243 + $0x40] sm:$0xff]
      %v345 = vld [vmem:[%s243 + $0x48] sm:$0xff]
      %v346 = vld [vmem:[%s243 + $0x50] sm:$0xff]
      %v347 = vld [vmem:[%s243 + $0x58] sm:$0xff]
      %v348 = vld [vmem:[%s243 + $0x60] sm:$0xff]
      %v349 = vld [vmem:[%s243 + $0x68] sm:$0xff]
      %v350 = vld [vmem:[%s243 + $0x70] sm:$0xff]
      %v351 = vld [vmem:[%s243 + $0x78] sm:$0xff]
      %v352 = vld [vmem:[%s243 + $0x80] sm:$0xff]
      %v353 = vld [vmem:[%s243 + $0x88] sm:$0xff]
      %v354 = vld [vmem:[%s243 + $0x90] sm:$0xff]
      %v355 = vld [vmem:[%s243 + $0x98] sm:$0xff]
      %v356 = vld [vmem:[%s243 + $0xa0] sm:$0xff]
      %v357 = vld [vmem:[%s243 + $0xa8] sm:$0xff]
      %v358 = vld [vmem:[%s243 + $0xb0] sm:$0xff]
      %v359 = vld [vmem:[%s243 + $0xb8] sm:$0xff]
      %v360 = vld [vmem:[%s243 + $0xc0] sm:$0xff]
      %v361 = vld [vmem:[%s243 + $0xc8] sm:$0xff]
      %v362 = vld [vmem:[%s243 + $0xd0] sm:$0xff]
      %v363 = vld [vmem:[%s243 + $0xd8] sm:$0xff]
      %v364 = vld [vmem:[%s243 + $0xe0] sm:$0xff]
      %v365 = vld [vmem:[%s243 + $0xe8] sm:$0xff]
      %v366 = vld [vmem:[%s243 + $0xf0] sm:$0xff]
      %v367 = vld [vmem:[%s243 + $0xf8] sm:$0xff]
      %v368 = vld [vmem:[%s253] sm:$0xf]
      %v369 = vld [vmem:[%s253 + $0x4] sm:$0xf]
      %v370 = vld [vmem:[%s253 + $0x8] sm:$0xf]
      %v371 = vld [vmem:[%s253 + $0xc] sm:$0xf]
      %v372 = vld [vmem:[%s253 + $0x10] sm:$0xf]
      %v373 = vld [vmem:[%s253 + $0x14] sm:$0xf]
      %v374 = vld [vmem:[%s253 + $0x18] sm:$0xf]
      %v375 = vld [vmem:[%s253 + $0x1c] sm:$0xf]
      %v376 = vld [vmem:[%s253 + $0x20] sm:$0xf]
      %v377 = vld [vmem:[%s253 + $0x24] sm:$0xf]
      %v378 = vld [vmem:[%s253 + $0x28] sm:$0xf]
      %v379 = vld [vmem:[%s253 + $0x2c] sm:$0xf]
      %v380 = vld [vmem:[%s253 + $0x30] sm:$0xf]
      %v381 = vld [vmem:[%s253 + $0x34] sm:$0xf]
      %v382 = vld [vmem:[%s253 + $0x38] sm:$0xf]
      %v383 = vld [vmem:[%s253 + $0x3c] sm:$0xf]
      %v384 = vld [vmem:[%s253 + $0x40] sm:$0xf]
      %v385 = vld [vmem:[%s253 + $0x44] sm:$0xf]
      %v386 = vld [vmem:[%s253 + $0x48] sm:$0xf]
      %v387 = vld [vmem:[%s253 + $0x4c] sm:$0xf]
      %v388 = vld [vmem:[%s253 + $0x50] sm:$0xf]
      %v389 = vld [vmem:[%s253 + $0x54] sm:$0xf]
      %v390 = vld [vmem:[%s253 + $0x58] sm:$0xf]
      %v391 = vld [vmem:[%s253 + $0x5c] sm:$0xf]
      %v392 = vld [vmem:[%s253 + $0x60] sm:$0xf]
      %v393 = vld [vmem:[%s253 + $0x64] sm:$0xf]
      %v394 = vld [vmem:[%s253 + $0x68] sm:$0xf]
      %v395 = vld [vmem:[%s253 + $0x6c] sm:$0xf]
      %v396 = vld [vmem:[%s253 + $0x70] sm:$0xf]
      %v397 = vld [vmem:[%s253 + $0x74] sm:$0xf]
      %v398 = vld [vmem:[%s253 + $0x78] sm:$0xf]
      %v399 = vld [vmem:[%s253 + $0x7c] sm:$0xf]
      %v432 = vunpack.c.l.b16 %v336
      %v433 = vunpack.c.h.b16 %v336
      %v434 = vunpack.c.l.b16 %v337
      %v435 = vunpack.c.h.b16 %v337
      %v436 = vunpack.c.l.b16 %v338
      %v437 = vunpack.c.h.b16 %v338
      %v438 = vunpack.c.l.b16 %v339
      %v439 = vunpack.c.h.b16 %v339
      %v440 = vunpack.c.l.b16 %v340
      %v441 = vunpack.c.h.b16 %v340
      %v442 = vunpack.c.l.b16 %v341
      %v443 = vunpack.c.h.b16 %v341
      %v444 = vunpack.c.l.b16 %v342
      %v445 = vunpack.c.h.b16 %v342
      %v446 = vunpack.c.l.b16 %v343
      %v447 = vunpack.c.h.b16 %v343
      %v448 = vunpack.c.l.b16 %v344
      %v449 = vunpack.c.h.b16 %v344
      %v450 = vunpack.c.l.b16 %v345
      %v451 = vunpack.c.h.b16 %v345
      %v452 = vunpack.c.l.b16 %v346
      %v453 = vunpack.c.h.b16 %v346
      %v454 = vunpack.c.l.b16 %v347
      %v455 = vunpack.c.h.b16 %v347
      %v456 = vunpack.c.l.b16 %v348
      %v457 = vunpack.c.h.b16 %v348
      %v458 = vunpack.c.l.b16 %v349
      %v459 = vunpack.c.h.b16 %v349
      %v460 = vunpack.c.l.b16 %v350
      %v461 = vunpack.c.h.b16 %v350
      %v462 = vunpack.c.l.b16 %v351
      %v463 = vunpack.c.h.b16 %v351
      %v464 = vunpack.c.l.b16 %v352
      %v465 = vunpack.c.h.b16 %v352
      %v466 = vunpack.c.l.b16 %v353
      %v467 = vunpack.c.h.b16 %v353
      %v468 = vunpack.c.l.b16 %v354
      %v469 = vunpack.c.h.b16 %v354
      %v470 = vunpack.c.l.b16 %v355
      %v471 = vunpack.c.h.b16 %v355
      %v472 = vunpack.c.l.b16 %v356
      %v473 = vunpack.c.h.b16 %v356
      %v474 = vunpack.c.l.b16 %v357
      %v475 = vunpack.c.h.b16 %v357
      %v476 = vunpack.c.l.b16 %v358
      %v477 = vunpack.c.h.b16 %v358
      %v478 = vunpack.c.l.b16 %v359
      %v479 = vunpack.c.h.b16 %v359
      %v480 = vunpack.c.l.b16 %v360
      %v481 = vunpack.c.h.b16 %v360
      %v482 = vunpack.c.l.b16 %v361
      %v483 = vunpack.c.h.b16 %v361
      %v484 = vunpack.c.l.b16 %v362
      %v485 = vunpack.c.h.b16 %v362
      %v486 = vunpack.c.l.b16 %v363
      %v487 = vunpack.c.h.b16 %v363
      %v488 = vunpack.c.l.b16 %v364
      %v489 = vunpack.c.h.b16 %v364
      %v490 = vunpack.c.l.b16 %v365
      %v491 = vunpack.c.h.b16 %v365
      %v492 = vunpack.c.l.b16 %v366
      %v493 = vunpack.c.h.b16 %v366
      %v494 = vunpack.c.l.b16 %v367
      %v495 = vunpack.c.h.b16 %v367
      %v496 = vpack.c.b16 %v434, %v432
      %v497 = vpack.c.b16 %v435, %v433
      %v498 = vpack.c.b16 %v438, %v436
      %v499 = vpack.c.b16 %v439, %v437
      %v500 = vpack.c.b16 %v442, %v440
      %v501 = vpack.c.b16 %v443, %v441
      %v502 = vpack.c.b16 %v446, %v444
      %v503 = vpack.c.b16 %v447, %v445
      %v504 = vpack.c.b16 %v450, %v448
      %v505 = vpack.c.b16 %v451, %v449
      %v506 = vpack.c.b16 %v454, %v452
      %v507 = vpack.c.b16 %v455, %v453
      %v508 = vpack.c.b16 %v458, %v456
      %v509 = vpack.c.b16 %v459, %v457
      %v510 = vpack.c.b16 %v462, %v460
      %v511 = vpack.c.b16 %v463, %v461
      %v512 = vpack.c.b16 %v466, %v464
      %v513 = vpack.c.b16 %v467, %v465
      %v514 = vpack.c.b16 %v470, %v468
      %v515 = vpack.c.b16 %v471, %v469
      %v516 = vpack.c.b16 %v474, %v472
      %v517 = vpack.c.b16 %v475, %v473
      %v518 = vpack.c.b16 %v478, %v476
      %v519 = vpack.c.b16 %v479, %v477
      %v520 = vpack.c.b16 %v482, %v480
      %v521 = vpack.c.b16 %v483, %v481
      %v522 = vpack.c.b16 %v486, %v484
      %v523 = vpack.c.b16 %v487, %v485
      %v524 = vpack.c.b16 %v490, %v488
      %v525 = vpack.c.b16 %v491, %v489
      %v526 = vpack.c.b16 %v494, %v492
      %v527 = vpack.c.b16 %v495, %v493
      %v592 = vunpack.c.l.b16 %v368
      %v593 = vunpack.c.l.b16 %v369
      %v594 = vunpack.c.l.b16 %v370
      %v595 = vunpack.c.l.b16 %v371
      %v596 = vunpack.c.l.b16 %v372
      %v597 = vunpack.c.l.b16 %v373
      %v598 = vunpack.c.l.b16 %v374
      %v599 = vunpack.c.l.b16 %v375
      %v600 = vunpack.c.l.b16 %v376
      %v601 = vunpack.c.l.b16 %v377
      %v602 = vunpack.c.l.b16 %v378
      %v603 = vunpack.c.l.b16 %v379
      %v604 = vunpack.c.l.b16 %v380
      %v605 = vunpack.c.l.b16 %v381
      %v606 = vunpack.c.l.b16 %v382
      %v607 = vunpack.c.l.b16 %v383
      %v608 = vunpack.c.l.b16 %v384
      %v609 = vunpack.c.l.b16 %v385
      %v610 = vunpack.c.l.b16 %v386
      %v611 = vunpack.c.l.b16 %v387
      %v612 = vunpack.c.l.b16 %v388
      %v613 = vunpack.c.l.b16 %v389
      %v614 = vunpack.c.l.b16 %v390
      %v615 = vunpack.c.l.b16 %v391
      %v616 = vunpack.c.l.b16 %v392
      %v617 = vunpack.c.l.b16 %v393
      %v618 = vunpack.c.l.b16 %v394
      %v619 = vunpack.c.l.b16 %v395
      %v620 = vunpack.c.l.b16 %v396
      %v621 = vunpack.c.l.b16 %v397
      %v622 = vunpack.c.l.b16 %v398
      %v623 = vunpack.c.l.b16 %v399
      %v624 = vpack.c.b16 %v593, %v592
      %v625 = vpack.c.b16 %v595, %v594
      %v626 = vpack.c.b16 %v597, %v596
      %v627 = vpack.c.b16 %v599, %v598
      %v628 = vpack.c.b16 %v601, %v600
      %v629 = vpack.c.b16 %v603, %v602
      %v630 = vpack.c.b16 %v605, %v604
      %v631 = vpack.c.b16 %v607, %v606
      %v632 = vpack.c.b16 %v609, %v608
      %v633 = vpack.c.b16 %v611, %v610
      %v634 = vpack.c.b16 %v613, %v612
      %v635 = vpack.c.b16 %v615, %v614
      %v636 = vpack.c.b16 %v617, %v616
      %v637 = vpack.c.b16 %v619, %v618
      %v638 = vpack.c.b16 %v621, %v620
      %v639 = vpack.c.b16 %v623, %v622
      %656 = vmatprep.subr.bf16.mxu0 0
      %657 = vmatpush1.bf16.msra.mxu0 %v624
      %658 = vmatprep.subr.bf16.mxu0 0
      %659 = vmatpush1.bf16.msra.mxu0 %v625
      %660 = vmatprep.subr.bf16.mxu0 0
      %661 = vmatpush1.bf16.msra.mxu0 %v626
      %662 = vmatprep.subr.bf16.mxu0 0
      %663 = vmatpush1.bf16.msra.mxu0 %v627
      %664 = vmatprep.subr.bf16.mxu0 0
      %665 = vmatpush1.bf16.msra.mxu0 %v628
      %666 = vmatprep.subr.bf16.mxu0 0
      %667 = vmatpush1.bf16.msra.mxu0 %v629
      %668 = vmatprep.subr.bf16.mxu0 0
      %669 = vmatpush1.bf16.msra.mxu0 %v630
      %670 = vmatprep.subr.bf16.mxu0 0
      %671 = vmatpush1.bf16.msra.mxu0 %v631
      %672 = vmatprep.subr.bf16.mxu0 0
      %673 = vmatpush1.bf16.msra.mxu0 %v632
      %674 = vmatprep.subr.bf16.mxu0 0
      %675 = vmatpush1.bf16.msra.mxu0 %v633
      %676 = vmatprep.subr.bf16.mxu0 0
      %677 = vmatpush1.bf16.msra.mxu0 %v634
      %678 = vmatprep.subr.bf16.mxu0 0
      %679 = vmatpush1.bf16.msra.mxu0 %v635
      %680 = vmatprep.subr.bf16.mxu0 0
      %681 = vmatpush1.bf16.msra.mxu0 %v636
      %682 = vmatprep.subr.bf16.mxu0 0
      %683 = vmatpush1.bf16.msra.mxu0 %v637
      %684 = vmatprep.subr.bf16.mxu0 0
      %685 = vmatpush1.bf16.msra.mxu0 %v638
      %686 = vmatprep.subr.bf16.mxu0 0
      %687 = vmatpush1.bf16.msra.mxu0 %v639
      %688 = vmatprep.mubr.bf16.mxu0 %v497
      %689 = vmatmul.mubr.bf16.gmra.mrb[0].mxu0 %v496
      %v690 = vpop.f32.mrb[0].mxu0
      %v691 = vadd.f32 0.0, %v690
      %v692 = vpop.f32.mrb[0].mxu0
      %v693 = vpop.f32.mrb[0].mxu0
      %v694 = vadd.f32 0.0, %v693
      %v695 = vpop.f32.mrb[0].mxu0
      %696 = vmatprep.mubr.bf16.mxu0 %v499
      %697 = vmatmul.mubr.bf16.gmra.mrb[0].mxu0 %v498
      %v698 = vpop.f32.mrb[0].mxu0
      %v699 = vadd.f32 0.0, %v698
      %v700 = vpop.f32.mrb[0].mxu0
      %v701 = vpop.f32.mrb[0].mxu0
      %v702 = vadd.f32 0.0, %v701
      %v703 = vpop.f32.mrb[0].mxu0
      %704 = vmatprep.mubr.bf16.mxu0 %v501
      %705 = vmatmul.mubr.bf16.gmra.mrb[0].mxu0 %v500
      %v706 = vpop.f32.mrb[0].mxu0
      %v707 = vadd.f32 0.0, %v706
      %v708 = vpop.f32.mrb[0].mxu0
      %v709 = vpop.f32.mrb[0].mxu0
      %v710 = vadd.f32 0.0, %v709
      %v711 = vpop.f32.mrb[0].mxu0
      %712 = vmatprep.mubr.bf16.mxu0 %v503
      %713 = vmatmul.mubr.bf16.gmra.mrb[0].mxu0 %v502
      %v714 = vpop.f32.mrb[0].mxu0
      %v715 = vadd.f32 0.0, %v714
      %v716 = vpop.f32.mrb[0].mxu0
      %v717 = vpop.f32.mrb[0].mxu0
      %v718 = vadd.f32 0.0, %v717
      %v719 = vpop.f32.mrb[0].mxu0
      %720 = vmatprep.mubr.bf16.mxu0 %v505
      %721 = vmatmul.mubr.bf16.gmra.mrb[0].mxu0 %v504
      %v722 = vpop.f32.mrb[0].mxu0
      %v723 = vadd.f32 0.0, %v722
      %v724 = vpop.f32.mrb[0].mxu0
      %v725 = vpop.f32.mrb[0].mxu0
      %v726 = vadd.f32 0.0, %v725
      %v727 = vpop.f32.mrb[0].mxu0
      %728 = vmatprep.mubr.bf16.mxu0 %v507
      %729 = vmatmul.mubr.bf16.gmra.mrb[0].mxu0 %v506
      %v730 = vpop.f32.mrb[0].mxu0
      %v731 = vadd.f32 0.0, %v730
      %v732 = vpop.f32.mrb[0].mxu0
      %v733 = vpop.f32.mrb[0].mxu0
      %v734 = vadd.f32 0.0, %v733
      %v735 = vpop.f32.mrb[0].mxu0
      %736 = vmatprep.mubr.bf16.mxu0 %v509
      %737 = vmatmul.mubr.bf16.gmra.mrb[0].mxu0 %v508
      %v738 = vpop.f32.mrb[0].mxu0
      %v739 = vadd.f32 0.0, %v738
      %v740 = vpop.f32.mrb[0].mxu0
      %v741 = vpop.f32.mrb[0].mxu0
      %v742 = vadd.f32 0.0, %v741
      %v743 = vpop.f32.mrb[0].mxu0
      %744 = vmatprep.mubr.bf16.mxu0 %v511
      %745 = vmatmul.mubr.bf16.gmra.mrb[0].mxu0 %v510
      %v746 = vpop.f32.mrb[0].mxu0
      %v747 = vadd.f32 0.0, %v746
      %v748 = vpop.f32.mrb[0].mxu0
      %v749 = vpop.f32.mrb[0].mxu0
      %v750 = vadd.f32 0.0, %v749
      %v751 = vpop.f32.mrb[0].mxu0
      %752 = vmatprep.mubr.bf16.mxu0 %v513
      %753 = vmatmul.mubr.bf16.gmra.mrb[0].mxu0 %v512
      %v754 = vpop.f32.mrb[0].mxu0
      %v755 = vadd.f32 0.0, %v754
      %v756 = vpop.f32.mrb[0].mxu0
      %v757 = vpop.f32.mrb[0].mxu0
      %v758 = vadd.f32 0.0, %v757
      %v759 = vpop.f32.mrb[0].mxu0
      %760 = vmatprep.mubr.bf16.mxu0 %v515
      %761 = vmatmul.mubr.bf16.gmra.mrb[0].mxu0 %v514
      %v762 = vpop.f32.mrb[0].mxu0
      %v763 = vadd.f32 0.0, %v762
      %v764 = vpop.f32.mrb[0].mxu0
      %v765 = vpop.f32.mrb[0].mxu0
      %v766 = vadd.f32 0.0, %v765
      %v767 = vpop.f32.mrb[0].mxu0
      %768 = vmatprep.mubr.bf16.mxu0 %v517
      %769 = vmatmul.mubr.bf16.gmra.mrb[0].mxu0 %v516
      %v770 = vpop.f32.mrb[0].mxu0
      %v771 = vadd.f32 0.0, %v770
      %v772 = vpop.f32.mrb[0].mxu0
      %v773 = vpop.f32.mrb[0].mxu0
      %v774 = vadd.f32 0.0, %v773
      %v775 = vpop.f32.mrb[0].mxu0
      %776 = vmatprep.mubr.bf16.mxu0 %v519
      %777 = vmatmul.mubr.bf16.gmra.mrb[0].mxu0 %v518
      %v778 = vpop.f32.mrb[0].mxu0
      %v779 = vadd.f32 0.0, %v778
      %v780 = vpop.f32.mrb[0].mxu0
      %v781 = vpop.f32.mrb[0].mxu0
      %v782 = vadd.f32 0.0, %v781
      %v783 = vpop.f32.mrb[0].mxu0
      %784 = vmatprep.mubr.bf16.mxu0 %v521
      %785 = vmatmul.mubr.bf16.gmra.mrb[0].mxu0 %v520
      %v786 = vpop.f32.mrb[0].mxu0
      %v787 = vadd.f32 0.0, %v786
      %v788 = vpop.f32.mrb[0].mxu0
      %v789 = vpop.f32.mrb[0].mxu0
      %v790 = vadd.f32 0.0, %v789
      %v791 = vpop.f32.mrb[0].mxu0
      %792 = vmatprep.mubr.bf16.mxu0 %v523
      %793 = vmatmul.mubr.bf16.gmra.mrb[0].mxu0 %v522
      %v794 = vpop.f32.mrb[0].mxu0
      %v795 = vadd.f32 0.0, %v794
      %v796 = vpop.f32.mrb[0].mxu0
      %v797 = vpop.f32.mrb[0].mxu0
      %v798 = vadd.f32 0.0, %v797
      %v799 = vpop.f32.mrb[0].mxu0
      %800 = vmatprep.mubr.bf16.mxu0 %v525
      %801 = vmatmul.mubr.bf16.gmra.mrb[0].mxu0 %v524
      %v802 = vpop.f32.mrb[0].mxu0
      %v803 = vadd.f32 0.0, %v802
      %v804 = vpop.f32.mrb[0].mxu0
      %v805 = vpop.f32.mrb[0].mxu0
      %v806 = vadd.f32 0.0, %v805
      %v807 = vpop.f32.mrb[0].mxu0
      %808 = vmatprep.mubr.bf16.mxu0 %v527
      %809 = vmatmul.mubr.bf16.gmra.mrb[0].mxu0 %v526
      %v810 = vpop.f32.mrb[0].mxu0
      %v811 = vadd.f32 0.0, %v810
      %v812 = vpop.f32.mrb[0].mxu0
      %v813 = vpop.f32.mrb[0].mxu0
      %v814 = vadd.f32 0.0, %v813
      %v815 = vpop.f32.mrb[0].mxu0
      %816 = vdwg.mxu0
      %v817 = vadd.f32 %v304, %v691
      %v818 = vadd.f32 %v305, %v694
      %v819 = vadd.f32 %v306, %v699
      %v820 = vadd.f32 %v307, %v702
      %v821 = vadd.f32 %v308, %v707
      %v822 = vadd.f32 %v309, %v710
      %v823 = vadd.f32 %v310, %v715
      %v824 = vadd.f32 %v311, %v718
      %v825 = vadd.f32 %v312, %v723
      %v826 = vadd.f32 %v313, %v726
      %v827 = vadd.f32 %v314, %v731
      %v828 = vadd.f32 %v315, %v734
      %v829 = vadd.f32 %v316, %v739
      %v830 = vadd.f32 %v317, %v742
      %v831 = vadd.f32 %v318, %v747
      %v832 = vadd.f32 %v319, %v750
      %v833 = vadd.f32 %v320, %v755
      %v834 = vadd.f32 %v321, %v758
      %v835 = vadd.f32 %v322, %v763
      %v836 = vadd.f32 %v323, %v766
      %v837 = vadd.f32 %v324, %v771
      %v838 = vadd.f32 %v325, %v774
      %v839 = vadd.f32 %v326, %v779
      %v840 = vadd.f32 %v327, %v782
      %v841 = vadd.f32 %v328, %v787
      %v842 = vadd.f32 %v329, %v790
      %v843 = vadd.f32 %v330, %v795
      %v844 = vadd.f32 %v331, %v798
      %v845 = vadd.f32 %v332, %v803
      %v846 = vadd.f32 %v333, %v806
      %v847 = vadd.f32 %v334, %v811
      %v848 = vadd.f32 %v335, %v814
      %849 = vst [vmem:[#allocation2] sm:$0xff] %v817
      %850 = vst [vmem:[#allocation2 + $0x8] sm:$0xff] %v818
      %851 = vst [vmem:[#allocation2 + $0x10] sm:$0xff] %v819
      %852 = vst [vmem:[#allocation2 + $0x18] sm:$0xff] %v820
      %853 = vst [vmem:[#allocation2 + $0x20] sm:$0xff] %v821
      %854 = vst [vmem:[#allocation2 + $0x28] sm:$0xff] %v822
      %855 = vst [vmem:[#allocation2 + $0x30] sm:$0xff] %v823
      %856 = vst [vmem:[#allocation2 + $0x38] sm:$0xff] %v824
      %857 = vst [vmem:[#allocation2 + $0x40] sm:$0xff] %v825
      %858 = vst [vmem:[#allocation2 + $0x48] sm:$0xff] %v826
      %859 = vst [vmem:[#allocation2 + $0x50] sm:$0xff] %v827
      %860 = vst [vmem:[#allocation2 + $0x58] sm:$0xff] %v828
      %861 = vst [vmem:[#allocation2 + $0x60] sm:$0xff] %v829
      %862 = vst [vmem:[#allocation2 + $0x68] sm:$0xff] %v830
      %863 = vst [vmem:[#allocation2 + $0x70] sm:$0xff] %v831
      %864 = vst [vmem:[#allocation2 + $0x78] sm:$0xff] %v832
      %865 = vst [vmem:[#allocation2 + $0x80] sm:$0xff] %v833
      %866 = vst [vmem:[#allocation2 + $0x88] sm:$0xff] %v834
      %867 = vst [vmem:[#allocation2 + $0x90] sm:$0xff] %v835
      %868 = vst [vmem:[#allocation2 + $0x98] sm:$0xff] %v836
      %869 = vst [vmem:[#allocation2 + $0xa0] sm:$0xff] %v837
      %870 = vst [vmem:[#allocation2 + $0xa8] sm:$0xff] %v838
      %871 = vst [vmem:[#allocation2 + $0xb0] sm:$0xff] %v839
      %872 = vst [vmem:[#allocation2 + $0xb8] sm:$0xff] %v840
      %873 = vst [vmem:[#allocation2 + $0xc0] sm:$0xff] %v841
      %874 = vst [vmem:[#allocation2 + $0xc8] sm:$0xff] %v842
      %875 = vst [vmem:[#allocation2 + $0xd0] sm:$0xff] %v843
      %876 = vst [vmem:[#allocation2 + $0xd8] sm:$0xff] %v844
      %877 = vst [vmem:[#allocation2 + $0xe0] sm:$0xff] %v845
      %878 = vst [vmem:[#allocation2 + $0xe8] sm:$0xff] %v846
      %879 = vst [vmem:[#allocation2 + $0xf0] sm:$0xff] %v847
      %880 = vst [vmem:[#allocation2 + $0xf8] sm:$0xff] %v848
      // Predicated region
      $region37: #{stem_forward.2} parent=31 // pred_check
        %p881 = pneg %p268
      $region38: #{stem_forward.2} parent=31 // pred_check_branch
        %883 = sbr.rel (%p881) target = $region40
      $region39: #{stem_forward.2} parent=31 // pred_region
        %v884 = vld [vmem:[#allocation2] sm:$0xff]
        %v885 = vld [vmem:[#allocation2 + $0x8] sm:$0xff]
        %v886 = vld [vmem:[#allocation2 + $0x10] sm:$0xff]
        %v887 = vld [vmem:[#allocation2 + $0x18] sm:$0xff]
        %v888 = vld [vmem:[#allocation2 + $0x20] sm:$0xff]
        %v889 = vld [vmem:[#allocation2 + $0x28] sm:$0xff]
        %v890 = vld [vmem:[#allocation2 + $0x30] sm:$0xff]
        %v891 = vld [vmem:[#allocation2 + $0x38] sm:$0xff]
        %v892 = vld [vmem:[#allocation2 + $0x40] sm:$0xff]
        %v893 = vld [vmem:[#allocation2 + $0x48] sm:$0xff]
        %v894 = vld [vmem:[#allocation2 + $0x50] sm:$0xff]
        %v895 = vld [vmem:[#allocation2 + $0x58] sm:$0xff]
        %v896 = vld [vmem:[#allocation2 + $0x60] sm:$0xff]
        %v897 = vld [vmem:[#allocation2 + $0x68] sm:$0xff]
        %v898 = vld [vmem:[#allocation2 + $0x70] sm:$0xff]
        %v899 = vld [vmem:[#allocation2 + $0x78] sm:$0xff]
        %v900 = vld [vmem:[#allocation2 + $0x80] sm:$0xff]
        %v901 = vld [vmem:[#allocation2 + $0x88] sm:$0xff]
        %v902 = vld [vmem:[#allocation2 + $0x90] sm:$0xff]
        %v903 = vld [vmem:[#allocation2 + $0x98] sm:$0xff]
        %v904 = vld [vmem:[#allocation2 + $0xa0] sm:$0xff]
        %v905 = vld [vmem:[#allocation2 + $0xa8] sm:$0xff]
        %v906 = vld [vmem:[#allocation2 + $0xb0] sm:$0xff]
        %v907 = vld [vmem:[#allocation2 + $0xb8] sm:$0xff]
        %v908 = vld [vmem:[#allocation2 + $0xc0] sm:$0xff]
        %v909 = vld [vmem:[#allocation2 + $0xc8] sm:$0xff]
        %v910 = vld [vmem:[#allocation2 + $0xd0] sm:$0xff]
        %v911 = vld [vmem:[#allocation2 + $0xd8] sm:$0xff]
        %v912 = vld [vmem:[#allocation2 + $0xe0] sm:$0xff]
        %v913 = vld [vmem:[#allocation2 + $0xe8] sm:$0xff]
        %v914 = vld [vmem:[#allocation2 + $0xf0] sm:$0xff]
        %v915 = vld [vmem:[#allocation2 + $0xf8] sm:$0xff]
        %v916 = vld [vmem:[%s257] sm:$0x1]
        %v918 = vlaneseq
        %v919 = vshrl.u32 %v918, 7
        %v920 = vsub.s32 0, %v919
        %v921 = vrot.slane %v916, %v920
        %v923 = vadd.f32 %v884, %v921
        %v924 = vadd.f32 %v885, %v921
        %v925 = vadd.f32 %v886, %v921
        %v926 = vadd.f32 %v887, %v921
        %v927 = vadd.f32 %v888, %v921
        %v928 = vadd.f32 %v889, %v921
        %v929 = vadd.f32 %v890, %v921
        %v930 = vadd.f32 %v891, %v921
        %v931 = vadd.f32 %v892, %v921
        %v932 = vadd.f32 %v893, %v921
        %v933 = vadd.f32 %v894, %v921
        %v934 = vadd.f32 %v895, %v921
        %v935 = vadd.f32 %v896, %v921
        %v936 = vadd.f32 %v897, %v921
        %v937 = vadd.f32 %v898, %v921
        %v938 = vadd.f32 %v899, %v921
        %v939 = vadd.f32 %v900, %v921
        %v940 = vadd.f32 %v901, %v921
        %v941 = vadd.f32 %v902, %v921
        %v942 = vadd.f32 %v903, %v921
        %v943 = vadd.f32 %v904, %v921
        %v944 = vadd.f32 %v905, %v921
        %v945 = vadd.f32 %v906, %v921
        %v946 = vadd.f32 %v907, %v921
        %v947 = vadd.f32 %v908, %v921
        %v948 = vadd.f32 %v909, %v921
        %v949 = vadd.f32 %v910, %v921
        %v950 = vadd.f32 %v911, %v921
        %v951 = vadd.f32 %v912, %v921
        %v952 = vadd.f32 %v913, %v921
        %v953 = vadd.f32 %v914, %v921
        %v954 = vadd.f32 %v915, %v921
        %v955 = vmax.f32 %v923, 0.0
        %v956 = vmax.f32 %v924, 0.0
        %v957 = vmax.f32 %v925, 0.0
        %v958 = vmax.f32 %v926, 0.0
        %v959 = vmax.f32 %v927, 0.0
        %v960 = vmax.f32 %v928, 0.0
        %v961 = vmax.f32 %v929, 0.0
        %v962 = vmax.f32 %v930, 0.0
        %v963 = vmax.f32 %v931, 0.0
        %v964 = vmax.f32 %v932, 0.0
        %v965 = vmax.f32 %v933, 0.0
        %v966 = vmax.f32 %v934, 0.0
        %v967 = vmax.f32 %v935, 0.0
        %v968 = vmax.f32 %v936, 0.0
        %v969 = vmax.f32 %v937, 0.0
        %v970 = vmax.f32 %v938, 0.0
        %v971 = vmax.f32 %v939, 0.0
        %v972 = vmax.f32 %v940, 0.0
        %v973 = vmax.f32 %v941, 0.0
        %v974 = vmax.f32 %v942, 0.0
        %v975 = vmax.f32 %v943, 0.0
        %v976 = vmax.f32 %v944, 0.0
        %v977 = vmax.f32 %v945, 0.0
        %v978 = vmax.f32 %v946, 0.0
        %v979 = vmax.f32 %v947, 0.0
        %v980 = vmax.f32 %v948, 0.0
        %v981 = vmax.f32 %v949, 0.0
        %v982 = vmax.f32 %v950, 0.0
        %v983 = vmax.f32 %v951, 0.0
        %v984 = vmax.f32 %v952, 0.0
        %v985 = vmax.f32 %v953, 0.0
        %v986 = vmax.f32 %v954, 0.0
        %v987 = vpack.c.bf16 %v956, %v955
        %v988 = vpack.c.bf16 %v958, %v957
        %v989 = vpack.c.bf16 %v960, %v959
        %v990 = vpack.c.bf16 %v962, %v961
        %v991 = vpack.c.bf16 %v964, %v963
        %v992 = vpack.c.bf16 %v966, %v965
        %v993 = vpack.c.bf16 %v968, %v967
        %v994 = vpack.c.bf16 %v970, %v969
        %v995 = vpack.c.bf16 %v972, %v971
        %v996 = vpack.c.bf16 %v974, %v973
        %v997 = vpack.c.bf16 %v976, %v975
        %v998 = vpack.c.bf16 %v978, %v977
        %v999 = vpack.c.bf16 %v980, %v979
        %v1000 = vpack.c.bf16 %v982, %v981
        %v1001 = vpack.c.bf16 %v984, %v983
        %v1002 = vpack.c.bf16 %v986, %v985
        %v1019 = vunpack.c.l.b16 %v987
        %v1020 = vunpack.c.h.b16 %v987
        %v1021 = vunpack.c.l.b16 %v988
        %v1022 = vunpack.c.h.b16 %v988
        %v1023 = vunpack.c.l.b16 %v989
        %v1024 = vunpack.c.h.b16 %v989
        %v1025 = vunpack.c.l.b16 %v990
        %v1026 = vunpack.c.h.b16 %v990
        %v1027 = vunpack.c.l.b16 %v991
        %v1028 = vunpack.c.h.b16 %v991
        %v1029 = vunpack.c.l.b16 %v992
        %v1030 = vunpack.c.h.b16 %v992
        %v1031 = vunpack.c.l.b16 %v993
        %v1032 = vunpack.c.h.b16 %v993
        %v1033 = vunpack.c.l.b16 %v994
        %v1034 = vunpack.c.h.b16 %v994
        %v1035 = vunpack.c.l.b16 %v995
        %v1036 = vunpack.c.h.b16 %v995
        %v1037 = vunpack.c.l.b16 %v996
        %v1038 = vunpack.c.h.b16 %v996
        %v1039 = vunpack.c.l.b16 %v997
        %v1040 = vunpack.c.h.b16 %v997
        %v1041 = vunpack.c.l.b16 %v998
        %v1042 = vunpack.c.h.b16 %v998
        %v1043 = vunpack.c.l.b16 %v999
        %v1044 = vunpack.c.h.b16 %v999
        %v1045 = vunpack.c.l.b16 %v1000
        %v1046 = vunpack.c.h.b16 %v1000
        %v1047 = vunpack.c.l.b16 %v1001
        %v1048 = vunpack.c.h.b16 %v1001
        %v1049 = vunpack.c.l.b16 %v1002
        %v1050 = vunpack.c.h.b16 %v1002
        %v1051 = vpack.c.b16 %v1019, %v1019
        %v1052 = vpack.c.b16 %v1020, %v1020
        %v1053 = vpack.c.b16 %v1021, %v1021
        %v1054 = vpack.c.b16 %v1022, %v1022
        %v1055 = vpack.c.b16 %v1023, %v1023
        %v1056 = vpack.c.b16 %v1024, %v1024
        %v1057 = vpack.c.b16 %v1025, %v1025
        %v1058 = vpack.c.b16 %v1026, %v1026
        %v1059 = vpack.c.b16 %v1027, %v1027
        %v1060 = vpack.c.b16 %v1028, %v1028
        %v1061 = vpack.c.b16 %v1029, %v1029
        %v1062 = vpack.c.b16 %v1030, %v1030
        %v1063 = vpack.c.b16 %v1031, %v1031
        %v1064 = vpack.c.b16 %v1032, %v1032
        %v1065 = vpack.c.b16 %v1033, %v1033
        %v1066 = vpack.c.b16 %v1034, %v1034
        %v1067 = vpack.c.b16 %v1035, %v1035
        %v1068 = vpack.c.b16 %v1036, %v1036
        %v1069 = vpack.c.b16 %v1037, %v1037
        %v1070 = vpack.c.b16 %v1038, %v1038
        %v1071 = vpack.c.b16 %v1039, %v1039
        %v1072 = vpack.c.b16 %v1040, %v1040
        %v1073 = vpack.c.b16 %v1041, %v1041
        %v1074 = vpack.c.b16 %v1042, %v1042
        %v1075 = vpack.c.b16 %v1043, %v1043
        %v1076 = vpack.c.b16 %v1044, %v1044
        %v1077 = vpack.c.b16 %v1045, %v1045
        %v1078 = vpack.c.b16 %v1046, %v1046
        %v1079 = vpack.c.b16 %v1047, %v1047
        %v1080 = vpack.c.b16 %v1048, %v1048
        %v1081 = vpack.c.b16 %v1049, %v1049
        %v1082 = vpack.c.b16 %v1050, %v1050
        %1115 = vst [vmem:[%s265] sm:$0xf] %v1051
        %1116 = vst [vmem:[%s265 + $0x4] sm:$0xf] %v1052
        %1117 = vst [vmem:[%s265 + $0x8] sm:$0xf] %v1053
        %1118 = vst [vmem:[%s265 + $0xc] sm:$0xf] %v1054
        %1119 = vst [vmem:[%s265 + $0x10] sm:$0xf] %v1055
        %1120 = vst [vmem:[%s265 + $0x14] sm:$0xf] %v1056
        %1121 = vst [vmem:[%s265 + $0x18] sm:$0xf] %v1057
        %1122 = vst [vmem:[%s265 + $0x1c] sm:$0xf] %v1058
        %1123 = vst [vmem:[%s265 + $0x20] sm:$0xf] %v1059
        %1124 = vst [vmem:[%s265 + $0x24] sm:$0xf] %v1060
        %1125 = vst [vmem:[%s265 + $0x28] sm:$0xf] %v1061
        %1126 = vst [vmem:[%s265 + $0x2c] sm:$0xf] %v1062
        %1127 = vst [vmem:[%s265 + $0x30] sm:$0xf] %v1063
        %1128 = vst [vmem:[%s265 + $0x34] sm:$0xf] %v1064
        %1129 = vst [vmem:[%s265 + $0x38] sm:$0xf] %v1065
        %1130 = vst [vmem:[%s265 + $0x3c] sm:$0xf] %v1066
        %1131 = vst [vmem:[%s265 + $0x40] sm:$0xf] %v1067
        %1132 = vst [vmem:[%s265 + $0x44] sm:$0xf] %v1068
        %1133 = vst [vmem:[%s265 + $0x48] sm:$0xf] %v1069
        %1134 = vst [vmem:[%s265 + $0x4c] sm:$0xf] %v1070
        %1135 = vst [vmem:[%s265 + $0x50] sm:$0xf] %v1071
        %1136 = vst [vmem:[%s265 + $0x54] sm:$0xf] %v1072
        %1137 = vst [vmem:[%s265 + $0x58] sm:$0xf] %v1073
        %1138 = vst [vmem:[%s265 + $0x5c] sm:$0xf] %v1074
        %1139 = vst [vmem:[%s265 + $0x60] sm:$0xf] %v1075
        %1140 = vst [vmem:[%s265 + $0x64] sm:$0xf] %v1076
        %1141 = vst [vmem:[%s265 + $0x68] sm:$0xf] %v1077
        %1142 = vst [vmem:[%s265 + $0x6c] sm:$0xf] %v1078
        %1143 = vst [vmem:[%s265 + $0x70] sm:$0xf] %v1079
        %1144 = vst [vmem:[%s265 + $0x74] sm:$0xf] %v1080
        %1145 = vst [vmem:[%s265 + $0x78] sm:$0xf] %v1081
        %1146 = vst [vmem:[%s265 + $0x7c] sm:$0xf] %v1082
      $region40: #{stem_forward.2} parent=31 // pred_fallthru
        _
      %s1147 = smul.u32 32, %s19
      %p1148 = scmp.lt.s32.totalorder %s1147, 255
      %s1149 = scalar_select %p1148, %s1147, 255
      %p1150 = scmp.lt.s32.totalorder %s20, 0
      %s1151 = scalar_select %p1150, %s20, 0
      %s1152 = sadd.s32 %s1151, %s1149
      %s1153 = smul.addr %s1152, 4
      %s1154 = scalar_lea.vmem %s3, %s1153
      // Predicated region
      $region41: #{stem_forward.2} parent=31 // pred_check
        %p1155 = pneg %p135
      $region42: #{stem_forward.2} parent=31 // pred_check_branch
        %1157 = sbr.rel (%p1155) target = $region44
      $region43: #{stem_forward.2} parent=31 // pred_region
        %s1158 = smul.u32 32, %s19
      $region44: #{stem_forward.2} parent=31 // pred_fallthru
        _
    $region32: #{stem_forward.2} parent=5 // pred_fallthru
      _
    %p1159 = scmp.le.s32.totalorder 2, %s9
    // Predicated region
    $region45: #{stem_forward.2} parent=5 // pred_check
      %p1160 = pneg %p1159
    $region46: #{stem_forward.2} parent=5 // pred_check_branch
      %1162 = sbr.rel (%p1160) target = $region48
    $region47: #{stem_forward.2} parent=5 // pred_region
      %s1163 = ssub.s32 %s9, 2
      // Predicated region
      $region49: #{stem_forward.2} parent=47 // pred_check
        %p1164 = pneg %p141
      $region50: #{stem_forward.2} parent=47 // pred_check_branch
        %1166 = sbr.rel (%p1164) target = $region52
      $region51: #{stem_forward.2} parent=47 // pred_region
        %s1167 = smul.u32 32, %s22
        %p1168 = scmp.lt.s32.totalorder %s1167, 255
        %s1169 = scalar_select %p1168, %s1167, 255
        %p1170 = scmp.lt.s32.totalorder %s23, 0
        %s1171 = scalar_select %p1170, %s23, 0
        %s1172 = sadd.s32 %s1171, %s1169
        %s1173 = smul.addr %s1172, 4
        %s1174 = scalar_lea.vmem %s3, %s1173
      $region52: #{stem_forward.2} parent=47 // pred_fallthru
        _
    $region48: #{stem_forward.2} parent=5 // pred_fallthru
      _
  $region6: #{stem_forward.2} parent=0 // loop_footer
    %s13 = sadd.s32 1, %s9
  $region7: #{stem_forward.2} parent=0 // loop_footer_branch
    %8 = sbr.rel target = $region3
  $region8: #{stem_forward.2} parent=0 // loop_exit
    _

// kernel: stem_forward.3
$region0: #{stem_forward.3}
  #allocation0 [shape = 'u32[]', space=smem, size = 0x4, offset = 0x4, fixed_abs, tag = 'smem constant byte address 0x4 - core index']
  #allocation1 [shape = 'u32[144,128]{1,0:T(1,128)}', space=vmem, size = 0x12000, scoped, tag = 'internal scratch']
  %s0 = inlined_call_operand.vmem [shape: bf16[9,512,128], index: 0, kind: input, shape index: {}]
  %s1 = inlined_call_operand.hbm [shape: bf16[512,128], index: 1, kind: output, shape index: {}]
  %s2 = sld [smem:[#allocation0]]
  $region78: #{stem_forward.3} parent=0
    _
  %s4 = ssub.s32 1, %s2
  %s5 = scalar_select 0, %s4, %s2
  $region1: #{stem_forward.3} parent=0
    #allocation2 [shape = 'u8[1179648]{0}', space=vmem, size = 0x120000, scoped, tag = 'input window, operand 0']
    #allocation3 [shape = 'u8[131072]{0}', space=vmem, size = 0x20000, scoped, tag = 'output window, operand 0']
    #allocation4 [shape = 's32[2]{0}', space=sflag, size = 0x8, scoped, tag = 'scoped memory for stem_forward.3']
    %6 = vsyncpa [#allocation4], 0
    %s7 = scalar_lea.sflag [#allocation4], 1
    %8 = vsyncpa %s7, 0
    loop: start=0, step=1, limit=4
    $region2: #{stem_forward.3} parent=1 // loop_pre_header
      _
    $region3: #{stem_forward.3} parent=1 // loop_header
      %s10 = sphi 0, %s14
      %p11 = scmp.ge.s32.totalorder %s10, 4
      %s20 = sphi 0, %s22
      %s23 = sphi 0, %s20
      %s24 = sphi 0, %s23
      %s40 = sphi 0, %s24
      %s46 = sphi 0, %s48
      %s49 = sphi 0, %s46
      %s50 = sphi 0, %s49
      %s66 = sphi 0, %s50
    $region4: #{stem_forward.3} parent=1 // loop_header_branch
      %13 = sbr.rel (%p11) target = $region8
    $region5: #{stem_forward.3} parent=1 // loop_body
      %s15 = ssub.s32 %s10, 1
      %s16 = ssub.s32 %s10, 2
      %s17 = sadd.s32 %s10, 1
      %s18 = ssub.s32 %s10, %s17
      %p19 = scmp.eq.s32.totalorder %s18, 0
      %s21 = sadd.s32 %s20, 1
      %s22 = scalar_select %p19, %s20, %s21
      %p25 = pneg %p19
      %p26 = scmp.eq.s32.totalorder %s10, 1
      %p27 = por %p25, %p26
      %p28 = scmp.ne.s32.totalorder %s20, %s23
      %p29 = scmp.eq.s32.totalorder %s10, 0
      %p30 = por %p28, %p29
      %p31 = scmp.ne.s32.totalorder %s20, %s23
      %p32 = scmp.eq.s32.totalorder %s15, 1
      %p33 = por %p31, %p32
      %p34 = scmp.ne.s32.totalorder %s23, %s24
      %p35 = scmp.eq.s32.totalorder %s15, 0
      %p36 = por %p34, %p35
      %p37 = scmp.ne.s32.totalorder %s23, %s24
      %p38 = scmp.eq.s32.totalorder %s16, 1
      %p39 = por %p37, %p38
      %p41 = scmp.ne.s32.totalorder %s24, %s40
      %p42 = scmp.eq.s32.totalorder %s16, 0
      %p43 = por %p41, %p42
      %s44 = ssub.s32 %s10, %s17
      %p45 = scmp.eq.s32.totalorder %s44, 0
      %s47 = sadd.s32 %s46, 1
      %s48 = scalar_select %p45, %s46, %s47
      %p51 = pneg %p45
      %p52 = scmp.eq.s32.totalorder %s10, 1
      %p53 = por %p51, %p52
      %p54 = scmp.ne.s32.totalorder %s46, %s49
      %p55 = scmp.eq.s32.totalorder %s10, 0
      %p56 = por %p54, %p55
      %p57 = scmp.ne.s32.totalorder %s46, %s49
      %p58 = scmp.eq.s32.totalorder %s15, 1
      %p59 = por %p57, %p58
      %p60 = scmp.ne.s32.totalorder %s49, %s50
      %p61 = scmp.eq.s32.totalorder %s15, 0
      %p62 = por %p60, %p61
      %p63 = scmp.ne.s32.totalorder %s49, %s50
      %p64 = scmp.eq.s32.totalorder %s16, 1
      %p65 = por %p63, %p64
      %p67 = scmp.ne.s32.totalorder %s50, %s66
      %p68 = scmp.eq.s32.totalorder %s16, 0
      %p69 = por %p67, %p68
      %p70 = scmp.le.s32.totalorder 1, %s10
      %p71 = scmp.lt.s32.totalorder %s10, 3
      %p72 = pnand %p70, %p71
      %p73 = pneg %p72
      // Predicated region
      $region9: #{stem_forward.3} parent=5 // pred_check
        _
      $region10: #{stem_forward.3} parent=5 // pred_check_branch
        %75 = sbr.rel (%p72) target = $region12
      $region11: #{stem_forward.3} parent=5 // pred_region
        %s76 = ssub.s32 %s10, 1
      $region12: #{stem_forward.3} parent=5 // pred_fallthru
        _
      %p77 = scmp.lt.s32.totalorder %s10, 2
      // Predicated region
      $region13: #{stem_forward.3} parent=5 // pred_check
        %p78 = pneg %p77
      $region14: #{stem_forward.3} parent=5 // pred_check_branch
        %80 = sbr.rel (%p78) target = $region16
      $region15: #{stem_forward.3} parent=5 // pred_region
        // Predicated region
        $region17: #{stem_forward.3} parent=15 // pred_check
          %p81 = pneg %p30
        $region18: #{stem_forward.3} parent=15 // pred_check_branch
          %83 = sbr.rel (%p81) target = $region20
        $region19: #{stem_forward.3} parent=15 // pred_region
          %s84 = sand.u32 %s20, 1
          %s85 = sand.u32 %s20, 1
          %s86 = smul.addr %s85, 1152
          %s87 = scalar_lea.vmem [#allocation2], %s86
          %s88 = smul.u32 32, %s10
          %s89 = smul.addr %s88, 4
          %s90 = scalar_lea.vmem %s0, %s89
          // Predicated region
          $region21: #{stem_forward.3} parent=19 // pred_check
            _
          $region22: #{stem_forward.3} parent=19 // pred_check_branch
            %92 = sbr.rel (0) target = $region24
          $region23: #{stem_forward.3} parent=19 // pred_region
            // Predicated region
            $region25: #{stem_forward.3} parent=23 // pred_check
              _
            $region26: #{stem_forward.3} parent=23 // pred_check_branch
              %94 = sbr.rel target = $region28
            $region27: #{stem_forward.3} parent=23 // pred_region
              // Predicated region
              $region40: #{stem_forward.3} parent=27 // pred_check
                _
              $region41: #{stem_forward.3} parent=27 // pred_check_branch
                %683 = sbr.rel (0) target = $region43
              $region42: #{stem_forward.3} parent=27 // pred_region
                loop: start=0, step=1, limit=1
                $region44: #{stem_forward.3} parent=42 // loop_pre_header
                  _
                $region45: #{stem_forward.3} parent=42 // loop_header
                  %s685 = sphi 0, %s689
                  %p686 = scmp.ge.s32.totalorder %s685, 1
                  %s690 = sphi %s90, %s90
                  %s691 = sphi %s87, %s87
                $region46: #{stem_forward.3} parent=42 // loop_header_branch
                  %688 = sbr.rel (%p686) target = $region50
                $region47: #{stem_forward.3} parent=42 // loop_body
                  _
                $region48: #{stem_forward.3} parent=42 // loop_footer
                  %s689 = sadd.s32 1, %s685
                $region49: #{stem_forward.3} parent=42 // loop_footer_branch
                  %684 = sbr.rel target = $region45
                $region50: #{stem_forward.3} parent=42 // loop_exit
                  _
                loop: start=0, step=1, limit=1
                $region51: #{stem_forward.3} parent=42 // loop_pre_header
                  _
                $region52: #{stem_forward.3} parent=42 // loop_header
                  %s694 = sphi 0, %s698
                  %p695 = scmp.ge.s32.totalorder %s694, 1
                  %s699 = sphi %s90, %s90
                  %s700 = sphi %s87, %s87
                $region53: #{stem_forward.3} parent=42 // loop_header_branch
                  %697 = sbr.rel (%p695) target = $region57
                $region54: #{stem_forward.3} parent=42 // loop_body
                  %v701 = vld [vmem:[%s699] sm:$0xf]
                  %702 = vst [vmem:[%s700] sm:$0xf] %v701
                  %v703 = vld [vmem:[%s699 + $0x4] sm:$0xf]
                  %704 = vst [vmem:[%s700 + $0x4] sm:$0xf] %v703
                  %v705 = vld [vmem:[%s699 + $0x8] sm:$0xf]
                  %706 = vst [vmem:[%s700 + $0x8] sm:$0xf] %v705
                  %v707 = vld [vmem:[%s699 + $0xc] sm:$0xf]
                  %708 = vst [vmem:[%s700 + $0xc] sm:$0xf] %v707
                  %v709 = vld [vmem:[%s699 + $0x10] sm:$0xf]
                  %710 = vst [vmem:[%s700 + $0x10] sm:$0xf] %v709
                  %v711 = vld [vmem:[%s699 + $0x14] sm:$0xf]
                  %712 = vst [vmem:[%s700 + $0x14] sm:$0xf] %v711
                  %v713 = vld [vmem:[%s699 + $0x18] sm:$0xf]
                  %714 = vst [vmem:[%s700 + $0x18] sm:$0xf] %v713
                  %v715 = vld [vmem:[%s699 + $0x1c] sm:$0xf]
                  %716 = vst [vmem:[%s700 + $0x1c] sm:$0xf] %v715
                  %v717 = vld [vmem:[%s699 + $0x20] sm:$0xf]
                  %718 = vst [vmem:[%s700 + $0x20] sm:$0xf] %v717
                  %v719 = vld [vmem:[%s699 + $0x24] sm:$0xf]
                  %720 = vst [vmem:[%s700 + $0x24] sm:$0xf] %v719
                  %v721 = vld [vmem:[%s699 + $0x28] sm:$0xf]
                  %722 = vst [vmem:[%s700 + $0x28] sm:$0xf] %v721
                  %v723 = vld [vmem:[%s699 + $0x2c] sm:$0xf]
                  %724 = vst [vmem:[%s700 + $0x2c] sm:$0xf] %v723
                  %v725 = vld [vmem:[%s699 + $0x30] sm:$0xf]
                  %726 = vst [vmem:[%s700 + $0x30] sm:$0xf] %v725
                  %v727 = vld [vmem:[%s699 + $0x34] sm:$0xf]
                  %728 = vst [vmem:[%s700 + $0x34] sm:$0xf] %v727
                  %v729 = vld [vmem:[%s699 + $0x38] sm:$0xf]
                  %730 = vst [vmem:[%s700 + $0x38] sm:$0xf] %v729
                  %v731 = vld [vmem:[%s699 + $0x3c] sm:$0xf]
                  %732 = vst [vmem:[%s700 + $0x3c] sm:$0xf] %v731
                  %v733 = vld [vmem:[%s699 + $0x40] sm:$0xf]
                  %734 = vst [vmem:[%s700 + $0x40] sm:$0xf] %v733
                  %v735 = vld [vmem:[%s699 + $0x44] sm:$0xf]
                  %736 = vst [vmem:[%s700 + $0x44] sm:$0xf] %v735
                  %v737 = vld [vmem:[%s699 + $0x48] sm:$0xf]
                  %738 = vst [vmem:[%s700 + $0x48] sm:$0xf] %v737
                  %v739 = vld [vmem:[%s699 + $0x4c] sm:$0xf]
                  %740 = vst [vmem:[%s700 + $0x4c] sm:$0xf] %v739
                  %v741 = vld [vmem:[%s699 + $0x50] sm:$0xf]
                  %742 = vst [vmem:[%s700 + $0x50] sm:$0xf] %v741
                  %v743 = vld [vmem:[%s699 + $0x54] sm:$0xf]
                  %744 = vst [vmem:[%s700 + $0x54] sm:$0xf] %v743
                  %v745 = vld [vmem:[%s699 + $0x58] sm:$0xf]
                  %746 = vst [vmem:[%s700 + $0x58] sm:$0xf] %v745
                  %v747 = vld [vmem:[%s699 + $0x5c] sm:$0xf]
                  %748 = vst [vmem:[%s700 + $0x5c] sm:$0xf] %v747
                  %v749 = vld [vmem:[%s699 + $0x60] sm:$0xf]
                  %750 = vst [vmem:[%s700 + $0x60] sm:$0xf] %v749
                  %v751 = vld [vmem:[%s699 + $0x64] sm:$0xf]
                  %752 = vst [vmem:[%s700 + $0x64] sm:$0xf] %v751
                  %v753 = vld [vmem:[%s699 + $0x68] sm:$0xf]
                  %754 = vst [vmem:[%s700 + $0x68] sm:$0xf] %v753
                  %v755 = vld [vmem:[%s699 + $0x6c] sm:$0xf]
                  %756 = vst [vmem:[%s700 + $0x6c] sm:$0xf] %v755
                  %v757 = vld [vmem:[%s699 + $0x70] sm:$0xf]
                  %758 = vst [vmem:[%s700 + $0x70] sm:$0xf] %v757
                  %v759 = vld [vmem:[%s699 + $0x74] sm:$0xf]
                  %760 = vst [vmem:[%s700 + $0x74] sm:$0xf] %v759
                  %v761 = vld [vmem:[%s699 + $0x78] sm:$0xf]
                  %762 = vst [vmem:[%s700 + $0x78] sm:$0xf] %v761
                  %v763 = vld [vmem:[%s699 + $0x7c] sm:$0xf]
                  %764 = vst [vmem:[%s700 + $0x7c] sm:$0xf] %v763
                  %v765 = vld [vmem:[%s699 + $0x100] sm:$0xf]
                  %766 = vst [vmem:[%s700 + $0x80] sm:$0xf] %v765
                  %v767 = vld [vmem:[%s699 + $0x104] sm:$0xf]
                  %768 = vst [vmem:[%s700 + $0x84] sm:$0xf] %v767
                  %v769 = vld [vmem:[%s699 + $0x108] sm:$0xf]
                  %770 = vst [vmem:[%s700 + $0x88] sm:$0xf] %v769
                  %v771 = vld [vmem:[%s699 + $0x10c] sm:$0xf]
                  %772 = vst [vmem:[%s700 + $0x8c] sm:$0xf] %v771
                  %v773 = vld [vmem:[%s699 + $0x110] sm:$0xf]
                  %774 = vst [vmem:[%s700 + $0x90] sm:$0xf] %v773
                  %v775 = vld [vmem:[%s699 + $0x114] sm:$0xf]
                  %776 = vst [vmem:[%s700 + $0x94] sm:$0xf] %v775
                  %v777 = vld [vmem:[%s699 + $0x118] sm:$0xf]
                  %778 = vst [vmem:[%s700 + $0x98] sm:$0xf] %v777
                  %v779 = vld [vmem:[%s699 + $0x11c] sm:$0xf]
                  %780 = vst [vmem:[%s700 + $0x9c] sm:$0xf] %v779
                  %v781 = vld [vmem:[%s699 + $0x120] sm:$0xf]
                  %782 = vst [vmem:[%s700 + $0xa0] sm:$0xf] %v781
                  %v783 = vld [vmem:[%s699 + $0x124] sm:$0xf]
                  %784 = vst [vmem:[%s700 + $0xa4] sm:$0xf] %v783
                  %v785 = vld [vmem:[%s699 + $0x128] sm:$0xf]
                  %786 = vst [vmem:[%s700 + $0xa8] sm:$0xf] %v785
                  %v787 = vld [vmem:[%s699 + $0x12c] sm:$0xf]
                  %788 = vst [vmem:[%s700 + $0xac] sm:$0xf] %v787
                  %v789 = vld [vmem:[%s699 + $0x130] sm:$0xf]
                  %790 = vst [vmem:[%s700 + $0xb0] sm:$0xf] %v789
                  %v791 = vld [vmem:[%s699 + $0x134] sm:$0xf]
                  %792 = vst [vmem:[%s700 + $0xb4] sm:$0xf] %v791
                  %v793 = vld [vmem:[%s699 + $0x138] sm:$0xf]
                  %794 = vst [vmem:[%s700 + $0xb8] sm:$0xf] %v793
                  %v795 = vld [vmem:[%s699 + $0x13c] sm:$0xf]
                  %796 = vst [vmem:[%s700 + $0xbc] sm:$0xf] %v795
                  %v797 = vld [vmem:[%s699 + $0x140] sm:$0xf]
                  %798 = vst [vmem:[%s700 + $0xc0] sm:$0xf] %v797
                  %v799 = vld [vmem:[%s699 + $0x144] sm:$0xf]
                  %800 = vst [vmem:[%s700 + $0xc4] sm:$0xf] %v799
                  %v801 = vld [vmem:[%s699 + $0x148] sm:$0xf]
                  %802 = vst [vmem:[%s700 + $0xc8] sm:$0xf] %v801
                  %v803 = vld [vmem:[%s699 + $0x14c] sm:$0xf]
                  %804 = vst [vmem:[%s700 + $0xcc] sm:$0xf] %v803
                  %v805 = vld [vmem:[%s699 + $0x150] sm:$0xf]
                  %806 = vst [vmem:[%s700 + $0xd0] sm:$0xf] %v805
                  %v807 = vld [vmem:[%s699 + $0x154] sm:$0xf]
                  %808 = vst [vmem:[%s700 + $0xd4] sm:$0xf] %v807
                  %v809 = vld [vmem:[%s699 + $0x158] sm:$0xf]
                  %810 = vst [vmem:[%s700 + $0xd8] sm:$0xf] %v809
                  %v811 = vld [vmem:[%s699 + $0x15c] sm:$0xf]
                  %812 = vst [vmem:[%s700 + $0xdc] sm:$0xf] %v811
                  %v813 = vld [vmem:[%s699 + $0x160] sm:$0xf]
                  %814 = vst [vmem:[%s700 + $0xe0] sm:$0xf] %v813
                  %v815 = vld [vmem:[%s699 + $0x164] sm:$0xf]
                  %816 = vst [vmem:[%s700 + $0xe4] sm:$0xf] %v815
                  %v817 = vld [vmem:[%s699 + $0x168] sm:$0xf]
                  %818 = vst [vmem:[%s700 + $0xe8] sm:$0xf] %v817
                  %v819 = vld [vmem:[%s699 + $0x16c] sm:$0xf]
                  %820 = vst [vmem:[%s700 + $0xec] sm:$0xf] %v819
                  %v821 = vld [vmem:[%s699 + $0x170] sm:$0xf]
                  %822 = vst [vmem:[%s700 + $0xf0] sm:$0xf] %v821
                  %v823 = vld [vmem:[%s699 + $0x174] sm:$0xf]
                  %824 = vst [vmem:[%s700 + $0xf4] sm:$0xf] %v823
                  %v825 = vld [vmem:[%s699 + $0x178] sm:$0xf]
                  %826 = vst [vmem:[%s700 + $0xf8] sm:$0xf] %v825
                  %v827 = vld [vmem:[%s699 + $0x17c] sm:$0xf]
                  %828 = vst [vmem:[%s700 + $0xfc] sm:$0xf] %v827
                  %v829 = vld [vmem:[%s699 + $0x200] sm:$0xf]
                  %830 = vst [vmem:[%s700 + $0x100] sm:$0xf] %v829
                  %v831 = vld [vmem:[%s699 + $0x204] sm:$0xf]
                  %832 = vst [vmem:[%s700 + $0x104] sm:$0xf] %v831
                  %v833 = vld [vmem:[%s699 + $0x208] sm:$0xf]
                  %834 = vst [vmem:[%s700 + $0x108] sm:$0xf] %v833
                  %v835 = vld [vmem:[%s699 + $0x20c] sm:$0xf]
                  %836 = vst [vmem:[%s700 + $0x10c] sm:$0xf] %v835
                  %v837 = vld [vmem:[%s699 + $0x210] sm:$0xf]
                  %838 = vst [vmem:[%s700 + $0x110] sm:$0xf] %v837
                  %v839 = vld [vmem:[%s699 + $0x214] sm:$0xf]
                  %840 = vst [vmem:[%s700 + $0x114] sm:$0xf] %v839
                  %v841 = vld [vmem:[%s699 + $0x218] sm:$0xf]
                  %842 = vst [vmem:[%s700 + $0x118] sm:$0xf] %v841
                  %v843 = vld [vmem:[%s699 + $0x21c] sm:$0xf]
                  %844 = vst [vmem:[%s700 + $0x11c] sm:$0xf] %v843
                  %v845 = vld [vmem:[%s699 + $0x220] sm:$0xf]
                  %846 = vst [vmem:[%s700 + $0x120] sm:$0xf] %v845
                  %v847 = vld [vmem:[%s699 + $0x224] sm:$0xf]
                  %848 = vst [vmem:[%s700 + $0x124] sm:$0xf] %v847
                  %v849 = vld [vmem:[%s699 + $0x228] sm:$0xf]
                  %850 = vst [vmem:[%s700 + $0x128] sm:$0xf] %v849
                  %v851 = vld [vmem:[%s699 + $0x22c] sm:$0xf]
                  %852 = vst [vmem:[%s700 + $0x12c] sm:$0xf] %v851
                  %v853 = vld [vmem:[%s699 + $0x230] sm:$0xf]
                  %854 = vst [vmem:[%s700 + $0x130] sm:$0xf] %v853
                  %v855 = vld [vmem:[%s699 + $0x234] sm:$0xf]
                  %856 = vst [vmem:[%s700 + $0x134] sm:$0xf] %v855
                  %v857 = vld [vmem:[%s699 + $0x238] sm:$0xf]
                  %858 = vst [vmem:[%s700 + $0x138] sm:$0xf] %v857
                  %v859 = vld [vmem:[%s699 + $0x23c] sm:$0xf]
                  %860 = vst [vmem:[%s700 + $0x13c] sm:$0xf] %v859
                  %v861 = vld [vmem:[%s699 + $0x240] sm:$0xf]
                  %862 = vst [vmem:[%s700 + $0x140] sm:$0xf] %v861
                  %v863 = vld [vmem:[%s699 + $0x244] sm:$0xf]
                  %864 = vst [vmem:[%s700 + $0x144] sm:$0xf] %v863
                  %v865 = vld [vmem:[%s699 + $0x248] sm:$0xf]
                  %866 = vst [vmem:[%s700 + $0x148] sm:$0xf] %v865
                  %v867 = vld [vmem:[%s699 + $0x24c] sm:$0xf]
                  %868 = vst [vmem:[%s700 + $0x14c] sm:$0xf] %v867
                  %v869 = vld [vmem:[%s699 + $0x250] sm:$0xf]
                  %870 = vst [vmem:[%s700 + $0x150] sm:$0xf] %v869
                  %v871 = vld [vmem:[%s699 + $0x254] sm:$0xf]
                  %872 = vst [vmem:[%s700 + $0x154] sm:$0xf] %v871
                  %v873 = vld [vmem:[%s699 + $0x258] sm:$0xf]
                  %874 = vst [vmem:[%s700 + $0x158] sm:$0xf] %v873
                  %v875 = vld [vmem:[%s699 + $0x25c] sm:$0xf]
                  %876 = vst [vmem:[%s700 + $0x15c] sm:$0xf] %v875
                  %v877 = vld [vmem:[%s699 + $0x260] sm:$0xf]
                  %878 = vst [vmem:[%s700 + $0x160] sm:$0xf] %v877
                  %v879 = vld [vmem:[%s699 + $0x264] sm:$0xf]
                  %880 = vst [vmem:[%s700 + $0x164] sm:$0xf] %v879
                  %v881 = vld [vmem:[%s699 + $0x268] sm:$0xf]
                  %882 = vst [vmem:[%s700 + $0x168] sm:$0xf] %v881
                  %v883 = vld [vmem:[%s699 + $0x26c] sm:$0xf]
                  %884 = vst [vmem:[%s700 + $0x16c] sm:$0xf] %v883
                  %v885 = vld [vmem:[%s699 + $0x270] sm:$0xf]
                  %886 = vst [vmem:[%s700 + $0x170] sm:$0xf] %v885
                  %v887 = vld [vmem:[%s699 + $0x274] sm:$0xf]
                  %888 = vst [vmem:[%s700 + $0x174] sm:$0xf] %v887
                  %v889 = vld [vmem:[%s699 + $0x278] sm:$0xf]
                  %890 = vst [vmem:[%s700 + $0x178] sm:$0xf] %v889
                  %v891 = vld [vmem:[%s699 + $0x27c] sm:$0xf]
                  %892 = vst [vmem:[%s700 + $0x17c] sm:$0xf] %v891
                  %v893 = vld [vmem:[%s699 + $0x300] sm:$0xf]
                  %894 = vst [vmem:[%s700 + $0x180] sm:$0xf] %v893
                  %v895 = vld [vmem:[%s699 + $0x304] sm:$0xf]
                  %896 = vst [vmem:[%s700 + $0x184] sm:$0xf] %v895
                  %v897 = vld [vmem:[%s699 + $0x308] sm:$0xf]
                  %898 = vst [vmem:[%s700 + $0x188] sm:$0xf] %v897
                  %v899 = vld [vmem:[%s699 + $0x30c] sm:$0xf]
                  %900 = vst [vmem:[%s700 + $0x18c] sm:$0xf] %v899
                  %v901 = vld [vmem:[%s699 + $0x310] sm:$0xf]
                  %902 = vst [vmem:[%s700 + $0x190] sm:$0xf] %v901
                  %v903 = vld [vmem:[%s699 + $0x314] sm:$0xf]
                  %904 = vst [vmem:[%s700 + $0x194] sm:$0xf] %v903
                  %v905 = vld [vmem:[%s699 + $0x318] sm:$0xf]
                  %906 = vst [vmem:[%s700 + $0x198] sm:$0xf] %v905
                  %v907 = vld [vmem:[%s699 + $0x31c] sm:$0xf]
                  %908 = vst [vmem:[%s700 + $0x19c] sm:$0xf] %v907
                  %v909 = vld [vmem:[%s699 + $0x320] sm:$0xf]
                  %910 = vst [vmem:[%s700 + $0x1a0] sm:$0xf] %v909
                  %v911 = vld [vmem:[%s699 + $0x324] sm:$0xf]
                  %912 = vst [vmem:[%s700 + $0x1a4] sm:$0xf] %v911
                  %v913 = vld [vmem:[%s699 + $0x328] sm:$0xf]
                  %914 = vst [vmem:[%s700 + $0x1a8] sm:$0xf] %v913
                  %v915 = vld [vmem:[%s699 + $0x32c] sm:$0xf]
                  %916 = vst [vmem:[%s700 + $0x1ac] sm:$0xf] %v915
                  %v917 = vld [vmem:[%s699 + $0x330] sm:$0xf]
                  %918 = vst [vmem:[%s700 + $0x1b0] sm:$0xf] %v917
                  %v919 = vld [vmem:[%s699 + $0x334] sm:$0xf]
                  %920 = vst [vmem:[%s700 + $0x1b4] sm:$0xf] %v919
                  %v921 = vld [vmem:[%s699 + $0x338] sm:$0xf]
                  %922 = vst [vmem:[%s700 + $0x1b8] sm:$0xf] %v921
                  %v923 = vld [vmem:[%s699 + $0x33c] sm:$0xf]
                  %924 = vst [vmem:[%s700 + $0x1bc] sm:$0xf] %v923
                  %v925 = vld [vmem:[%s699 + $0x340] sm:$0xf]
                  %926 = vst [vmem:[%s700 + $0x1c0] sm:$0xf] %v925
                  %v927 = vld [vmem:[%s699 + $0x344] sm:$0xf]
                  %928 = vst [vmem:[%s700 + $0x1c4] sm:$0xf] %v927
                  %v929 = vld [vmem:[%s699 + $0x348] sm:$0xf]
                  %930 = vst [vmem:[%s700 + $0x1c8] sm:$0xf] %v929
                  %v931 = vld [vmem:[%s699 + $0x34c] sm:$0xf]
                  %932 = vst [vmem:[%s700 + $0x1cc] sm:$0xf] %v931
                  %v933 = vld [vmem:[%s699 + $0x350] sm:$0xf]
                  %934 = vst [vmem:[%s700 + $0x1d0] sm:$0xf] %v933
                  %v935 = vld [vmem:[%s699 + $0x354] sm:$0xf]
                  %936 = vst [vmem:[%s700 + $0x1d4] sm:$0xf] %v935
                  %v937 = vld [vmem:[%s699 + $0x358] sm:$0xf]
                  %938 = vst [vmem:[%s700 + $0x1d8] sm:$0xf] %v937
                  %v939 = vld [vmem:[%s699 + $0x35c] sm:$0xf]
                  %940 = vst [vmem:[%s700 + $0x1dc] sm:$0xf] %v939
                  %v941 = vld [vmem:[%s699 + $0x360] sm:$0xf]
                  %942 = vst [vmem:[%s700 + $0x1e0] sm:$0xf] %v941
                  %v943 = vld [vmem:[%s699 + $0x364] sm:$0xf]
                  %944 = vst [vmem:[%s700 + $0x1e4] sm:$0xf] %v943
                  %v945 = vld [vmem:[%s699 + $0x368] sm:$0xf]
                  %946 = vst [vmem:[%s700 + $0x1e8] sm:$0xf] %v945
                  %v947 = vld [vmem:[%s699 + $0x36c] sm:$0xf]
                  %948 = vst [vmem:[%s700 + $0x1ec] sm:$0xf] %v947
                  %v949 = vld [vmem:[%s699 + $0x370] sm:$0xf]
                  %950 = vst [vmem:[%s700 + $0x1f0] sm:$0xf] %v949
                  %v951 = vld [vmem:[%s699 + $0x374] sm:$0xf]
                  %952 = vst [vmem:[%s700 + $0x1f4] sm:$0xf] %v951
                  %v953 = vld [vmem:[%s699 + $0x378] sm:$0xf]
                  %954 = vst [vmem:[%s700 + $0x1f8] sm:$0xf] %v953
                  %v955 = vld [vmem:[%s699 + $0x37c] sm:$0xf]
                  %956 = vst [vmem:[%s700 + $0x1fc] sm:$0xf] %v955
                  %v957 = vld [vmem:[%s699 + $0x400] sm:$0xf]
                  %958 = vst [vmem:[%s700 + $0x200] sm:$0xf] %v957
                  %v959 = vld [vmem:[%s699 + $0x404] sm:$0xf]
                  %960 = vst [vmem:[%s700 + $0x204] sm:$0xf] %v959
                  %v961 = vld [vmem:[%s699 + $0x408] sm:$0xf]
                  %962 = vst [vmem:[%s700 + $0x208] sm:$0xf] %v961
                  %v963 = vld [vmem:[%s699 + $0x40c] sm:$0xf]
                  %964 = vst [vmem:[%s700 + $0x20c] sm:$0xf] %v963
                  %v965 = vld [vmem:[%s699 + $0x410] sm:$0xf]
                  %966 = vst [vmem:[%s700 + $0x210] sm:$0xf] %v965
                  %v967 = vld [vmem:[%s699 + $0x414] sm:$0xf]
                  %968 = vst [vmem:[%s700 + $0x214] sm:$0xf] %v967
                  %v969 = vld [vmem:[%s699 + $0x418] sm:$0xf]
                  %970 = vst [vmem:[%s700 + $0x218] sm:$0xf] %v969
                  %v971 = vld [vmem:[%s699 + $0x41c] sm:$0xf]
                  %972 = vst [vmem:[%s700 + $0x21c] sm:$0xf] %v971
                  %v973 = vld [vmem:[%s699 + $0x420] sm:$0xf]
                  %974 = vst [vmem:[%s700 + $0x220] sm:$0xf] %v973
                  %v975 = vld [vmem:[%s699 + $0x424] sm:$0xf]
                  %976 = vst [vmem:[%s700 + $0x224] sm:$0xf] %v975
                  %v977 = vld [vmem:[%s699 + $0x428] sm:$0xf]
                  %978 = vst [vmem:[%s700 + $0x228] sm:$0xf] %v977
                  %v979 = vld [vmem:[%s699 + $0x42c] sm:$0xf]
                  %980 = vst [vmem:[%s700 + $0x22c] sm:$0xf] %v979
                  %v981 = vld [vmem:[%s699 + $0x430] sm:$0xf]
                  %982 = vst [vmem:[%s700 + $0x230] sm:$0xf] %v981
                  %v983 = vld [vmem:[%s699 + $0x434] sm:$0xf]
                  %984 = vst [vmem:[%s700 + $0x234] sm:$0xf] %v983
                  %v985 = vld [vmem:[%s699 + $0x438] sm:$0xf]
                  %986 = vst [vmem:[%s700 + $0x238] sm:$0xf] %v985
                  %v987 = vld [vmem:[%s699 + $0x43c] sm:$0xf]
                  %988 = vst [vmem:[%s700 + $0x23c] sm:$0xf] %v987
                  %v989 = vld [vmem:[%s699 + $0x440] sm:$0xf]
                  %990 = vst [vmem:[%s700 + $0x240] sm:$0xf] %v989
                  %v991 = vld [vmem:[%s699 + $0x444] sm:$0xf]
                  %992 = vst [vmem:[%s700 + $0x244] sm:$0xf] %v991
                  %v993 = vld [vmem:[%s699 + $0x448] sm:$0xf]
                  %994 = vst [vmem:[%s700 + $0x248] sm:$0xf] %v993
                  %v995 = vld [vmem:[%s699 + $0x44c] sm:$0xf]
                  %996 = vst [vmem:[%s700 + $0x24c] sm:$0xf] %v995
                  %v997 = vld [vmem:[%s699 + $0x450] sm:$0xf]
                  %998 = vst [vmem:[%s700 + $0x250] sm:$0xf] %v997
                  %v999 = vld [vmem:[%s699 + $0x454] sm:$0xf]
                  %1000 = vst [vmem:[%s700 + $0x254] sm:$0xf] %v999
                  %v1001 = vld [vmem:[%s699 + $0x458] sm:$0xf]
                  %1002 = vst [vmem:[%s700 + $0x258] sm:$0xf] %v1001
                  %v1003 = vld [vmem:[%s699 + $0x45c] sm:$0xf]
                  %1004 = vst [vmem:[%s700 + $0x25c] sm:$0xf] %v1003
                  %v1005 = vld [vmem:[%s699 + $0x460] sm:$0xf]
                  %1006 = vst [vmem:[%s700 + $0x260] sm:$0xf] %v1005
                  %v1007 = vld [vmem:[%s699 + $0x464] sm:$0xf]
                  %1008 = vst [vmem:[%s700 + $0x264] sm:$0xf] %v1007
                  %v1009 = vld [vmem:[%s699 + $0x468] sm:$0xf]
                  %1010 = vst [vmem:[%s700 + $0x268] sm:$0xf] %v1009
                  %v1011 = vld [vmem:[%s699 + $0x46c] sm:$0xf]
                  %1012 = vst [vmem:[%s700 + $0x26c] sm:$0xf] %v1011
                  %v1013 = vld [vmem:[%s699 + $0x470] sm:$0xf]
                  %1014 = vst [vmem:[%s700 + $0x270] sm:$0xf] %v1013
                  %v1015 = vld [vmem:[%s699 + $0x474] sm:$0xf]
                  %1016 = vst [vmem:[%s700 + $0x274] sm:$0xf] %v1015
                  %v1017 = vld [vmem:[%s699 + $0x478] sm:$0xf]
                  %1018 = vst [vmem:[%s700 + $0x278] sm:$0xf] %v1017
                  %v1019 = vld [vmem:[%s699 + $0x47c] sm:$0xf]
                  %1020 = vst [vmem:[%s700 + $0x27c] sm:$0xf] %v1019
                  %v1021 = vld [vmem:[%s699 + $0x500] sm:$0xf]
                  %1022 = vst [vmem:[%s700 + $0x280] sm:$0xf] %v1021
                  %v1023 = vld [vmem:[%s699 + $0x504] sm:$0xf]
                  %1024 = vst [vmem:[%s700 + $0x284] sm:$0xf] %v1023
                  %v1025 = vld [vmem:[%s699 + $0x508] sm:$0xf]
                  %1026 = vst [vmem:[%s700 + $0x288] sm:$0xf] %v1025
                  %v1027 = vld [vmem:[%s699 + $0x50c] sm:$0xf]
                  %1028 = vst [vmem:[%s700 + $0x28c] sm:$0xf] %v1027
                  %v1029 = vld [vmem:[%s699 + $0x510] sm:$0xf]
                  %1030 = vst [vmem:[%s700 + $0x290] sm:$0xf] %v1029
                  %v1031 = vld [vmem:[%s699 + $0x514] sm:$0xf]
                  %1032 = vst [vmem:[%s700 + $0x294] sm:$0xf] %v1031
                  %v1033 = vld [vmem:[%s699 + $0x518] sm:$0xf]
                  %1034 = vst [vmem:[%s700 + $0x298] sm:$0xf] %v1033
                  %v1035 = vld [vmem:[%s699 + $0x51c] sm:$0xf]
                  %1036 = vst [vmem:[%s700 + $0x29c] sm:$0xf] %v1035
                  %v1037 = vld [vmem:[%s699 + $0x520] sm:$0xf]
                  %1038 = vst [vmem:[%s700 + $0x2a0] sm:$0xf] %v1037
                  %v1039 = vld [vmem:[%s699 + $0x524] sm:$0xf]
                  %1040 = vst [vmem:[%s700 + $0x2a4] sm:$0xf] %v1039
                  %v1041 = vld [vmem:[%s699 + $0x528] sm:$0xf]
                  %1042 = vst [vmem:[%s700 + $0x2a8] sm:$0xf] %v1041
                  %v1043 = vld [vmem:[%s699 + $0x52c] sm:$0xf]
                  %1044 = vst [vmem:[%s700 + $0x2ac] sm:$0xf] %v1043
                  %v1045 = vld [vmem:[%s699 + $0x530] sm:$0xf]
                  %1046 = vst [vmem:[%s700 + $0x2b0] sm:$0xf] %v1045
                  %v1047 = vld [vmem:[%s699 + $0x534] sm:$0xf]
                  %1048 = vst [vmem:[%s700 + $0x2b4] sm:$0xf] %v1047
                  %v1049 = vld [vmem:[%s699 + $0x538] sm:$0xf]
                  %1050 = vst [vmem:[%s700 + $0x2b8] sm:$0xf] %v1049
                  %v1051 = vld [vmem:[%s699 + $0x53c] sm:$0xf]
                  %1052 = vst [vmem:[%s700 + $0x2bc] sm:$0xf] %v1051
                  %v1053 = vld [vmem:[%s699 + $0x540] sm:$0xf]
                  %1054 = vst [vmem:[%s700 + $0x2c0] sm:$0xf] %v1053
                  %v1055 = vld [vmem:[%s699 + $0x544] sm:$0xf]
                  %1056 = vst [vmem:[%s700 + $0x2c4] sm:$0xf] %v1055
                  %v1057 = vld [vmem:[%s699 + $0x548] sm:$0xf]
                  %1058 = vst [vmem:[%s700 + $0x2c8] sm:$0xf] %v1057
                  %v1059 = vld [vmem:[%s699 + $0x54c] sm:$0xf]
                  %1060 = vst [vmem:[%s700 + $0x2cc] sm:$0xf] %v1059
                  %v1061 = vld [vmem:[%s699 + $0x550] sm:$0xf]
                  %1062 = vst [vmem:[%s700 + $0x2d0] sm:$0xf] %v1061
                  %v1063 = vld [vmem:[%s699 + $0x554] sm:$0xf]
                  %1064 = vst [vmem:[%s700 + $0x2d4] sm:$0xf] %v1063
                  %v1065 = vld [vmem:[%s699 + $0x558] sm:$0xf]
                  %1066 = vst [vmem:[%s700 + $0x2d8] sm:$0xf] %v1065
                  %v1067 = vld [vmem:[%s699 + $0x55c] sm:$0xf]
                  %1068 = vst [vmem:[%s700 + $0x2dc] sm:$0xf] %v1067
                  %v1069 = vld [vmem:[%s699 + $0x560] sm:$0xf]
                  %1070 = vst [vmem:[%s700 + $0x2e0] sm:$0xf] %v1069
                  %v1071 = vld [vmem:[%s699 + $0x564] sm:$0xf]
                  %1072 = vst [vmem:[%s700 + $0x2e4] sm:$0xf] %v1071
                  %v1073 = vld [vmem:[%s699 + $0x568] sm:$0xf]
                  %1074 = vst [vmem:[%s700 + $0x2e8] sm:$0xf] %v1073
                  %v1075 = vld [vmem:[%s699 + $0x56c] sm:$0xf]
                  %1076 = vst [vmem:[%s700 + $0x2ec] sm:$0xf] %v1075
                  %v1077 = vld [vmem:[%s699 + $0x570] sm:$0xf]
                  %1078 = vst [vmem:[%s700 + $0x2f0] sm:$0xf] %v1077
                  %v1079 = vld [vmem:[%s699 + $0x574] sm:$0xf]
                  %1080 = vst [vmem:[%s700 + $0x2f4] sm:$0xf] %v1079
                  %v1081 = vld [vmem:[%s699 + $0x578] sm:$0xf]
                  %1082 = vst [vmem:[%s700 + $0x2f8] sm:$0xf] %v1081
                  %v1083 = vld [vmem:[%s699 + $0x57c] sm:$0xf]
                  %1084 = vst [vmem:[%s700 + $0x2fc] sm:$0xf] %v1083
                  %v1085 = vld [vmem:[%s699 + $0x600] sm:$0xf]
                  %1086 = vst [vmem:[%s700 + $0x300] sm:$0xf] %v1085
                  %v1087 = vld [vmem:[%s699 + $0x604] sm:$0xf]
                  %1088 = vst [vmem:[%s700 + $0x304] sm:$0xf] %v1087
                  %v1089 = vld [vmem:[%s699 + $0x608] sm:$0xf]
                  %1090 = vst [vmem:[%s700 + $0x308] sm:$0xf] %v1089
                  %v1091 = vld [vmem:[%s699 + $0x60c] sm:$0xf]
                  %1092 = vst [vmem:[%s700 + $0x30c] sm:$0xf] %v1091
                  %v1093 = vld [vmem:[%s699 + $0x610] sm:$0xf]
                  %1094 = vst [vmem:[%s700 + $0x310] sm:$0xf] %v1093
                  %v1095 = vld [vmem:[%s699 + $0x614] sm:$0xf]
                  %1096 = vst [vmem:[%s700 + $0x314] sm:$0xf] %v1095
                  %v1097 = vld [vmem:[%s699 + $0x618] sm:$0xf]
                  %1098 = vst [vmem:[%s700 + $0x318] sm:$0xf] %v1097
                  %v1099 = vld [vmem:[%s699 + $0x61c] sm:$0xf]
                  %1100 = vst [vmem:[%s700 + $0x31c] sm:$0xf] %v1099
                  %v1101 = vld [vmem:[%s699 + $0x620] sm:$0xf]
                  %1102 = vst [vmem:[%s700 + $0x320] sm:$0xf] %v1101
                  %v1103 = vld [vmem:[%s699 + $0x624] sm:$0xf]
                  %1104 = vst [vmem:[%s700 + $0x324] sm:$0xf] %v1103
                  %v1105 = vld [vmem:[%s699 + $0x628] sm:$0xf]
                  %1106 = vst [vmem:[%s700 + $0x328] sm:$0xf] %v1105
                  %v1107 = vld [vmem:[%s699 + $0x62c] sm:$0xf]
                  %1108 = vst [vmem:[%s700 + $0x32c] sm:$0xf] %v1107
                  %v1109 = vld [vmem:[%s699 + $0x630] sm:$0xf]
                  %1110 = vst [vmem:[%s700 + $0x330] sm:$0xf] %v1109
                  %v1111 = vld [vmem:[%s699 + $0x634] sm:$0xf]
                  %1112 = vst [vmem:[%s700 + $0x334] sm:$0xf] %v1111
                  %v1113 = vld [vmem:[%s699 + $0x638] sm:$0xf]
                  %1114 = vst [vmem:[%s700 + $0x338] sm:$0xf] %v1113
                  %v1115 = vld [vmem:[%s699 + $0x63c] sm:$0xf]
                  %1116 = vst [vmem:[%s700 + $0x33c] sm:$0xf] %v1115
                  %v1117 = vld [vmem:[%s699 + $0x640] sm:$0xf]
                  %1118 = vst [vmem:[%s700 + $0x340] sm:$0xf] %v1117
                  %v1119 = vld [vmem:[%s699 + $0x644] sm:$0xf]
                  %1120 = vst [vmem:[%s700 + $0x344] sm:$0xf] %v1119
                  %v1121 = vld [vmem:[%s699 + $0x648] sm:$0xf]
                  %1122 = vst [vmem:[%s700 + $0x348] sm:$0xf] %v1121
                  %v1123 = vld [vmem:[%s699 + $0x64c] sm:$0xf]
                  %1124 = vst [vmem:[%s700 + $0x34c] sm:$0xf] %v1123
                  %v1125 = vld [vmem:[%s699 + $0x650] sm:$0xf]
                  %1126 = vst [vmem:[%s700 + $0x350] sm:$0xf] %v1125
                  %v1127 = vld [vmem:[%s699 + $0x654] sm:$0xf]
                  %1128 = vst [vmem:[%s700 + $0x354] sm:$0xf] %v1127
                  %v1129 = vld [vmem:[%s699 + $0x658] sm:$0xf]
                  %1130 = vst [vmem:[%s700 + $0x358] sm:$0xf] %v1129
                  %v1131 = vld [vmem:[%s699 + $0x65c] sm:$0xf]
                  %1132 = vst [vmem:[%s700 + $0x35c] sm:$0xf] %v1131
                  %v1133 = vld [vmem:[%s699 + $0x660] sm:$0xf]
                  %1134 = vst [vmem:[%s700 + $0x360] sm:$0xf] %v1133
                  %v1135 = vld [vmem:[%s699 + $0x664] sm:$0xf]
                  %1136 = vst [vmem:[%s700 + $0x364] sm:$0xf] %v1135
                  %v1137 = vld [vmem:[%s699 + $0x668] sm:$0xf]
                  %1138 = vst [vmem:[%s700 + $0x368] sm:$0xf] %v1137
                  %v1139 = vld [vmem:[%s699 + $0x66c] sm:$0xf]
                  %1140 = vst [vmem:[%s700 + $0x36c] sm:$0xf] %v1139
                  %v1141 = vld [vmem:[%s699 + $0x670] sm:$0xf]
                  %1142 = vst [vmem:[%s700 + $0x370] sm:$0xf] %v1141
                  %v1143 = vld [vmem:[%s699 + $0x674] sm:$0xf]
                  %1144 = vst [vmem:[%s700 + $0x374] sm:$0xf] %v1143
                  %v1145 = vld [vmem:[%s699 + $0x678] sm:$0xf]
                  %1146 = vst [vmem:[%s700 + $0x378] sm:$0xf] %v1145
                  %v1147 = vld [vmem:[%s699 + $0x67c] sm:$0xf]
                  %1148 = vst [vmem:[%s700 + $0x37c] sm:$0xf] %v1147
                  %v1149 = vld [vmem:[%s699 + $0x700] sm:$0xf]
                  %1150 = vst [vmem:[%s700 + $0x380] sm:$0xf] %v1149
                  %v1151 = vld [vmem:[%s699 + $0x704] sm:$0xf]
                  %1152 = vst [vmem:[%s700 + $0x384] sm:$0xf] %v1151
                  %v1153 = vld [vmem:[%s699 + $0x708] sm:$0xf]
                  %1154 = vst [vmem:[%s700 + $0x388] sm:$0xf] %v1153
                  %v1155 = vld [vmem:[%s699 + $0x70c] sm:$0xf]
                  %1156 = vst [vmem:[%s700 + $0x38c] sm:$0xf] %v1155
                  %v1157 = vld [vmem:[%s699 + $0x710] sm:$0xf]
                  %1158 = vst [vmem:[%s700 + $0x390] sm:$0xf] %v1157
                  %v1159 = vld [vmem:[%s699 + $0x714] sm:$0xf]
                  %1160 = vst [vmem:[%s700 + $0x394] sm:$0xf] %v1159
                  %v1161 = vld [vmem:[%s699 + $0x718] sm:$0xf]
                  %1162 = vst [vmem:[%s700 + $0x398] sm:$0xf] %v1161
                  %v1163 = vld [vmem:[%s699 + $0x71c] sm:$0xf]
                  %1164 = vst [vmem:[%s700 + $0x39c] sm:$0xf] %v1163
                  %v1165 = vld [vmem:[%s699 + $0x720] sm:$0xf]
                  %1166 = vst [vmem:[%s700 + $0x3a0] sm:$0xf] %v1165
                  %v1167 = vld [vmem:[%s699 + $0x724] sm:$0xf]
                  %1168 = vst [vmem:[%s700 + $0x3a4] sm:$0xf] %v1167
                  %v1169 = vld [vmem:[%s699 + $0x728] sm:$0xf]
                  %1170 = vst [vmem:[%s700 + $0x3a8] sm:$0xf] %v1169
                  %v1171 = vld [vmem:[%s699 + $0x72c] sm:$0xf]
                  %1172 = vst [vmem:[%s700 + $0x3ac] sm:$0xf] %v1171
                  %v1173 = vld [vmem:[%s699 + $0x730] sm:$0xf]
                  %1174 = vst [vmem:[%s700 + $0x3b0] sm:$0xf] %v1173
                  %v1175 = vld [vmem:[%s699 + $0x734] sm:$0xf]
                  %1176 = vst [vmem:[%s700 + $0x3b4] sm:$0xf] %v1175
                  %v1177 = vld [vmem:[%s699 + $0x738] sm:$0xf]
                  %1178 = vst [vmem:[%s700 + $0x3b8] sm:$0xf] %v1177
                  %v1179 = vld [vmem:[%s699 + $0x73c] sm:$0xf]
                  %1180 = vst [vmem:[%s700 + $0x3bc] sm:$0xf] %v1179
                  %v1181 = vld [vmem:[%s699 + $0x740] sm:$0xf]
                  %1182 = vst [vmem:[%s700 + $0x3c0] sm:$0xf] %v1181
                  %v1183 = vld [vmem:[%s699 + $0x744] sm:$0xf]
                  %1184 = vst [vmem:[%s700 + $0x3c4] sm:$0xf] %v1183
                  %v1185 = vld [vmem:[%s699 + $0x748] sm:$0xf]
                  %1186 = vst [vmem:[%s700 + $0x3c8] sm:$0xf] %v1185
                  %v1187 = vld [vmem:[%s699 + $0x74c] sm:$0xf]
                  %1188 = vst [vmem:[%s700 + $0x3cc] sm:$0xf] %v1187
                  %v1189 = vld [vmem:[%s699 + $0x750] sm:$0xf]
                  %1190 = vst [vmem:[%s700 + $0x3d0] sm:$0xf] %v1189
                  %v1191 = vld [vmem:[%s699 + $0x754] sm:$0xf]
                  %1192 = vst [vmem:[%s700 + $0x3d4] sm:$0xf] %v1191
                  %v1193 = vld [vmem:[%s699 + $0x758] sm:$0xf]
                  %1194 = vst [vmem:[%s700 + $0x3d8] sm:$0xf] %v1193
                  %v1195 = vld [vmem:[%s699 + $0x75c] sm:$0xf]
                  %1196 = vst [vmem:[%s700 + $0x3dc] sm:$0xf] %v1195
                  %v1197 = vld [vmem:[%s699 + $0x760] sm:$0xf]
                  %1198 = vst [vmem:[%s700 + $0x3e0] sm:$0xf] %v1197
                  %v1199 = vld [vmem:[%s699 + $0x764] sm:$0xf]
                  %1200 = vst [vmem:[%s700 + $0x3e4] sm:$0xf] %v1199
                  %v1201 = vld [vmem:[%s699 + $0x768] sm:$0xf]
                  %1202 = vst [vmem:[%s700 + $0x3e8] sm:$0xf] %v1201
                  %v1203 = vld [vmem:[%s699 + $0x76c] sm:$0xf]
                  %1204 = vst [vmem:[%s700 + $0x3ec] sm:$0xf] %v1203
                  %v1205 = vld [vmem:[%s699 + $0x770] sm:$0xf]
                  %1206 = vst [vmem:[%s700 + $0x3f0] sm:$0xf] %v1205
                  %v1207 = vld [vmem:[%s699 + $0x774] sm:$0xf]
                  %1208 = vst [vmem:[%s700 + $0x3f4] sm:$0xf] %v1207
                  %v1209 = vld [vmem:[%s699 + $0x778] sm:$0xf]
                  %1210 = vst [vmem:[%s700 + $0x3f8] sm:$0xf] %v1209
                  %v1211 = vld [vmem:[%s699 + $0x77c] sm:$0xf]
                  %1212 = vst [vmem:[%s700 + $0x3fc] sm:$0xf] %v1211
                  %v1213 = vld [vmem:[%s699 + $0x800] sm:$0xf]
                  %1214 = vst [vmem:[%s700 + $0x400] sm:$0xf] %v1213
                  %v1215 = vld [vmem:[%s699 + $0x804] sm:$0xf]
                  %1216 = vst [vmem:[%s700 + $0x404] sm:$0xf] %v1215
                  %v1217 = vld [vmem:[%s699 + $0x808] sm:$0xf]
                  %1218 = vst [vmem:[%s700 + $0x408] sm:$0xf] %v1217
                  %v1219 = vld [vmem:[%s699 + $0x80c] sm:$0xf]
                  %1220 = vst [vmem:[%s700 + $0x40c] sm:$0xf] %v1219
                  %v1221 = vld [vmem:[%s699 + $0x810] sm:$0xf]
                  %1222 = vst [vmem:[%s700 + $0x410] sm:$0xf] %v1221
                  %v1223 = vld [vmem:[%s699 + $0x814] sm:$0xf]
                  %1224 = vst [vmem:[%s700 + $0x414] sm:$0xf] %v1223
                  %v1225 = vld [vmem:[%s699 + $0x818] sm:$0xf]
                  %1226 = vst [vmem:[%s700 + $0x418] sm:$0xf] %v1225
                  %v1227 = vld [vmem:[%s699 + $0x81c] sm:$0xf]
                  %1228 = vst [vmem:[%s700 + $0x41c] sm:$0xf] %v1227
                  %v1229 = vld [vmem:[%s699 + $0x820] sm:$0xf]
                  %1230 = vst [vmem:[%s700 + $0x420] sm:$0xf] %v1229
                  %v1231 = vld [vmem:[%s699 + $0x824] sm:$0xf]
                  %1232 = vst [vmem:[%s700 + $0x424] sm:$0xf] %v1231
                  %v1233 = vld [vmem:[%s699 + $0x828] sm:$0xf]
                  %1234 = vst [vmem:[%s700 + $0x428] sm:$0xf] %v1233
                  %v1235 = vld [vmem:[%s699 + $0x82c] sm:$0xf]
                  %1236 = vst [vmem:[%s700 + $0x42c] sm:$0xf] %v1235
                  %v1237 = vld [vmem:[%s699 + $0x830] sm:$0xf]
                  %1238 = vst [vmem:[%s700 + $0x430] sm:$0xf] %v1237
                  %v1239 = vld [vmem:[%s699 + $0x834] sm:$0xf]
                  %1240 = vst [vmem:[%s700 + $0x434] sm:$0xf] %v1239
                  %v1241 = vld [vmem:[%s699 + $0x838] sm:$0xf]
                  %1242 = vst [vmem:[%s700 + $0x438] sm:$0xf] %v1241
                  %v1243 = vld [vmem:[%s699 + $0x83c] sm:$0xf]
                  %1244 = vst [vmem:[%s700 + $0x43c] sm:$0xf] %v1243
                  %v1245 = vld [vmem:[%s699 + $0x840] sm:$0xf]
                  %1246 = vst [vmem:[%s700 + $0x440] sm:$0xf] %v1245
                  %v1247 = vld [vmem:[%s699 + $0x844] sm:$0xf]
                  %1248 = vst [vmem:[%s700 + $0x444] sm:$0xf] %v1247
                  %v1249 = vld [vmem:[%s699 + $0x848] sm:$0xf]
                  %1250 = vst [vmem:[%s700 + $0x448] sm:$0xf] %v1249
                  %v1251 = vld [vmem:[%s699 + $0x84c] sm:$0xf]
                  %1252 = vst [vmem:[%s700 + $0x44c] sm:$0xf] %v1251
                  %v1253 = vld [vmem:[%s699 + $0x850] sm:$0xf]
                  %1254 = vst [vmem:[%s700 + $0x450] sm:$0xf] %v1253
                  %v1255 = vld [vmem:[%s699 + $0x854] sm:$0xf]
                  %1256 = vst [vmem:[%s700 + $0x454] sm:$0xf] %v1255
                  %v1257 = vld [vmem:[%s699 + $0x858] sm:$0xf]
                  %1258 = vst [vmem:[%s700 + $0x458] sm:$0xf] %v1257
                  %v1259 = vld [vmem:[%s699 + $0x85c] sm:$0xf]
                  %1260 = vst [vmem:[%s700 + $0x45c] sm:$0xf] %v1259
                  %v1261 = vld [vmem:[%s699 + $0x860] sm:$0xf]
                  %1262 = vst [vmem:[%s700 + $0x460] sm:$0xf] %v1261
                  %v1263 = vld [vmem:[%s699 + $0x864] sm:$0xf]
                  %1264 = vst [vmem:[%s700 + $0x464] sm:$0xf] %v1263
                  %v1265 = vld [vmem:[%s699 + $0x868] sm:$0xf]
                  %1266 = vst [vmem:[%s700 + $0x468] sm:$0xf] %v1265
                  %v1267 = vld [vmem:[%s699 + $0x86c] sm:$0xf]
                  %1268 = vst [vmem:[%s700 + $0x46c] sm:$0xf] %v1267
                  %v1269 = vld [vmem:[%s699 + $0x870] sm:$0xf]
                  %1270 = vst [vmem:[%s700 + $0x470] sm:$0xf] %v1269
                  %v1271 = vld [vmem:[%s699 + $0x874] sm:$0xf]
                  %1272 = vst [vmem:[%s700 + $0x474] sm:$0xf] %v1271
                  %v1273 = vld [vmem:[%s699 + $0x878] sm:$0xf]
                  %1274 = vst [vmem:[%s700 + $0x478] sm:$0xf] %v1273
                  %v1275 = vld [vmem:[%s699 + $0x87c] sm:$0xf]
                  %1276 = vst [vmem:[%s700 + $0x47c] sm:$0xf] %v1275
                $region55: #{stem_forward.3} parent=42 // loop_footer
                  %s698 = sadd.s32 1, %s694
                $region56: #{stem_forward.3} parent=42 // loop_footer_branch
                  %693 = sbr.rel target = $region52
                $region57: #{stem_forward.3} parent=42 // loop_exit
                  _
              $region43: #{stem_forward.3} parent=27 // pred_fallthru
                _
            $region28: #{stem_forward.3} parent=23 // pred_fallthru
              _
            // Predicated region
            $region29: #{stem_forward.3} parent=23 // pred_check
              _
            $region30: #{stem_forward.3} parent=23 // pred_check_branch
              %96 = sbr.rel (0) target = $region32
            $region31: #{stem_forward.3} parent=23 // pred_region
              loop: start=0, step=1, limit=1
              $region33: #{stem_forward.3} parent=31 // loop_pre_header
                _
              $region34: #{stem_forward.3} parent=31 // loop_header
                %s99 = sphi 0, %s103
                %p100 = scmp.ge.s32.totalorder %s99, 1
                %s104 = sphi %s90, %s90
                %s105 = sphi %s87, %s87
              $region35: #{stem_forward.3} parent=31 // loop_header_branch
                %102 = sbr.rel (%p100) target = $region39
              $region36: #{stem_forward.3} parent=31 // loop_body
                %v106 = vld [vmem:[%s104] sm:$0xf]
                %107 = vst [vmem:[%s105] sm:$0xf] %v106
                %v108 = vld [vmem:[%s104 + $0x4] sm:$0xf]
                %109 = vst [vmem:[%s105 + $0x4] sm:$0xf] %v108
                %v110 = vld [vmem:[%s104 + $0x8] sm:$0xf]
                %111 = vst [vmem:[%s105 + $0x8] sm:$0xf] %v110
                %v112 = vld [vmem:[%s104 + $0xc] sm:$0xf]
                %113 = vst [vmem:[%s105 + $0xc] sm:$0xf] %v112
                %v114 = vld [vmem:[%s104 + $0x10] sm:$0xf]
                %115 = vst [vmem:[%s105 + $0x10] sm:$0xf] %v114
                %v116 = vld [vmem:[%s104 + $0x14] sm:$0xf]
                %117 = vst [vmem:[%s105 + $0x14] sm:$0xf] %v116
                %v118 = vld [vmem:[%s104 + $0x18] sm:$0xf]
                %119 = vst [vmem:[%s105 + $0x18] sm:$0xf] %v118
                %v120 = vld [vmem:[%s104 + $0x1c] sm:$0xf]
                %121 = vst [vmem:[%s105 + $0x1c] sm:$0xf] %v120
                %v122 = vld [vmem:[%s104 + $0x20] sm:$0xf]
                %123 = vst [vmem:[%s105 + $0x20] sm:$0xf] %v122
                %v124 = vld [vmem:[%s104 + $0x24] sm:$0xf]
                %125 = vst [vmem:[%s105 + $0x24] sm:$0xf] %v124
                %v126 = vld [vmem:[%s104 + $0x28] sm:$0xf]
                %127 = vst [vmem:[%s105 + $0x28] sm:$0xf] %v126
                %v128 = vld [vmem:[%s104 + $0x2c] sm:$0xf]
                %129 = vst [vmem:[%s105 + $0x2c] sm:$0xf] %v128
                %v130 = vld [vmem:[%s104 + $0x30] sm:$0xf]
                %131 = vst [vmem:[%s105 + $0x30] sm:$0xf] %v130
                %v132 = vld [vmem:[%s104 + $0x34] sm:$0xf]
                %133 = vst [vmem:[%s105 + $0x34] sm:$0xf] %v132
                %v134 = vld [vmem:[%s104 + $0x38] sm:$0xf]
                %135 = vst [vmem:[%s105 + $0x38] sm:$0xf] %v134
                %v136 = vld [vmem:[%s104 + $0x3c] sm:$0xf]
                %137 = vst [vmem:[%s105 + $0x3c] sm:$0xf] %v136
                %v138 = vld [vmem:[%s104 + $0x40] sm:$0xf]
                %139 = vst [vmem:[%s105 + $0x40] sm:$0xf] %v138
                %v140 = vld [vmem:[%s104 + $0x44] sm:$0xf]
                %141 = vst [vmem:[%s105 + $0x44] sm:$0xf] %v140
                %v142 = vld [vmem:[%s104 + $0x48] sm:$0xf]
                %143 = vst [vmem:[%s105 + $0x48] sm:$0xf] %v142
                %v144 = vld [vmem:[%s104 + $0x4c] sm:$0xf]
                %145 = vst [vmem:[%s105 + $0x4c] sm:$0xf] %v144
                %v146 = vld [vmem:[%s104 + $0x50] sm:$0xf]
                %147 = vst [vmem:[%s105 + $0x50] sm:$0xf] %v146
                %v148 = vld [vmem:[%s104 + $0x54] sm:$0xf]
                %149 = vst [vmem:[%s105 + $0x54] sm:$0xf] %v148
                %v150 = vld [vmem:[%s104 + $0x58] sm:$0xf]
                %151 = vst [vmem:[%s105 + $0x58] sm:$0xf] %v150
                %v152 = vld [vmem:[%s104 + $0x5c] sm:$0xf]
                %153 = vst [vmem:[%s105 + $0x5c] sm:$0xf] %v152
                %v154 = vld [vmem:[%s104 + $0x60] sm:$0xf]
                %155 = vst [vmem:[%s105 + $0x60] sm:$0xf] %v154
                %v156 = vld [vmem:[%s104 + $0x64] sm:$0xf]
                %157 = vst [vmem:[%s105 + $0x64] sm:$0xf] %v156
                %v158 = vld [vmem:[%s104 + $0x68] sm:$0xf]
                %159 = vst [vmem:[%s105 + $0x68] sm:$0xf] %v158
                %v160 = vld [vmem:[%s104 + $0x6c] sm:$0xf]
                %161 = vst [vmem:[%s105 + $0x6c] sm:$0xf] %v160
                %v162 = vld [vmem:[%s104 + $0x70] sm:$0xf]
                %163 = vst [vmem:[%s105 + $0x70] sm:$0xf] %v162
                %v164 = vld [vmem:[%s104 + $0x74] sm:$0xf]
                %165 = vst [vmem:[%s105 + $0x74] sm:$0xf] %v164
                %v166 = vld [vmem:[%s104 + $0x78] sm:$0xf]
                %167 = vst [vmem:[%s105 + $0x78] sm:$0xf] %v166
                %v168 = vld [vmem:[%s104 + $0x7c] sm:$0xf]
                %169 = vst [vmem:[%s105 + $0x7c] sm:$0xf] %v168
                %v170 = vld [vmem:[%s104 + $0x100] sm:$0xf]
                %171 = vst [vmem:[%s105 + $0x80] sm:$0xf] %v170
                %v172 = vld [vmem:[%s104 + $0x104] sm:$0xf]
                %173 = vst [vmem:[%s105 + $0x84] sm:$0xf] %v172
                %v174 = vld [vmem:[%s104 + $0x108] sm:$0xf]
                %175 = vst [vmem:[%s105 + $0x88] sm:$0xf] %v174
                %v176 = vld [vmem:[%s104 + $0x10c] sm:$0xf]
                %177 = vst [vmem:[%s105 + $0x8c] sm:$0xf] %v176
                %v178 = vld [vmem:[%s104 + $0x110] sm:$0xf]
                %179 = vst [vmem:[%s105 + $0x90] sm:$0xf] %v178
                %v180 = vld [vmem:[%s104 + $0x114] sm:$0xf]
                %181 = vst [vmem:[%s105 + $0x94] sm:$0xf] %v180
                %v182 = vld [vmem:[%s104 + $0x118] sm:$0xf]
                %183 = vst [vmem:[%s105 + $0x98] sm:$0xf] %v182
                %v184 = vld [vmem:[%s104 + $0x11c] sm:$0xf]
                %185 = vst [vmem:[%s105 + $0x9c] sm:$0xf] %v184
                %v186 = vld [vmem:[%s104 + $0x120] sm:$0xf]
                %187 = vst [vmem:[%s105 + $0xa0] sm:$0xf] %v186
                %v188 = vld [vmem:[%s104 + $0x124] sm:$0xf]
                %189 = vst [vmem:[%s105 + $0xa4] sm:$0xf] %v188
                %v190 = vld [vmem:[%s104 + $0x128] sm:$0xf]
                %191 = vst [vmem:[%s105 + $0xa8] sm:$0xf] %v190
                %v192 = vld [vmem:[%s104 + $0x12c] sm:$0xf]
                %193 = vst [vmem:[%s105 + $0xac] sm:$0xf] %v192
                %v194 = vld [vmem:[%s104 + $0x130] sm:$0xf]
                %195 = vst [vmem:[%s105 + $0xb0] sm:$0xf] %v194
                %v196 = vld [vmem:[%s104 + $0x134] sm:$0xf]
                %197 = vst [vmem:[%s105 + $0xb4] sm:$0xf] %v196
                %v198 = vld [vmem:[%s104 + $0x138] sm:$0xf]
                %199 = vst [vmem:[%s105 + $0xb8] sm:$0xf] %v198
                %v200 = vld [vmem:[%s104 + $0x13c] sm:$0xf]
                %201 = vst [vmem:[%s105 + $0xbc] sm:$0xf] %v200
                %v202 = vld [vmem:[%s104 + $0x140] sm:$0xf]
                %203 = vst [vmem:[%s105 + $0xc0] sm:$0xf] %v202
                %v204 = vld [vmem:[%s104 + $0x144] sm:$0xf]
                %205 = vst [vmem:[%s105 + $0xc4] sm:$0xf] %v204
                %v206 = vld [vmem:[%s104 + $0x148] sm:$0xf]
                %207 = vst [vmem:[%s105 + $0xc8] sm:$0xf] %v206
                %v208 = vld [vmem:[%s104 + $0x14c] sm:$0xf]
                %209 = vst [vmem:[%s105 + $0xcc] sm:$0xf] %v208
                %v210 = vld [vmem:[%s104 + $0x150] sm:$0xf]
                %211 = vst [vmem:[%s105 + $0xd0] sm:$0xf] %v210
                %v212 = vld [vmem:[%s104 + $0x154] sm:$0xf]
                %213 = vst [vmem:[%s105 + $0xd4] sm:$0xf] %v212
                %v214 = vld [vmem:[%s104 + $0x158] sm:$0xf]
                %215 = vst [vmem:[%s105 + $0xd8] sm:$0xf] %v214
                %v216 = vld [vmem:[%s104 + $0x15c] sm:$0xf]
                %217 = vst [vmem:[%s105 + $0xdc] sm:$0xf] %v216
                %v218 = vld [vmem:[%s104 + $0x160] sm:$0xf]
                %219 = vst [vmem:[%s105 + $0xe0] sm:$0xf] %v218
                %v220 = vld [vmem:[%s104 + $0x164] sm:$0xf]
                %221 = vst [vmem:[%s105 + $0xe4] sm:$0xf] %v220
                %v222 = vld [vmem:[%s104 + $0x168] sm:$0xf]
                %223 = vst [vmem:[%s105 + $0xe8] sm:$0xf] %v222
                %v224 = vld [vmem:[%s104 + $0x16c] sm:$0xf]
                %225 = vst [vmem:[%s105 + $0xec] sm:$0xf] %v224
                %v226 = vld [vmem:[%s104 + $0x170] sm:$0xf]
                %227 = vst [vmem:[%s105 + $0xf0] sm:$0xf] %v226
                %v228 = vld [vmem:[%s104 + $0x174] sm:$0xf]
                %229 = vst [vmem:[%s105 + $0xf4] sm:$0xf] %v228
                %v230 = vld [vmem:[%s104 + $0x178] sm:$0xf]
                %231 = vst [vmem:[%s105 + $0xf8] sm:$0xf] %v230
                %v232 = vld [vmem:[%s104 + $0x17c] sm:$0xf]
                %233 = vst [vmem:[%s105 + $0xfc] sm:$0xf] %v232
                %v234 = vld [vmem:[%s104 + $0x200] sm:$0xf]
                %235 = vst [vmem:[%s105 + $0x100] sm:$0xf] %v234
                %v236 = vld [vmem:[%s104 + $0x204] sm:$0xf]
                %237 = vst [vmem:[%s105 + $0x104] sm:$0xf] %v236
                %v238 = vld [vmem:[%s104 + $0x208] sm:$0xf]
                %239 = vst [vmem:[%s105 + $0x108] sm:$0xf] %v238
                %v240 = vld [vmem:[%s104 + $0x20c] sm:$0xf]
                %241 = vst [vmem:[%s105 + $0x10c] sm:$0xf] %v240
                %v242 = vld [vmem:[%s104 + $0x210] sm:$0xf]
                %243 = vst [vmem:[%s105 + $0x110] sm:$0xf] %v242
                %v244 = vld [vmem:[%s104 + $0x214] sm:$0xf]
                %245 = vst [vmem:[%s105 + $0x114] sm:$0xf] %v244
                %v246 = vld [vmem:[%s104 + $0x218] sm:$0xf]
                %247 = vst [vmem:[%s105 + $0x118] sm:$0xf] %v246
                %v248 = vld [vmem:[%s104 + $0x21c] sm:$0xf]
                %249 = vst [vmem:[%s105 + $0x11c] sm:$0xf] %v248
                %v250 = vld [vmem:[%s104 + $0x220] sm:$0xf]
                %251 = vst [vmem:[%s105 + $0x120] sm:$0xf] %v250
                %v252 = vld [vmem:[%s104 + $0x224] sm:$0xf]
                %253 = vst [vmem:[%s105 + $0x124] sm:$0xf] %v252
                %v254 = vld [vmem:[%s104 + $0x228] sm:$0xf]
                %255 = vst [vmem:[%s105 + $0x128] sm:$0xf] %v254
                %v256 = vld [vmem:[%s104 + $0x22c] sm:$0xf]
                %257 = vst [vmem:[%s105 + $0x12c] sm:$0xf] %v256
                %v258 = vld [vmem:[%s104 + $0x230] sm:$0xf]
                %259 = vst [vmem:[%s105 + $0x130] sm:$0xf] %v258
                %v260 = vld [vmem:[%s104 + $0x234] sm:$0xf]
                %261 = vst [vmem:[%s105 + $0x134] sm:$0xf] %v260
                %v262 = vld [vmem:[%s104 + $0x238] sm:$0xf]
                %263 = vst [vmem:[%s105 + $0x138] sm:$0xf] %v262
                %v264 = vld [vmem:[%s104 + $0x23c] sm:$0xf]
                %265 = vst [vmem:[%s105 + $0x13c] sm:$0xf] %v264
                %v266 = vld [vmem:[%s104 + $0x240] sm:$0xf]
                %267 = vst [vmem:[%s105 + $0x140] sm:$0xf] %v266
                %v268 = vld [vmem:[%s104 + $0x244] sm:$0xf]
                %269 = vst [vmem:[%s105 + $0x144] sm:$0xf] %v268
                %v270 = vld [vmem:[%s104 + $0x248] sm:$0xf]
                %271 = vst [vmem:[%s105 + $0x148] sm:$0xf] %v270
                %v272 = vld [vmem:[%s104 + $0x24c] sm:$0xf]
                %273 = vst [vmem:[%s105 + $0x14c] sm:$0xf] %v272
                %v274 = vld [vmem:[%s104 + $0x250] sm:$0xf]
                %275 = vst [vmem:[%s105 + $0x150] sm:$0xf] %v274
                %v276 = vld [vmem:[%s104 + $0x254] sm:$0xf]
                %277 = vst [vmem:[%s105 + $0x154] sm:$0xf] %v276
                %v278 = vld [vmem:[%s104 + $0x258] sm:$0xf]
                %279 = vst [vmem:[%s105 + $0x158] sm:$0xf] %v278
                %v280 = vld [vmem:[%s104 + $0x25c] sm:$0xf]
                %281 = vst [vmem:[%s105 + $0x15c] sm:$0xf] %v280
                %v282 = vld [vmem:[%s104 + $0x260] sm:$0xf]
                %283 = vst [vmem:[%s105 + $0x160] sm:$0xf] %v282
                %v284 = vld [vmem:[%s104 + $0x264] sm:$0xf]
                %285 = vst [vmem:[%s105 + $0x164] sm:$0xf] %v284
                %v286 = vld [vmem:[%s104 + $0x268] sm:$0xf]
                %287 = vst [vmem:[%s105 + $0x168] sm:$0xf] %v286
                %v288 = vld [vmem:[%s104 + $0x26c] sm:$0xf]
                %289 = vst [vmem:[%s105 + $0x16c] sm:$0xf] %v288
                %v290 = vld [vmem:[%s104 + $0x270] sm:$0xf]
                %291 = vst [vmem:[%s105 + $0x170] sm:$0xf] %v290
                %v292 = vld [vmem:[%s104 + $0x274] sm:$0xf]
                %293 = vst [vmem:[%s105 + $0x174] sm:$0xf] %v292
                %v294 = vld [vmem:[%s104 + $0x278] sm:$0xf]
                %295 = vst [vmem:[%s105 + $0x178] sm:$0xf] %v294
                %v296 = vld [vmem:[%s104 + $0x27c] sm:$0xf]
                %297 = vst [vmem:[%s105 + $0x17c] sm:$0xf] %v296
                %v298 = vld [vmem:[%s104 + $0x300] sm:$0xf]
                %299 = vst [vmem:[%s105 + $0x180] sm:$0xf] %v298
                %v300 = vld [vmem:[%s104 + $0x304] sm:$0xf]
                %301 = vst [vmem:[%s105 + $0x184] sm:$0xf] %v300
                %v302 = vld [vmem:[%s104 + $0x308] sm:$0xf]
                %303 = vst [vmem:[%s105 + $0x188] sm:$0xf] %v302
                %v304 = vld [vmem:[%s104 + $0x30c] sm:$0xf]
                %305 = vst [vmem:[%s105 + $0x18c] sm:$0xf] %v304
                %v306 = vld [vmem:[%s104 + $0x310] sm:$0xf]
                %307 = vst [vmem:[%s105 + $0x190] sm:$0xf] %v306
                %v308 = vld [vmem:[%s104 + $0x314] sm:$0xf]
                %309 = vst [vmem:[%s105 + $0x194] sm:$0xf] %v308
                %v310 = vld [vmem:[%s104 + $0x318] sm:$0xf]
                %311 = vst [vmem:[%s105 + $0x198] sm:$0xf] %v310
                %v312 = vld [vmem:[%s104 + $0x31c] sm:$0xf]
                %313 = vst [vmem:[%s105 + $0x19c] sm:$0xf] %v312
                %v314 = vld [vmem:[%s104 + $0x320] sm:$0xf]
                %315 = vst [vmem:[%s105 + $0x1a0] sm:$0xf] %v314
                %v316 = vld [vmem:[%s104 + $0x324] sm:$0xf]
                %317 = vst [vmem:[%s105 + $0x1a4] sm:$0xf] %v316
                %v318 = vld [vmem:[%s104 + $0x328] sm:$0xf]
                %319 = vst [vmem:[%s105 + $0x1a8] sm:$0xf] %v318
                %v320 = vld [vmem:[%s104 + $0x32c] sm:$0xf]
                %321 = vst [vmem:[%s105 + $0x1ac] sm:$0xf] %v320
                %v322 = vld [vmem:[%s104 + $0x330] sm:$0xf]
                %323 = vst [vmem:[%s105 + $0x1b0] sm:$0xf] %v322
                %v324 = vld [vmem:[%s104 + $0x334] sm:$0xf]
                %325 = vst [vmem:[%s105 + $0x1b4] sm:$0xf] %v324
                %v326 = vld [vmem:[%s104 + $0x338] sm:$0xf]
                %327 = vst [vmem:[%s105 + $0x1b8] sm:$0xf] %v326
                %v328 = vld [vmem:[%s104 + $0x33c] sm:$0xf]
                %329 = vst [vmem:[%s105 + $0x1bc] sm:$0xf] %v328
                %v330 = vld [vmem:[%s104 + $0x340] sm:$0xf]
                %331 = vst [vmem:[%s105 + $0x1c0] sm:$0xf] %v330
                %v332 = vld [vmem:[%s104 + $0x344] sm:$0xf]
                %333 = vst [vmem:[%s105 + $0x1c4] sm:$0xf] %v332
                %v334 = vld [vmem:[%s104 + $0x348] sm:$0xf]
                %335 = vst [vmem:[%s105 + $0x1c8] sm:$0xf] %v334
                %v336 = vld [vmem:[%s104 + $0x34c] sm:$0xf]
                %337 = vst [vmem:[%s105 + $0x1cc] sm:$0xf] %v336
                %v338 = vld [vmem:[%s104 + $0x350] sm:$0xf]
                %339 = vst [vmem:[%s105 + $0x1d0] sm:$0xf] %v338
                %v340 = vld [vmem:[%s104 + $0x354] sm:$0xf]
                %341 = vst [vmem:[%s105 + $0x1d4] sm:$0xf] %v340
                %v342 = vld [vmem:[%s104 + $0x358] sm:$0xf]
                %343 = vst [vmem:[%s105 + $0x1d8] sm:$0xf] %v342
                %v344 = vld [vmem:[%s104 + $0x35c] sm:$0xf]
                %345 = vst [vmem:[%s105 + $0x1dc] sm:$0xf] %v344
                %v346 = vld [vmem:[%s104 + $0x360] sm:$0xf]
                %347 = vst [vmem:[%s105 + $0x1e0] sm:$0xf] %v346
                %v348 = vld [vmem:[%s104 + $0x364] sm:$0xf]
                %349 = vst [vmem:[%s105 + $0x1e4] sm:$0xf] %v348
                %v350 = vld [vmem:[%s104 + $0x368] sm:$0xf]
                %351 = vst [vmem:[%s105 + $0x1e8] sm:$0xf] %v350
                %v352 = vld [vmem:[%s104 + $0x36c] sm:$0xf]
                %353 = vst [vmem:[%s105 + $0x1ec] sm:$0xf] %v352
                %v354 = vld [vmem:[%s104 + $0x370] sm:$0xf]
                %355 = vst [vmem:[%s105 + $0x1f0] sm:$0xf] %v354
                %v356 = vld [vmem:[%s104 + $0x374] sm:$0xf]
                %357 = vst [vmem:[%s105 + $0x1f4] sm:$0xf] %v356
                %v358 = vld [vmem:[%s104 + $0x378] sm:$0xf]
                %359 = vst [vmem:[%s105 + $0x1f8] sm:$0xf] %v358
                %v360 = vld [vmem:[%s104 + $0x37c] sm:$0xf]
                %361 = vst [vmem:[%s105 + $0x1fc] sm:$0xf] %v360
                %v362 = vld [vmem:[%s104 + $0x400] sm:$0xf]
                %363 = vst [vmem:[%s105 + $0x200] sm:$0xf] %v362
                %v364 = vld [vmem:[%s104 + $0x404] sm:$0xf]
                %365 = vst [vmem:[%s105 + $0x204] sm:$0xf] %v364
                %v366 = vld [vmem:[%s104 + $0x408] sm:$0xf]
                %367 = vst [vmem:[%s105 + $0x208] sm:$0xf] %v366
                %v368 = vld [vmem:[%s104 + $0x40c] sm:$0xf]
                %369 = vst [vmem:[%s105 + $0x20c] sm:$0xf] %v368
                %v370 = vld [vmem:[%s104 + $0x410] sm:$0xf]
                %371 = vst [vmem:[%s105 + $0x210] sm:$0xf] %v370
                %v372 = vld [vmem:[%s104 + $0x414] sm:$0xf]
                %373 = vst [vmem:[%s105 + $0x214] sm:$0xf] %v372
                %v374 = vld [vmem:[%s104 + $0x418] sm:$0xf]
                %375 = vst [vmem:[%s105 + $0x218] sm:$0xf] %v374
                %v376 = vld [vmem:[%s104 + $0x41c] sm:$0xf]
                %377 = vst [vmem:[%s105 + $0x21c] sm:$0xf] %v376
                %v378 = vld [vmem:[%s104 + $0x420] sm:$0xf]
                %379 = vst [vmem:[%s105 + $0x220] sm:$0xf] %v378
                %v380 = vld [vmem:[%s104 + $0x424] sm:$0xf]
                %381 = vst [vmem:[%s105 + $0x224] sm:$0xf] %v380
                %v382 = vld [vmem:[%s104 + $0x428] sm:$0xf]
                %383 = vst [vmem:[%s105 + $0x228] sm:$0xf] %v382
                %v384 = vld [vmem:[%s104 + $0x42c] sm:$0xf]
                %385 = vst [vmem:[%s105 + $0x22c] sm:$0xf] %v384
                %v386 = vld [vmem:[%s104 + $0x430] sm:$0xf]
                %387 = vst [vmem:[%s105 + $0x230] sm:$0xf] %v386
                %v388 = vld [vmem:[%s104 + $0x434] sm:$0xf]
                %389 = vst [vmem:[%s105 + $0x234] sm:$0xf] %v388
                %v390 = vld [vmem:[%s104 + $0x438] sm:$0xf]
                %391 = vst [vmem:[%s105 + $0x238] sm:$0xf] %v390
                %v392 = vld [vmem:[%s104 + $0x43c] sm:$0xf]
                %393 = vst [vmem:[%s105 + $0x23c] sm:$0xf] %v392
                %v394 = vld [vmem:[%s104 + $0x440] sm:$0xf]
                %395 = vst [vmem:[%s105 + $0x240] sm:$0xf] %v394
                %v396 = vld [vmem:[%s104 + $0x444] sm:$0xf]
                %397 = vst [vmem:[%s105 + $0x244] sm:$0xf] %v396
                %v398 = vld [vmem:[%s104 + $0x448] sm:$0xf]
                %399 = vst [vmem:[%s105 + $0x248] sm:$0xf] %v398
                %v400 = vld [vmem:[%s104 + $0x44c] sm:$0xf]
                %401 = vst [vmem:[%s105 + $0x24c] sm:$0xf] %v400
                %v402 = vld [vmem:[%s104 + $0x450] sm:$0xf]
                %403 = vst [vmem:[%s105 + $0x250] sm:$0xf] %v402
                %v404 = vld [vmem:[%s104 + $0x454] sm:$0xf]
                %405 = vst [vmem:[%s105 + $0x254] sm:$0xf] %v404
                %v406 = vld [vmem:[%s104 + $0x458] sm:$0xf]
                %407 = vst [vmem:[%s105 + $0x258] sm:$0xf] %v406
                %v408 = vld [vmem:[%s104 + $0x45c] sm:$0xf]
                %409 = vst [vmem:[%s105 + $0x25c] sm:$0xf] %v408
                %v410 = vld [vmem:[%s104 + $0x460] sm:$0xf]
                %411 = vst [vmem:[%s105 + $0x260] sm:$0xf] %v410
                %v412 = vld [vmem:[%s104 + $0x464] sm:$0xf]
                %413 = vst [vmem:[%s105 + $0x264] sm:$0xf] %v412
                %v414 = vld [vmem:[%s104 + $0x468] sm:$0xf]
                %415 = vst [vmem:[%s105 + $0x268] sm:$0xf] %v414
                %v416 = vld [vmem:[%s104 + $0x46c] sm:$0xf]
                %417 = vst [vmem:[%s105 + $0x26c] sm:$0xf] %v416
                %v418 = vld [vmem:[%s104 + $0x470] sm:$0xf]
                %419 = vst [vmem:[%s105 + $0x270] sm:$0xf] %v418
                %v420 = vld [vmem:[%s104 + $0x474] sm:$0xf]
                %421 = vst [vmem:[%s105 + $0x274] sm:$0xf] %v420
                %v422 = vld [vmem:[%s104 + $0x478] sm:$0xf]
                %423 = vst [vmem:[%s105 + $0x278] sm:$0xf] %v422
                %v424 = vld [vmem:[%s104 + $0x47c] sm:$0xf]
                %425 = vst [vmem:[%s105 + $0x27c] sm:$0xf] %v424
                %v426 = vld [vmem:[%s104 + $0x500] sm:$0xf]
                %427 = vst [vmem:[%s105 + $0x280] sm:$0xf] %v426
                %v428 = vld [vmem:[%s104 + $0x504] sm:$0xf]
                %429 = vst [vmem:[%s105 + $0x284] sm:$0xf] %v428
                %v430 = vld [vmem:[%s104 + $0x508] sm:$0xf]
                %431 = vst [vmem:[%s105 + $0x288] sm:$0xf] %v430
                %v432 = vld [vmem:[%s104 + $0x50c] sm:$0xf]
                %433 = vst [vmem:[%s105 + $0x28c] sm:$0xf] %v432
                %v434 = vld [vmem:[%s104 + $0x510] sm:$0xf]
                %435 = vst [vmem:[%s105 + $0x290] sm:$0xf] %v434
                %v436 = vld [vmem:[%s104 + $0x514] sm:$0xf]
                %437 = vst [vmem:[%s105 + $0x294] sm:$0xf] %v436
                %v438 = vld [vmem:[%s104 + $0x518] sm:$0xf]
                %439 = vst [vmem:[%s105 + $0x298] sm:$0xf] %v438
                %v440 = vld [vmem:[%s104 + $0x51c] sm:$0xf]
                %441 = vst [vmem:[%s105 + $0x29c] sm:$0xf] %v440
                %v442 = vld [vmem:[%s104 + $0x520] sm:$0xf]
                %443 = vst [vmem:[%s105 + $0x2a0] sm:$0xf] %v442
                %v444 = vld [vmem:[%s104 + $0x524] sm:$0xf]
                %445 = vst [vmem:[%s105 + $0x2a4] sm:$0xf] %v444
                %v446 = vld [vmem:[%s104 + $0x528] sm:$0xf]
                %447 = vst [vmem:[%s105 + $0x2a8] sm:$0xf] %v446
                %v448 = vld [vmem:[%s104 + $0x52c] sm:$0xf]
                %449 = vst [vmem:[%s105 + $0x2ac] sm:$0xf] %v448
                %v450 = vld [vmem:[%s104 + $0x530] sm:$0xf]
                %451 = vst [vmem:[%s105 + $0x2b0] sm:$0xf] %v450
                %v452 = vld [vmem:[%s104 + $0x534] sm:$0xf]
                %453 = vst [vmem:[%s105 + $0x2b4] sm:$0xf] %v452
                %v454 = vld [vmem:[%s104 + $0x538] sm:$0xf]
                %455 = vst [vmem:[%s105 + $0x2b8] sm:$0xf] %v454
                %v456 = vld [vmem:[%s104 + $0x53c] sm:$0xf]
                %457 = vst [vmem:[%s105 + $0x2bc] sm:$0xf] %v456
                %v458 = vld [vmem:[%s104 + $0x540] sm:$0xf]
                %459 = vst [vmem:[%s105 + $0x2c0] sm:$0xf] %v458
                %v460 = vld [vmem:[%s104 + $0x544] sm:$0xf]
                %461 = vst [vmem:[%s105 + $0x2c4] sm:$0xf] %v460
                %v462 = vld [vmem:[%s104 + $0x548] sm:$0xf]
                %463 = vst [vmem:[%s105 + $0x2c8] sm:$0xf] %v462
                %v464 = vld [vmem:[%s104 + $0x54c] sm:$0xf]
                %465 = vst [vmem:[%s105 + $0x2cc] sm:$0xf] %v464
                %v466 = vld [vmem:[%s104 + $0x550] sm:$0xf]
                %467 = vst [vmem:[%s105 + $0x2d0] sm:$0xf] %v466
                %v468 = vld [vmem:[%s104 + $0x554] sm:$0xf]
                %469 = vst [vmem:[%s105 + $0x2d4] sm:$0xf] %v468
                %v470 = vld [vmem:[%s104 + $0x558] sm:$0xf]
                %471 = vst [vmem:[%s105 + $0x2d8] sm:$0xf] %v470
                %v472 = vld [vmem:[%s104 + $0x55c] sm:$0xf]
                %473 = vst [vmem:[%s105 + $0x2dc] sm:$0xf] %v472
                %v474 = vld [vmem:[%s104 + $0x560] sm:$0xf]
                %475 = vst [vmem:[%s105 + $0x2e0] sm:$0xf] %v474
                %v476 = vld [vmem:[%s104 + $0x564] sm:$0xf]
                %477 = vst [vmem:[%s105 + $0x2e4] sm:$0xf] %v476
                %v478 = vld [vmem:[%s104 + $0x568] sm:$0xf]
                %479 = vst [vmem:[%s105 + $0x2e8] sm:$0xf] %v478
                %v480 = vld [vmem:[%s104 + $0x56c] sm:$0xf]
                %481 = vst [vmem:[%s105 + $0x2ec] sm:$0xf] %v480
                %v482 = vld [vmem:[%s104 + $0x570] sm:$0xf]
                %483 = vst [vmem:[%s105 + $0x2f0] sm:$0xf] %v482
                %v484 = vld [vmem:[%s104 + $0x574] sm:$0xf]
                %485 = vst [vmem:[%s105 + $0x2f4] sm:$0xf] %v484
                %v486 = vld [vmem:[%s104 + $0x578] sm:$0xf]
                %487 = vst [vmem:[%s105 + $0x2f8] sm:$0xf] %v486
                %v488 = vld [vmem:[%s104 + $0x57c] sm:$0xf]
                %489 = vst [vmem:[%s105 + $0x2fc] sm:$0xf] %v488
                %v490 = vld [vmem:[%s104 + $0x600] sm:$0xf]
                %491 = vst [vmem:[%s105 + $0x300] sm:$0xf] %v490
                %v492 = vld [vmem:[%s104 + $0x604] sm:$0xf]
                %493 = vst [vmem:[%s105 + $0x304] sm:$0xf] %v492
                %v494 = vld [vmem:[%s104 + $0x608] sm:$0xf]
                %495 = vst [vmem:[%s105 + $0x308] sm:$0xf] %v494
                %v496 = vld [vmem:[%s104 + $0x60c] sm:$0xf]
                %497 = vst [vmem:[%s105 + $0x30c] sm:$0xf] %v496
                %v498 = vld [vmem:[%s104 + $0x610] sm:$0xf]
                %499 = vst [vmem:[%s105 + $0x310] sm:$0xf] %v498
                %v500 = vld [vmem:[%s104 + $0x614] sm:$0xf]
                %501 = vst [vmem:[%s105 + $0x314] sm:$0xf] %v500
                %v502 = vld [vmem:[%s104 + $0x618] sm:$0xf]
                %503 = vst [vmem:[%s105 + $0x318] sm:$0xf] %v502
                %v504 = vld [vmem:[%s104 + $0x61c] sm:$0xf]
                %505 = vst [vmem:[%s105 + $0x31c] sm:$0xf] %v504
                %v506 = vld [vmem:[%s104 + $0x620] sm:$0xf]
                %507 = vst [vmem:[%s105 + $0x320] sm:$0xf] %v506
                %v508 = vld [vmem:[%s104 + $0x624] sm:$0xf]
                %509 = vst [vmem:[%s105 + $0x324] sm:$0xf] %v508
                %v510 = vld [vmem:[%s104 + $0x628] sm:$0xf]
                %511 = vst [vmem:[%s105 + $0x328] sm:$0xf] %v510
                %v512 = vld [vmem:[%s104 + $0x62c] sm:$0xf]
                %513 = vst [vmem:[%s105 + $0x32c] sm:$0xf] %v512
                %v514 = vld [vmem:[%s104 + $0x630] sm:$0xf]
                %515 = vst [vmem:[%s105 + $0x330] sm:$0xf] %v514
                %v516 = vld [vmem:[%s104 + $0x634] sm:$0xf]
                %517 = vst [vmem:[%s105 + $0x334] sm:$0xf] %v516
                %v518 = vld [vmem:[%s104 + $0x638] sm:$0xf]
                %519 = vst [vmem:[%s105 + $0x338] sm:$0xf] %v518
                %v520 = vld [vmem:[%s104 + $0x63c] sm:$0xf]
                %521 = vst [vmem:[%s105 + $0x33c] sm:$0xf] %v520
                %v522 = vld [vmem:[%s104 + $0x640] sm:$0xf]
                %523 = vst [vmem:[%s105 + $0x340] sm:$0xf] %v522
                %v524 = vld [vmem:[%s104 + $0x644] sm:$0xf]
                %525 = vst [vmem:[%s105 + $0x344] sm:$0xf] %v524
                %v526 = vld [vmem:[%s104 + $0x648] sm:$0xf]
                %527 = vst [vmem:[%s105 + $0x348] sm:$0xf] %v526
                %v528 = vld [vmem:[%s104 + $0x64c] sm:$0xf]
                %529 = vst [vmem:[%s105 + $0x34c] sm:$0xf] %v528
                %v530 = vld [vmem:[%s104 + $0x650] sm:$0xf]
                %531 = vst [vmem:[%s105 + $0x350] sm:$0xf] %v530
                %v532 = vld [vmem:[%s104 + $0x654] sm:$0xf]
                %533 = vst [vmem:[%s105 + $0x354] sm:$0xf] %v532
                %v534 = vld [vmem:[%s104 + $0x658] sm:$0xf]
                %535 = vst [vmem:[%s105 + $0x358] sm:$0xf] %v534
                %v536 = vld [vmem:[%s104 + $0x65c] sm:$0xf]
                %537 = vst [vmem:[%s105 + $0x35c] sm:$0xf] %v536
                %v538 = vld [vmem:[%s104 + $0x660] sm:$0xf]
                %539 = vst [vmem:[%s105 + $0x360] sm:$0xf] %v538
                %v540 = vld [vmem:[%s104 + $0x664] sm:$0xf]
                %541 = vst [vmem:[%s105 + $0x364] sm:$0xf] %v540
                %v542 = vld [vmem:[%s104 + $0x668] sm:$0xf]
                %543 = vst [vmem:[%s105 + $0x368] sm:$0xf] %v542
                %v544 = vld [vmem:[%s104 + $0x66c] sm:$0xf]
                %545 = vst [vmem:[%s105 + $0x36c] sm:$0xf] %v544
                %v546 = vld [vmem:[%s104 + $0x670] sm:$0xf]
                %547 = vst [vmem:[%s105 + $0x370] sm:$0xf] %v546
                %v548 = vld [vmem:[%s104 + $0x674] sm:$0xf]
                %549 = vst [vmem:[%s105 + $0x374] sm:$0xf] %v548
                %v550 = vld [vmem:[%s104 + $0x678] sm:$0xf]
                %551 = vst [vmem:[%s105 + $0x378] sm:$0xf] %v550
                %v552 = vld [vmem:[%s104 + $0x67c] sm:$0xf]
                %553 = vst [vmem:[%s105 + $0x37c] sm:$0xf] %v552
                %v554 = vld [vmem:[%s104 + $0x700] sm:$0xf]
                %555 = vst [vmem:[%s105 + $0x380] sm:$0xf] %v554
                %v556 = vld [vmem:[%s104 + $0x704] sm:$0xf]
                %557 = vst [vmem:[%s105 + $0x384] sm:$0xf] %v556
                %v558 = vld [vmem:[%s104 + $0x708] sm:$0xf]
                %559 = vst [vmem:[%s105 + $0x388] sm:$0xf] %v558
                %v560 = vld [vmem:[%s104 + $0x70c] sm:$0xf]
                %561 = vst [vmem:[%s105 + $0x38c] sm:$0xf] %v560
                %v562 = vld [vmem:[%s104 + $0x710] sm:$0xf]
                %563 = vst [vmem:[%s105 + $0x390] sm:$0xf] %v562
                %v564 = vld [vmem:[%s104 + $0x714] sm:$0xf]
                %565 = vst [vmem:[%s105 + $0x394] sm:$0xf] %v564
                %v566 = vld [vmem:[%s104 + $0x718] sm:$0xf]
                %567 = vst [vmem:[%s105 + $0x398] sm:$0xf] %v566
                %v568 = vld [vmem:[%s104 + $0x71c] sm:$0xf]
                %569 = vst [vmem:[%s105 + $0x39c] sm:$0xf] %v568
                %v570 = vld [vmem:[%s104 + $0x720] sm:$0xf]
                %571 = vst [vmem:[%s105 + $0x3a0] sm:$0xf] %v570
                %v572 = vld [vmem:[%s104 + $0x724] sm:$0xf]
                %573 = vst [vmem:[%s105 + $0x3a4] sm:$0xf] %v572
                %v574 = vld [vmem:[%s104 + $0x728] sm:$0xf]
                %575 = vst [vmem:[%s105 + $0x3a8] sm:$0xf] %v574
                %v576 = vld [vmem:[%s104 + $0x72c] sm:$0xf]
                %577 = vst [vmem:[%s105 + $0x3ac] sm:$0xf] %v576
                %v578 = vld [vmem:[%s104 + $0x730] sm:$0xf]
                %579 = vst [vmem:[%s105 + $0x3b0] sm:$0xf] %v578
                %v580 = vld [vmem:[%s104 + $0x734] sm:$0xf]
                %581 = vst [vmem:[%s105 + $0x3b4] sm:$0xf] %v580
                %v582 = vld [vmem:[%s104 + $0x738] sm:$0xf]
                %583 = vst [vmem:[%s105 + $0x3b8] sm:$0xf] %v582
                %v584 = vld [vmem:[%s104 + $0x73c] sm:$0xf]
                %585 = vst [vmem:[%s105 + $0x3bc] sm:$0xf] %v584
                %v586 = vld [vmem:[%s104 + $0x740] sm:$0xf]
                %587 = vst [vmem:[%s105 + $0x3c0] sm:$0xf] %v586
                %v588 = vld [vmem:[%s104 + $0x744] sm:$0xf]
                %589 = vst [vmem:[%s105 + $0x3c4] sm:$0xf] %v588
                %v590 = vld [vmem:[%s104 + $0x748] sm:$0xf]
                %591 = vst [vmem:[%s105 + $0x3c8] sm:$0xf] %v590
                %v592 = vld [vmem:[%s104 + $0x74c] sm:$0xf]
                %593 = vst [vmem:[%s105 + $0x3cc] sm:$0xf] %v592
                %v594 = vld [vmem:[%s104 + $0x750] sm:$0xf]
                %595 = vst [vmem:[%s105 + $0x3d0] sm:$0xf] %v594
                %v596 = vld [vmem:[%s104 + $0x754] sm:$0xf]
                %597 = vst [vmem:[%s105 + $0x3d4] sm:$0xf] %v596
                %v598 = vld [vmem:[%s104 + $0x758] sm:$0xf]
                %599 = vst [vmem:[%s105 + $0x3d8] sm:$0xf] %v598
                %v600 = vld [vmem:[%s104 + $0x75c] sm:$0xf]
                %601 = vst [vmem:[%s105 + $0x3dc] sm:$0xf] %v600
                %v602 = vld [vmem:[%s104 + $0x760] sm:$0xf]
                %603 = vst [vmem:[%s105 + $0x3e0] sm:$0xf] %v602
                %v604 = vld [vmem:[%s104 + $0x764] sm:$0xf]
                %605 = vst [vmem:[%s105 + $0x3e4] sm:$0xf] %v604
                %v606 = vld [vmem:[%s104 + $0x768] sm:$0xf]
                %607 = vst [vmem:[%s105 + $0x3e8] sm:$0xf] %v606
                %v608 = vld [vmem:[%s104 + $0x76c] sm:$0xf]
                %609 = vst [vmem:[%s105 + $0x3ec] sm:$0xf] %v608
                %v610 = vld [vmem:[%s104 + $0x770] sm:$0xf]
                %611 = vst [vmem:[%s105 + $0x3f0] sm:$0xf] %v610
                %v612 = vld [vmem:[%s104 + $0x774] sm:$0xf]
                %613 = vst [vmem:[%s105 + $0x3f4] sm:$0xf] %v612
                %v614 = vld [vmem:[%s104 + $0x778] sm:$0xf]
                %615 = vst [vmem:[%s105 + $0x3f8] sm:$0xf] %v614
                %v616 = vld [vmem:[%s104 + $0x77c] sm:$0xf]
                %617 = vst [vmem:[%s105 + $0x3fc] sm:$0xf] %v616
                %v618 = vld [vmem:[%s104 + $0x800] sm:$0xf]
                %619 = vst [vmem:[%s105 + $0x400] sm:$0xf] %v618
                %v620 = vld [vmem:[%s104 + $0x804] sm:$0xf]
                %621 = vst [vmem:[%s105 + $0x404] sm:$0xf] %v620
                %v622 = vld [vmem:[%s104 + $0x808] sm:$0xf]
                %623 = vst [vmem:[%s105 + $0x408] sm:$0xf] %v622
                %v624 = vld [vmem:[%s104 + $0x80c] sm:$0xf]
                %625 = vst [vmem:[%s105 + $0x40c] sm:$0xf] %v624
                %v626 = vld [vmem:[%s104 + $0x810] sm:$0xf]
                %627 = vst [vmem:[%s105 + $0x410] sm:$0xf] %v626
                %v628 = vld [vmem:[%s104 + $0x814] sm:$0xf]
                %629 = vst [vmem:[%s105 + $0x414] sm:$0xf] %v628
                %v630 = vld [vmem:[%s104 + $0x818] sm:$0xf]
                %631 = vst [vmem:[%s105 + $0x418] sm:$0xf] %v630
                %v632 = vld [vmem:[%s104 + $0x81c] sm:$0xf]
                %633 = vst [vmem:[%s105 + $0x41c] sm:$0xf] %v632
                %v634 = vld [vmem:[%s104 + $0x820] sm:$0xf]
                %635 = vst [vmem:[%s105 + $0x420] sm:$0xf] %v634
                %v636 = vld [vmem:[%s104 + $0x824] sm:$0xf]
                %637 = vst [vmem:[%s105 + $0x424] sm:$0xf] %v636
                %v638 = vld [vmem:[%s104 + $0x828] sm:$0xf]
                %639 = vst [vmem:[%s105 + $0x428] sm:$0xf] %v638
                %v640 = vld [vmem:[%s104 + $0x82c] sm:$0xf]
                %641 = vst [vmem:[%s105 + $0x42c] sm:$0xf] %v640
                %v642 = vld [vmem:[%s104 + $0x830] sm:$0xf]
                %643 = vst [vmem:[%s105 + $0x430] sm:$0xf] %v642
                %v644 = vld [vmem:[%s104 + $0x834] sm:$0xf]
                %645 = vst [vmem:[%s105 + $0x434] sm:$0xf] %v644
                %v646 = vld [vmem:[%s104 + $0x838] sm:$0xf]
                %647 = vst [vmem:[%s105 + $0x438] sm:$0xf] %v646
                %v648 = vld [vmem:[%s104 + $0x83c] sm:$0xf]
                %649 = vst [vmem:[%s105 + $0x43c] sm:$0xf] %v648
                %v650 = vld [vmem:[%s104 + $0x840] sm:$0xf]
                %651 = vst [vmem:[%s105 + $0x440] sm:$0xf] %v650
                %v652 = vld [vmem:[%s104 + $0x844] sm:$0xf]
                %653 = vst [vmem:[%s105 + $0x444] sm:$0xf] %v652
                %v654 = vld [vmem:[%s104 + $0x848] sm:$0xf]
                %655 = vst [vmem:[%s105 + $0x448] sm:$0xf] %v654
                %v656 = vld [vmem:[%s104 + $0x84c] sm:$0xf]
                %657 = vst [vmem:[%s105 + $0x44c] sm:$0xf] %v656
                %v658 = vld [vmem:[%s104 + $0x850] sm:$0xf]
                %659 = vst [vmem:[%s105 + $0x450] sm:$0xf] %v658
                %v660 = vld [vmem:[%s104 + $0x854] sm:$0xf]
                %661 = vst [vmem:[%s105 + $0x454] sm:$0xf] %v660
                %v662 = vld [vmem:[%s104 + $0x858] sm:$0xf]
                %663 = vst [vmem:[%s105 + $0x458] sm:$0xf] %v662
                %v664 = vld [vmem:[%s104 + $0x85c] sm:$0xf]
                %665 = vst [vmem:[%s105 + $0x45c] sm:$0xf] %v664
                %v666 = vld [vmem:[%s104 + $0x860] sm:$0xf]
                %667 = vst [vmem:[%s105 + $0x460] sm:$0xf] %v666
                %v668 = vld [vmem:[%s104 + $0x864] sm:$0xf]
                %669 = vst [vmem:[%s105 + $0x464] sm:$0xf] %v668
                %v670 = vld [vmem:[%s104 + $0x868] sm:$0xf]
                %671 = vst [vmem:[%s105 + $0x468] sm:$0xf] %v670
                %v672 = vld [vmem:[%s104 + $0x86c] sm:$0xf]
                %673 = vst [vmem:[%s105 + $0x46c] sm:$0xf] %v672
                %v674 = vld [vmem:[%s104 + $0x870] sm:$0xf]
                %675 = vst [vmem:[%s105 + $0x470] sm:$0xf] %v674
                %v676 = vld [vmem:[%s104 + $0x874] sm:$0xf]
                %677 = vst [vmem:[%s105 + $0x474] sm:$0xf] %v676
                %v678 = vld [vmem:[%s104 + $0x878] sm:$0xf]
                %679 = vst [vmem:[%s105 + $0x478] sm:$0xf] %v678
                %v680 = vld [vmem:[%s104 + $0x87c] sm:$0xf]
                %681 = vst [vmem:[%s105 + $0x47c] sm:$0xf] %v680
              $region37: #{stem_forward.3} parent=31 // loop_footer
                %s103 = sadd.s32 1, %s99
              $region38: #{stem_forward.3} parent=31 // loop_footer_branch
                %98 = sbr.rel target = $region34
              $region39: #{stem_forward.3} parent=31 // loop_exit
                _
            $region32: #{stem_forward.3} parent=23 // pred_fallthru
              _
          $region24: #{stem_forward.3} parent=19 // pred_fallthru
            _
          %1277 = vnop
        $region20: #{stem_forward.3} parent=15 // pred_fallthru
          _
      $region16: #{stem_forward.3} parent=5 // pred_fallthru
        _
      %p1278 = scmp.le.s32.totalorder 1, %s10
      %p1279 = scmp.lt.s32.totalorder %s10, 3
      %p1280 = pnand %p1278, %p1279
      %p1281 = pneg %p1280
      // Predicated region
      $region58: #{stem_forward.3} parent=5 // pred_check
        _
      $region59: #{stem_forward.3} parent=5 // pred_check_branch
        %1283 = sbr.rel (%p1280) target = $region61
      $region60: #{stem_forward.3} parent=5 // pred_region
        %s1284 = ssub.s32 %s10, 1
        %s1285 = sand.u32 %s23, 1
        %s1286 = sand.u32 %s23, 1
        %s1287 = smul.addr %s1286, 1152
        %s1288 = scalar_lea.vmem [#allocation2], %s1287
        // Predicated region
        $region62: #{stem_forward.3} parent=60 // pred_check
          %p1289 = pneg %p36
        $region63: #{stem_forward.3} parent=60 // pred_check_branch
          %1291 = sbr.rel (%p1289) target = $region65
        $region64: #{stem_forward.3} parent=60 // pred_region
          _
        $region65: #{stem_forward.3} parent=60 // pred_fallthru
          _
        %s1292 = sand.u32 %s23, 1
        %s1293 = sand.u32 %s23, 1
        %s1294 = smul.addr %s1293, 1152
        %s1295 = scalar_lea.vmem [#allocation2], %s1294
        %p1296 = pneg %p36
        %p1297 = pneg %p33
        %p1298 = pneg %p62
        %p1299 = pneg %p59
        %s1300 = sand.u32 %s49, 1
        %s1301 = scalar_lea.sflag [#allocation4], %s1300
        %s1302 = sand.u32 %s49, 1
        %s1303 = smul.addr %s1302, 128
        %s1304 = scalar_lea.vmem [#allocation3], %s1303
        %s1305 = smul.u32 32, %s15
        %s1306 = smul.u32 32, %s15
        %v1307 = vld [vmem:[%s1288] sm:$0xf]
        %v1308 = vld [vmem:[%s1288 + $0x4] sm:$0xf]
        %v1309 = vld [vmem:[%s1288 + $0x8] sm:$0xf]
        %v1310 = vld [vmem:[%s1288 + $0xc] sm:$0xf]
        %v1311 = vld [vmem:[%s1288 + $0x10] sm:$0xf]
        %v1312 = vld [vmem:[%s1288 + $0x14] sm:$0xf]
        %v1313 = vld [vmem:[%s1288 + $0x18] sm:$0xf]
        %v1314 = vld [vmem:[%s1288 + $0x1c] sm:$0xf]
        %v1315 = vld [vmem:[%s1288 + $0x20] sm:$0xf]
        %v1316 = vld [vmem:[%s1288 + $0x24] sm:$0xf]
        %v1317 = vld [vmem:[%s1288 + $0x28] sm:$0xf]
        %v1318 = vld [vmem:[%s1288 + $0x2c] sm:$0xf]
        %v1319 = vld [vmem:[%s1288 + $0x30] sm:$0xf]
        %v1320 = vld [vmem:[%s1288 + $0x34] sm:$0xf]
        %v1321 = vld [vmem:[%s1288 + $0x38] sm:$0xf]
        %v1322 = vld [vmem:[%s1288 + $0x3c] sm:$0xf]
        %v1323 = vld [vmem:[%s1288 + $0x40] sm:$0xf]
        %v1324 = vld [vmem:[%s1288 + $0x44] sm:$0xf]
        %v1325 = vld [vmem:[%s1288 + $0x48] sm:$0xf]
        %v1326 = vld [vmem:[%s1288 + $0x4c] sm:$0xf]
        %v1327 = vld [vmem:[%s1288 + $0x50] sm:$0xf]
        %v1328 = vld [vmem:[%s1288 + $0x54] sm:$0xf]
        %v1329 = vld [vmem:[%s1288 + $0x58] sm:$0xf]
        %v1330 = vld [vmem:[%s1288 + $0x5c] sm:$0xf]
        %v1331 = vld [vmem:[%s1288 + $0x60] sm:$0xf]
        %v1332 = vld [vmem:[%s1288 + $0x64] sm:$0xf]
        %v1333 = vld [vmem:[%s1288 + $0x68] sm:$0xf]
        %v1334 = vld [vmem:[%s1288 + $0x6c] sm:$0xf]
        %v1335 = vld [vmem:[%s1288 + $0x70] sm:$0xf]
        %v1336 = vld [vmem:[%s1288 + $0x74] sm:$0xf]
        %v1337 = vld [vmem:[%s1288 + $0x78] sm:$0xf]
        %v1338 = vld [vmem:[%s1288 + $0x7c] sm:$0xf]
        %s1339 = scalar_lea.vmem %s1288, 128 [#allocation2]
        %v1340 = vld [vmem:[%s1339] sm:$0xf]
        %v1341 = vld [vmem:[%s1339 + $0x4] sm:$0xf]
        %v1342 = vld [vmem:[%s1339 + $0x8] sm:$0xf]
        %v1343 = vld [vmem:[%s1339 + $0xc] sm:$0xf]
        %v1344 = vld [vmem:[%s1339 + $0x10] sm:$0xf]
        %v1345 = vld [vmem:[%s1339 + $0x14] sm:$0xf]
        %v1346 = vld [vmem:[%s1339 + $0x18] sm:$0xf]
        %v1347 = vld [vmem:[%s1339 + $0x1c] sm:$0xf]
        %v1348 = vld [vmem:[%s1339 + $0x20] sm:$0xf]
        %v1349 = vld [vmem:[%s1339 + $0x24] sm:$0xf]
        %v1350 = vld [vmem:[%s1339 + $0x28] sm:$0xf]
        %v1351 = vld [vmem:[%s1339 + $0x2c] sm:$0xf]
        %v1352 = vld [vmem:[%s1339 + $0x30] sm:$0xf]
        %v1353 = vld [vmem:[%s1339 + $0x34] sm:$0xf]
        %v1354 = vld [vmem:[%s1339 + $0x38] sm:$0xf]
        %v1355 = vld [vmem:[%s1339 + $0x3c] sm:$0xf]
        %v1356 = vld [vmem:[%s1339 + $0x40] sm:$0xf]
        %v1357 = vld [vmem:[%s1339 + $0x44] sm:$0xf]
        %v1358 = vld [vmem:[%s1339 + $0x48] sm:$0xf]
        %v1359 = vld [vmem:[%s1339 + $0x4c] sm:$0xf]
        %v1360 = vld [vmem:[%s1339 + $0x50] sm:$0xf]
        %v1361 = vld [vmem:[%s1339 + $0x54] sm:$0xf]
        %v1362 = vld [vmem:[%s1339 + $0x58] sm:$0xf]
        %v1363 = vld [vmem:[%s1339 + $0x5c] sm:$0xf]
        %v1364 = vld [vmem:[%s1339 + $0x60] sm:$0xf]
        %v1365 = vld [vmem:[%s1339 + $0x64] sm:$0xf]
        %v1366 = vld [vmem:[%s1339 + $0x68] sm:$0xf]
        %v1367 = vld [vmem:[%s1339 + $0x6c] sm:$0xf]
        %v1368 = vld [vmem:[%s1339 + $0x70] sm:$0xf]
        %v1369 = vld [vmem:[%s1339 + $0x74] sm:$0xf]
        %v1370 = vld [vmem:[%s1339 + $0x78] sm:$0xf]
        %v1371 = vld [vmem:[%s1339 + $0x7c] sm:$0xf]
        %v1372 = vmax.bf16 %v1307, %v1340
        %v1373 = vmax.bf16 %v1308, %v1341
        %v1374 = vmax.bf16 %v1309, %v1342
        %v1375 = vmax.bf16 %v1310, %v1343
        %v1376 = vmax.bf16 %v1311, %v1344
        %v1377 = vmax.bf16 %v1312, %v1345
        %v1378 = vmax.bf16 %v1313, %v1346
        %v1379 = vmax.bf16 %v1314, %v1347
        %v1380 = vmax.bf16 %v1315, %v1348
        %v1381 = vmax.bf16 %v1316, %v1349
        %v1382 = vmax.bf16 %v1317, %v1350
        %v1383 = vmax.bf16 %v1318, %v1351
        %v1384 = vmax.bf16 %v1319, %v1352
        %v1385 = vmax.bf16 %v1320, %v1353
        %v1386 = vmax.bf16 %v1321, %v1354
        %v1387 = vmax.bf16 %v1322, %v1355
        %v1388 = vmax.bf16 %v1323, %v1356
        %v1389 = vmax.bf16 %v1324, %v1357
        %v1390 = vmax.bf16 %v1325, %v1358
        %v1391 = vmax.bf16 %v1326, %v1359
        %v1392 = vmax.bf16 %v1327, %v1360
        %v1393 = vmax.bf16 %v1328, %v1361
        %v1394 = vmax.bf16 %v1329, %v1362
        %v1395 = vmax.bf16 %v1330, %v1363
        %v1396 = vmax.bf16 %v1331, %v1364
        %v1397 = vmax.bf16 %v1332, %v1365
        %v1398 = vmax.bf16 %v1333, %v1366
        %v1399 = vmax.bf16 %v1334, %v1367
        %v1400 = vmax.bf16 %v1335, %v1368
        %v1401 = vmax.bf16 %v1336, %v1369
        %v1402 = vmax.bf16 %v1337, %v1370
        %v1403 = vmax.bf16 %v1338, %v1371
        %s1404 = scalar_lea.vmem %s1288, 256 [#allocation2]
        %v1405 = vld [vmem:[%s1404] sm:$0xf]
        %v1406 = vld [vmem:[%s1404 + $0x4] sm:$0xf]
        %v1407 = vld [vmem:[%s1404 + $0x8] sm:$0xf]
        %v1408 = vld [vmem:[%s1404 + $0xc] sm:$0xf]
        %v1409 = vld [vmem:[%s1404 + $0x10] sm:$0xf]
        %v1410 = vld [vmem:[%s1404 + $0x14] sm:$0xf]
        %v1411 = vld [vmem:[%s1404 + $0x18] sm:$0xf]
        %v1412 = vld [vmem:[%s1404 + $0x1c] sm:$0xf]
        %v1413 = vld [vmem:[%s1404 + $0x20] sm:$0xf]
        %v1414 = vld [vmem:[%s1404 + $0x24] sm:$0xf]
        %v1415 = vld [vmem:[%s1404 + $0x28] sm:$0xf]
        %v1416 = vld [vmem:[%s1404 + $0x2c] sm:$0xf]
        %v1417 = vld [vmem:[%s1404 + $0x30] sm:$0xf]
        %v1418 = vld [vmem:[%s1404 + $0x34] sm:$0xf]
        %v1419 = vld [vmem:[%s1404 + $0x38] sm:$0xf]
        %v1420 = vld [vmem:[%s1404 + $0x3c] sm:$0xf]
        %v1421 = vld [vmem:[%s1404 + $0x40] sm:$0xf]
        %v1422 = vld [vmem:[%s1404 + $0x44] sm:$0xf]
        %v1423 = vld [vmem:[%s1404 + $0x48] sm:$0xf]
        %v1424 = vld [vmem:[%s1404 + $0x4c] sm:$0xf]
        %v1425 = vld [vmem:[%s1404 + $0x50] sm:$0xf]
        %v1426 = vld [vmem:[%s1404 + $0x54] sm:$0xf]
        %v1427 = vld [vmem:[%s1404 + $0x58] sm:$0xf]
        %v1428 = vld [vmem:[%s1404 + $0x5c] sm:$0xf]
        %v1429 = vld [vmem:[%s1404 + $0x60] sm:$0xf]
        %v1430 = vld [vmem:[%s1404 + $0x64] sm:$0xf]
        %v1431 = vld [vmem:[%s1404 + $0x68] sm:$0xf]
        %v1432 = vld [vmem:[%s1404 + $0x6c] sm:$0xf]
        %v1433 = vld [vmem:[%s1404 + $0x70] sm:$0xf]
        %v1434 = vld [vmem:[%s1404 + $0x74] sm:$0xf]
        %v1435 = vld [vmem:[%s1404 + $0x78] sm:$0xf]
        %v1436 = vld [vmem:[%s1404 + $0x7c] sm:$0xf]
        %v1437 = vmax.bf16 %v1372, %v1405
        %v1438 = vmax.bf16 %v1373, %v1406
        %v1439 = vmax.bf16 %v1374, %v1407
        %v1440 = vmax.bf16 %v1375, %v1408
        %v1441 = vmax.bf16 %v1376, %v1409
        %v1442 = vmax.bf16 %v1377, %v1410
        %v1443 = vmax.bf16 %v1378, %v1411
        %v1444 = vmax.bf16 %v1379, %v1412
        %v1445 = vmax.bf16 %v1380, %v1413
        %v1446 = vmax.bf16 %v1381, %v1414
        %v1447 = vmax.bf16 %v1382, %v1415
        %v1448 = vmax.bf16 %v1383, %v1416
        %v1449 = vmax.bf16 %v1384, %v1417
        %v1450 = vmax.bf16 %v1385, %v1418
        %v1451 = vmax.bf16 %v1386, %v1419
        %v1452 = vmax.bf16 %v1387, %v1420
        %v1453 = vmax.bf16 %v1388, %v1421
        %v1454 = vmax.bf16 %v1389, %v1422
        %v1455 = vmax.bf16 %v1390, %v1423
        %v1456 = vmax.bf16 %v1391, %v1424
        %v1457 = vmax.bf16 %v1392, %v1425
        %v1458 = vmax.bf16 %v1393, %v1426
        %v1459 = vmax.bf16 %v1394, %v1427
        %v1460 = vmax.bf16 %v1395, %v1428
        %v1461 = vmax.bf16 %v1396, %v1429
        %v1462 = vmax.bf16 %v1397, %v1430
        %v1463 = vmax.bf16 %v1398, %v1431
        %v1464 = vmax.bf16 %v1399, %v1432
        %v1465 = vmax.bf16 %v1400, %v1433
        %v1466 = vmax.bf16 %v1401, %v1434
        %v1467 = vmax.bf16 %v1402, %v1435
        %v1468 = vmax.bf16 %v1403, %v1436
        %s1469 = scalar_lea.vmem %s1288, 384 [#allocation2]
        %v1470 = vld [vmem:[%s1469] sm:$0xf]
        %v1471 = vld [vmem:[%s1469 + $0x4] sm:$0xf]
        %v1472 = vld [vmem:[%s1469 + $0x8] sm:$0xf]
        %v1473 = vld [vmem:[%s1469 + $0xc] sm:$0xf]
        %v1474 = vld [vmem:[%s1469 + $0x10] sm:$0xf]
        %v1475 = vld [vmem:[%s1469 + $0x14] sm:$0xf]
        %v1476 = vld [vmem:[%s1469 + $0x18] sm:$0xf]
        %v1477 = vld [vmem:[%s1469 + $0x1c] sm:$0xf]
        %v1478 = vld [vmem:[%s1469 + $0x20] sm:$0xf]
        %v1479 = vld [vmem:[%s1469 + $0x24] sm:$0xf]
        %v1480 = vld [vmem:[%s1469 + $0x28] sm:$0xf]
        %v1481 = vld [vmem:[%s1469 + $0x2c] sm:$0xf]
        %v1482 = vld [vmem:[%s1469 + $0x30] sm:$0xf]
        %v1483 = vld [vmem:[%s1469 + $0x34] sm:$0xf]
        %v1484 = vld [vmem:[%s1469 + $0x38] sm:$0xf]
        %v1485 = vld [vmem:[%s1469 + $0x3c] sm:$0xf]
        %v1486 = vld [vmem:[%s1469 + $0x40] sm:$0xf]
        %v1487 = vld [vmem:[%s1469 + $0x44] sm:$0xf]
        %v1488 = vld [vmem:[%s1469 + $0x48] sm:$0xf]
        %v1489 = vld [vmem:[%s1469 + $0x4c] sm:$0xf]
        %v1490 = vld [vmem:[%s1469 + $0x50] sm:$0xf]
        %v1491 = vld [vmem:[%s1469 + $0x54] sm:$0xf]
        %v1492 = vld [vmem:[%s1469 + $0x58] sm:$0xf]
        %v1493 = vld [vmem:[%s1469 + $0x5c] sm:$0xf]
        %v1494 = vld [vmem:[%s1469 + $0x60] sm:$0xf]
        %v1495 = vld [vmem:[%s1469 + $0x64] sm:$0xf]
        %v1496 = vld [vmem:[%s1469 + $0x68] sm:$0xf]
        %v1497 = vld [vmem:[%s1469 + $0x6c] sm:$0xf]
        %v1498 = vld [vmem:[%s1469 + $0x70] sm:$0xf]
        %v1499 = vld [vmem:[%s1469 + $0x74] sm:$0xf]
        %v1500 = vld [vmem:[%s1469 + $0x78] sm:$0xf]
        %v1501 = vld [vmem:[%s1469 + $0x7c] sm:$0xf]
        %v1502 = vmax.bf16 %v1437, %v1470
        %v1503 = vmax.bf16 %v1438, %v1471
        %v1504 = vmax.bf16 %v1439, %v1472
        %v1505 = vmax.bf16 %v1440, %v1473
        %v1506 = vmax.bf16 %v1441, %v1474
        %v1507 = vmax.bf16 %v1442, %v1475
        %v1508 = vmax.bf16 %v1443, %v1476
        %v1509 = vmax.bf16 %v1444, %v1477
        %v1510 = vmax.bf16 %v1445, %v1478
        %v1511 = vmax.bf16 %v1446, %v1479
        %v1512 = vmax.bf16 %v1447, %v1480
        %v1513 = vmax.bf16 %v1448, %v1481
        %v1514 = vmax.bf16 %v1449, %v1482
        %v1515 = vmax.bf16 %v1450, %v1483
        %v1516 = vmax.bf16 %v1451, %v1484
        %v1517 = vmax.bf16 %v1452, %v1485
        %v1518 = vmax.bf16 %v1453, %v1486
        %v1519 = vmax.bf16 %v1454, %v1487
        %v1520 = vmax.bf16 %v1455, %v1488
        %v1521 = vmax.bf16 %v1456, %v1489
        %v1522 = vmax.bf16 %v1457, %v1490
        %v1523 = vmax.bf16 %v1458, %v1491
        %v1524 = vmax.bf16 %v1459, %v1492
        %v1525 = vmax.bf16 %v1460, %v1493
        %v1526 = vmax.bf16 %v1461, %v1494
        %v1527 = vmax.bf16 %v1462, %v1495
        %v1528 = vmax.bf16 %v1463, %v1496
        %v1529 = vmax.bf16 %v1464, %v1497
        %v1530 = vmax.bf16 %v1465, %v1498
        %v1531 = vmax.bf16 %v1466, %v1499
        %v1532 = vmax.bf16 %v1467, %v1500
        %v1533 = vmax.bf16 %v1468, %v1501
        %s1534 = scalar_lea.vmem %s1288, 512 [#allocation2]
        %v1535 = vld [vmem:[%s1534] sm:$0xf]
        %v1536 = vld [vmem:[%s1534 + $0x4] sm:$0xf]
        %v1537 = vld [vmem:[%s1534 + $0x8] sm:$0xf]
        %v1538 = vld [vmem:[%s1534 + $0xc] sm:$0xf]
        %v1539 = vld [vmem:[%s1534 + $0x10] sm:$0xf]
        %v1540 = vld [vmem:[%s1534 + $0x14] sm:$0xf]
        %v1541 = vld [vmem:[%s1534 + $0x18] sm:$0xf]
        %v1542 = vld [vmem:[%s1534 + $0x1c] sm:$0xf]
        %v1543 = vld [vmem:[%s1534 + $0x20] sm:$0xf]
        %v1544 = vld [vmem:[%s1534 + $0x24] sm:$0xf]
        %v1545 = vld [vmem:[%s1534 + $0x28] sm:$0xf]
        %v1546 = vld [vmem:[%s1534 + $0x2c] sm:$0xf]
        %v1547 = vld [vmem:[%s1534 + $0x30] sm:$0xf]
        %v1548 = vld [vmem:[%s1534 + $0x34] sm:$0xf]
        %v1549 = vld [vmem:[%s1534 + $0x38] sm:$0xf]
        %v1550 = vld [vmem:[%s1534 + $0x3c] sm:$0xf]
        %v1551 = vld [vmem:[%s1534 + $0x40] sm:$0xf]
        %v1552 = vld [vmem:[%s1534 + $0x44] sm:$0xf]
        %v1553 = vld [vmem:[%s1534 + $0x48] sm:$0xf]
        %v1554 = vld [vmem:[%s1534 + $0x4c] sm:$0xf]
        %v1555 = vld [vmem:[%s1534 + $0x50] sm:$0xf]
        %v1556 = vld [vmem:[%s1534 + $0x54] sm:$0xf]
        %v1557 = vld [vmem:[%s1534 + $0x58] sm:$0xf]
        %v1558 = vld [vmem:[%s1534 + $0x5c] sm:$0xf]
        %v1559 = vld [vmem:[%s1534 + $0x60] sm:$0xf]
        %v1560 = vld [vmem:[%s1534 + $0x64] sm:$0xf]
        %v1561 = vld [vmem:[%s1534 + $0x68] sm:$0xf]
        %v1562 = vld [vmem:[%s1534 + $0x6c] sm:$0xf]
        %v1563 = vld [vmem:[%s1534 + $0x70] sm:$0xf]
        %v1564 = vld [vmem:[%s1534 + $0x74] sm:$0xf]
        %v1565 = vld [vmem:[%s1534 + $0x78] sm:$0xf]
        %v1566 = vld [vmem:[%s1534 + $0x7c] sm:$0xf]
        %v1567 = vmax.bf16 %v1502, %v1535
        %v1568 = vmax.bf16 %v1503, %v1536
        %v1569 = vmax.bf16 %v1504, %v1537
        %v1570 = vmax.bf16 %v1505, %v1538
        %v1571 = vmax.bf16 %v1506, %v1539
        %v1572 = vmax.bf16 %v1507, %v1540
        %v1573 = vmax.bf16 %v1508, %v1541
        %v1574 = vmax.bf16 %v1509, %v1542
        %v1575 = vmax.bf16 %v1510, %v1543
        %v1576 = vmax.bf16 %v1511, %v1544
        %v1577 = vmax.bf16 %v1512, %v1545
        %v1578 = vmax.bf16 %v1513, %v1546
        %v1579 = vmax.bf16 %v1514, %v1547
        %v1580 = vmax.bf16 %v1515, %v1548
        %v1581 = vmax.bf16 %v1516, %v1549
        %v1582 = vmax.bf16 %v1517, %v1550
        %v1583 = vmax.bf16 %v1518, %v1551
        %v1584 = vmax.bf16 %v1519, %v1552
        %v1585 = vmax.bf16 %v1520, %v1553
        %v1586 = vmax.bf16 %v1521, %v1554
        %v1587 = vmax.bf16 %v1522, %v1555
        %v1588 = vmax.bf16 %v1523, %v1556
        %v1589 = vmax.bf16 %v1524, %v1557
        %v1590 = vmax.bf16 %v1525, %v1558
        %v1591 = vmax.bf16 %v1526, %v1559
        %v1592 = vmax.bf16 %v1527, %v1560
        %v1593 = vmax.bf16 %v1528, %v1561
        %v1594 = vmax.bf16 %v1529, %v1562
        %v1595 = vmax.bf16 %v1530, %v1563
        %v1596 = vmax.bf16 %v1531, %v1564
        %v1597 = vmax.bf16 %v1532, %v1565
        %v1598 = vmax.bf16 %v1533, %v1566
        %s1599 = scalar_lea.vmem %s1288, 640 [#allocation2]
        %v1600 = vld [vmem:[%s1599] sm:$0xf]
        %v1601 = vld [vmem:[%s1599 + $0x4] sm:$0xf]
        %v1602 = vld [vmem:[%s1599 + $0x8] sm:$0xf]
        %v1603 = vld [vmem:[%s1599 + $0xc] sm:$0xf]
        %v1604 = vld [vmem:[%s1599 + $0x10] sm:$0xf]
        %v1605 = vld [vmem:[%s1599 + $0x14] sm:$0xf]
        %v1606 = vld [vmem:[%s1599 + $0x18] sm:$0xf]
        %v1607 = vld [vmem:[%s1599 + $0x1c] sm:$0xf]
        %v1608 = vld [vmem:[%s1599 + $0x20] sm:$0xf]
        %v1609 = vld [vmem:[%s1599 + $0x24] sm:$0xf]
        %v1610 = vld [vmem:[%s1599 + $0x28] sm:$0xf]
        %v1611 = vld [vmem:[%s1599 + $0x2c] sm:$0xf]
        %v1612 = vld [vmem:[%s1599 + $0x30] sm:$0xf]
        %v1613 = vld [vmem:[%s1599 + $0x34] sm:$0xf]
        %v1614 = vld [vmem:[%s1599 + $0x38] sm:$0xf]
        %v1615 = vld [vmem:[%s1599 + $0x3c] sm:$0xf]
        %v1616 = vld [vmem:[%s1599 + $0x40] sm:$0xf]
        %v1617 = vld [vmem:[%s1599 + $0x44] sm:$0xf]
        %v1618 = vld [vmem:[%s1599 + $0x48] sm:$0xf]
        %v1619 = vld [vmem:[%s1599 + $0x4c] sm:$0xf]
        %v1620 = vld [vmem:[%s1599 + $0x50] sm:$0xf]
        %v1621 = vld [vmem:[%s1599 + $0x54] sm:$0xf]
        %v1622 = vld [vmem:[%s1599 + $0x58] sm:$0xf]
        %v1623 = vld [vmem:[%s1599 + $0x5c] sm:$0xf]
        %v1624 = vld [vmem:[%s1599 + $0x60] sm:$0xf]
        %v1625 = vld [vmem:[%s1599 + $0x64] sm:$0xf]
        %v1626 = vld [vmem:[%s1599 + $0x68] sm:$0xf]
        %v1627 = vld [vmem:[%s1599 + $0x6c] sm:$0xf]
        %v1628 = vld [vmem:[%s1599 + $0x70] sm:$0xf]
        %v1629 = vld [vmem:[%s1599 + $0x74] sm:$0xf]
        %v1630 = vld [vmem:[%s1599 + $0x78] sm:$0xf]
        %v1631 = vld [vmem:[%s1599 + $0x7c] sm:$0xf]
        %v1632 = vmax.bf16 %v1567, %v1600
        %v1633 = vmax.bf16 %v1568, %v1601
        %v1634 = vmax.bf16 %v1569, %v1602
        %v1635 = vmax.bf16 %v1570, %v1603
        %v1636 = vmax.bf16 %v1571, %v1604
        %v1637 = vmax.bf16 %v1572, %v1605
        %v1638 = vmax.bf16 %v1573, %v1606
        %v1639 = vmax.bf16 %v1574, %v1607
        %v1640 = vmax.bf16 %v1575, %v1608
        %v1641 = vmax.bf16 %v1576, %v1609
        %v1642 = vmax.bf16 %v1577, %v1610
        %v1643 = vmax.bf16 %v1578, %v1611
        %v1644 = vmax.bf16 %v1579, %v1612
        %v1645 = vmax.bf16 %v1580, %v1613
        %v1646 = vmax.bf16 %v1581, %v1614
        %v1647 = vmax.bf16 %v1582, %v1615
        %v1648 = vmax.bf16 %v1583, %v1616
        %v1649 = vmax.bf16 %v1584, %v1617
        %v1650 = vmax.bf16 %v1585, %v1618
        %v1651 = vmax.bf16 %v1586, %v1619
        %v1652 = vmax.bf16 %v1587, %v1620
        %v1653 = vmax.bf16 %v1588, %v1621
        %v1654 = vmax.bf16 %v1589, %v1622
        %v1655 = vmax.bf16 %v1590, %v1623
        %v1656 = vmax.bf16 %v1591, %v1624
        %v1657 = vmax.bf16 %v1592, %v1625
        %v1658 = vmax.bf16 %v1593, %v1626
        %v1659 = vmax.bf16 %v1594, %v1627
        %v1660 = vmax.bf16 %v1595, %v1628
        %v1661 = vmax.bf16 %v1596, %v1629
        %v1662 = vmax.bf16 %v1597, %v1630
        %v1663 = vmax.bf16 %v1598, %v1631
        %s1664 = scalar_lea.vmem %s1288, 768 [#allocation2]
        %v1665 = vld [vmem:[%s1664] sm:$0xf]
        %v1666 = vld [vmem:[%s1664 + $0x4] sm:$0xf]
        %v1667 = vld [vmem:[%s1664 + $0x8] sm:$0xf]
        %v1668 = vld [vmem:[%s1664 + $0xc] sm:$0xf]
        %v1669 = vld [vmem:[%s1664 + $0x10] sm:$0xf]
        %v1670 = vld [vmem:[%s1664 + $0x14] sm:$0xf]
        %v1671 = vld [vmem:[%s1664 + $0x18] sm:$0xf]
        %v1672 = vld [vmem:[%s1664 + $0x1c] sm:$0xf]
        %v1673 = vld [vmem:[%s1664 + $0x20] sm:$0xf]
        %v1674 = vld [vmem:[%s1664 + $0x24] sm:$0xf]
        %v1675 = vld [vmem:[%s1664 + $0x28] sm:$0xf]
        %v1676 = vld [vmem:[%s1664 + $0x2c] sm:$0xf]
        %v1677 = vld [vmem:[%s1664 + $0x30] sm:$0xf]
        %v1678 = vld [vmem:[%s1664 + $0x34] sm:$0xf]
        %v1679 = vld [vmem:[%s1664 + $0x38] sm:$0xf]
        %v1680 = vld [vmem:[%s1664 + $0x3c] sm:$0xf]
        %v1681 = vld [vmem:[%s1664 + $0x40] sm:$0xf]
        %v1682 = vld [vmem:[%s1664 + $0x44] sm:$0xf]
        %v1683 = vld [vmem:[%s1664 + $0x48] sm:$0xf]
        %v1684 = vld [vmem:[%s1664 + $0x4c] sm:$0xf]
        %v1685 = vld [vmem:[%s1664 + $0x50] sm:$0xf]
        %v1686 = vld [vmem:[%s1664 + $0x54] sm:$0xf]
        %v1687 = vld [vmem:[%s1664 + $0x58] sm:$0xf]
        %v1688 = vld [vmem:[%s1664 + $0x5c] sm:$0xf]
        %v1689 = vld [vmem:[%s1664 + $0x60] sm:$0xf]
        %v1690 = vld [vmem:[%s1664 + $0x64] sm:$0xf]
        %v1691 = vld [vmem:[%s1664 + $0x68] sm:$0xf]
        %v1692 = vld [vmem:[%s1664 + $0x6c] sm:$0xf]
        %v1693 = vld [vmem:[%s1664 + $0x70] sm:$0xf]
        %v1694 = vld [vmem:[%s1664 + $0x74] sm:$0xf]
        %v1695 = vld [vmem:[%s1664 + $0x78] sm:$0xf]
        %v1696 = vld [vmem:[%s1664 + $0x7c] sm:$0xf]
        %v1697 = vmax.bf16 %v1632, %v1665
        %v1698 = vmax.bf16 %v1633, %v1666
        %v1699 = vmax.bf16 %v1634, %v1667
        %v1700 = vmax.bf16 %v1635, %v1668
        %v1701 = vmax.bf16 %v1636, %v1669
        %v1702 = vmax.bf16 %v1637, %v1670
        %v1703 = vmax.bf16 %v1638, %v1671
        %v1704 = vmax.bf16 %v1639, %v1672
        %v1705 = vmax.bf16 %v1640, %v1673
        %v1706 = vmax.bf16 %v1641, %v1674
        %v1707 = vmax.bf16 %v1642, %v1675
        %v1708 = vmax.bf16 %v1643, %v1676
        %v1709 = vmax.bf16 %v1644, %v1677
        %v1710 = vmax.bf16 %v1645, %v1678
        %v1711 = vmax.bf16 %v1646, %v1679
        %v1712 = vmax.bf16 %v1647, %v1680
        %v1713 = vmax.bf16 %v1648, %v1681
        %v1714 = vmax.bf16 %v1649, %v1682
        %v1715 = vmax.bf16 %v1650, %v1683
        %v1716 = vmax.bf16 %v1651, %v1684
        %v1717 = vmax.bf16 %v1652, %v1685
        %v1718 = vmax.bf16 %v1653, %v1686
        %v1719 = vmax.bf16 %v1654, %v1687
        %v1720 = vmax.bf16 %v1655, %v1688
        %v1721 = vmax.bf16 %v1656, %v1689
        %v1722 = vmax.bf16 %v1657, %v1690
        %v1723 = vmax.bf16 %v1658, %v1691
        %v1724 = vmax.bf16 %v1659, %v1692
        %v1725 = vmax.bf16 %v1660, %v1693
        %v1726 = vmax.bf16 %v1661, %v1694
        %v1727 = vmax.bf16 %v1662, %v1695
        %v1728 = vmax.bf16 %v1663, %v1696
        %s1729 = scalar_lea.vmem %s1288, 896 [#allocation2]
        %v1730 = vld [vmem:[%s1729] sm:$0xf]
        %v1731 = vld [vmem:[%s1729 + $0x4] sm:$0xf]
        %v1732 = vld [vmem:[%s1729 + $0x8] sm:$0xf]
        %v1733 = vld [vmem:[%s1729 + $0xc] sm:$0xf]
        %v1734 = vld [vmem:[%s1729 + $0x10] sm:$0xf]
        %v1735 = vld [vmem:[%s1729 + $0x14] sm:$0xf]
        %v1736 = vld [vmem:[%s1729 + $0x18] sm:$0xf]
        %v1737 = vld [vmem:[%s1729 + $0x1c] sm:$0xf]
        %v1738 = vld [vmem:[%s1729 + $0x20] sm:$0xf]
        %v1739 = vld [vmem:[%s1729 + $0x24] sm:$0xf]
        %v1740 = vld [vmem:[%s1729 + $0x28] sm:$0xf]
        %v1741 = vld [vmem:[%s1729 + $0x2c] sm:$0xf]
        %v1742 = vld [vmem:[%s1729 + $0x30] sm:$0xf]
        %v1743 = vld [vmem:[%s1729 + $0x34] sm:$0xf]
        %v1744 = vld [vmem:[%s1729 + $0x38] sm:$0xf]
        %v1745 = vld [vmem:[%s1729 + $0x3c] sm:$0xf]
        %v1746 = vld [vmem:[%s1729 + $0x40] sm:$0xf]
        %v1747 = vld [vmem:[%s1729 + $0x44] sm:$0xf]
        %v1748 = vld [vmem:[%s1729 + $0x48] sm:$0xf]
        %v1749 = vld [vmem:[%s1729 + $0x4c] sm:$0xf]
        %v1750 = vld [vmem:[%s1729 + $0x50] sm:$0xf]
        %v1751 = vld [vmem:[%s1729 + $0x54] sm:$0xf]
        %v1752 = vld [vmem:[%s1729 + $0x58] sm:$0xf]
        %v1753 = vld [vmem:[%s1729 + $0x5c] sm:$0xf]
        %v1754 = vld [vmem:[%s1729 + $0x60] sm:$0xf]
        %v1755 = vld [vmem:[%s1729 + $0x64] sm:$0xf]
        %v1756 = vld [vmem:[%s1729 + $0x68] sm:$0xf]
        %v1757 = vld [vmem:[%s1729 + $0x6c] sm:$0xf]
        %v1758 = vld [vmem:[%s1729 + $0x70] sm:$0xf]
        %v1759 = vld [vmem:[%s1729 + $0x74] sm:$0xf]
        %v1760 = vld [vmem:[%s1729 + $0x78] sm:$0xf]
        %v1761 = vld [vmem:[%s1729 + $0x7c] sm:$0xf]
        %v1762 = vmax.bf16 %v1697, %v1730
        %v1763 = vmax.bf16 %v1698, %v1731
        %v1764 = vmax.bf16 %v1699, %v1732
        %v1765 = vmax.bf16 %v1700, %v1733
        %v1766 = vmax.bf16 %v1701, %v1734
        %v1767 = vmax.bf16 %v1702, %v1735
        %v1768 = vmax.bf16 %v1703, %v1736
        %v1769 = vmax.bf16 %v1704, %v1737
        %v1770 = vmax.bf16 %v1705, %v1738
        %v1771 = vmax.bf16 %v1706, %v1739
        %v1772 = vmax.bf16 %v1707, %v1740
        %v1773 = vmax.bf16 %v1708, %v1741
        %v1774 = vmax.bf16 %v1709, %v1742
        %v1775 = vmax.bf16 %v1710, %v1743
        %v1776 = vmax.bf16 %v1711, %v1744
        %v1777 = vmax.bf16 %v1712, %v1745
        %v1778 = vmax.bf16 %v1713, %v1746
        %v1779 = vmax.bf16 %v1714, %v1747
        %v1780 = vmax.bf16 %v1715, %v1748
        %v1781 = vmax.bf16 %v1716, %v1749
        %v1782 = vmax.bf16 %v1717, %v1750
        %v1783 = vmax.bf16 %v1718, %v1751
        %v1784 = vmax.bf16 %v1719, %v1752
        %v1785 = vmax.bf16 %v1720, %v1753
        %v1786 = vmax.bf16 %v1721, %v1754
        %v1787 = vmax.bf16 %v1722, %v1755
        %v1788 = vmax.bf16 %v1723, %v1756
        %v1789 = vmax.bf16 %v1724, %v1757
        %v1790 = vmax.bf16 %v1725, %v1758
        %v1791 = vmax.bf16 %v1726, %v1759
        %v1792 = vmax.bf16 %v1727, %v1760
        %v1793 = vmax.bf16 %v1728, %v1761
        %s1794 = scalar_lea.vmem %s1288, 1024 [#allocation2]
        %v1795 = vld [vmem:[%s1794] sm:$0xf]
        %v1796 = vld [vmem:[%s1794 + $0x4] sm:$0xf]
        %v1797 = vld [vmem:[%s1794 + $0x8] sm:$0xf]
        %v1798 = vld [vmem:[%s1794 + $0xc] sm:$0xf]
        %v1799 = vld [vmem:[%s1794 + $0x10] sm:$0xf]
        %v1800 = vld [vmem:[%s1794 + $0x14] sm:$0xf]
        %v1801 = vld [vmem:[%s1794 + $0x18] sm:$0xf]
        %v1802 = vld [vmem:[%s1794 + $0x1c] sm:$0xf]
        %v1803 = vld [vmem:[%s1794 + $0x20] sm:$0xf]
        %v1804 = vld [vmem:[%s1794 + $0x24] sm:$0xf]
        %v1805 = vld [vmem:[%s1794 + $0x28] sm:$0xf]
        %v1806 = vld [vmem:[%s1794 + $0x2c] sm:$0xf]
        %v1807 = vld [vmem:[%s1794 + $0x30] sm:$0xf]
        %v1808 = vld [vmem:[%s1794 + $0x34] sm:$0xf]
        %v1809 = vld [vmem:[%s1794 + $0x38] sm:$0xf]
        %v1810 = vld [vmem:[%s1794 + $0x3c] sm:$0xf]
        %v1811 = vld [vmem:[%s1794 + $0x40] sm:$0xf]
        %v1812 = vld [vmem:[%s1794 + $0x44] sm:$0xf]
        %v1813 = vld [vmem:[%s1794 + $0x48] sm:$0xf]
        %v1814 = vld [vmem:[%s1794 + $0x4c] sm:$0xf]
        %v1815 = vld [vmem:[%s1794 + $0x50] sm:$0xf]
        %v1816 = vld [vmem:[%s1794 + $0x54] sm:$0xf]
        %v1817 = vld [vmem:[%s1794 + $0x58] sm:$0xf]
        %v1818 = vld [vmem:[%s1794 + $0x5c] sm:$0xf]
        %v1819 = vld [vmem:[%s1794 + $0x60] sm:$0xf]
        %v1820 = vld [vmem:[%s1794 + $0x64] sm:$0xf]
        %v1821 = vld [vmem:[%s1794 + $0x68] sm:$0xf]
        %v1822 = vld [vmem:[%s1794 + $0x6c] sm:$0xf]
        %v1823 = vld [vmem:[%s1794 + $0x70] sm:$0xf]
        %v1824 = vld [vmem:[%s1794 + $0x74] sm:$0xf]
        %v1825 = vld [vmem:[%s1794 + $0x78] sm:$0xf]
        %v1826 = vld [vmem:[%s1794 + $0x7c] sm:$0xf]
        %v1827 = vmax.bf16 %v1762, %v1795
        %v1828 = vmax.bf16 %v1763, %v1796
        %v1829 = vmax.bf16 %v1764, %v1797
        %v1830 = vmax.bf16 %v1765, %v1798
        %v1831 = vmax.bf16 %v1766, %v1799
        %v1832 = vmax.bf16 %v1767, %v1800
        %v1833 = vmax.bf16 %v1768, %v1801
        %v1834 = vmax.bf16 %v1769, %v1802
        %v1835 = vmax.bf16 %v1770, %v1803
        %v1836 = vmax.bf16 %v1771, %v1804
        %v1837 = vmax.bf16 %v1772, %v1805
        %v1838 = vmax.bf16 %v1773, %v1806
        %v1839 = vmax.bf16 %v1774, %v1807
        %v1840 = vmax.bf16 %v1775, %v1808
        %v1841 = vmax.bf16 %v1776, %v1809
        %v1842 = vmax.bf16 %v1777, %v1810
        %v1843 = vmax.bf16 %v1778, %v1811
        %v1844 = vmax.bf16 %v1779, %v1812
        %v1845 = vmax.bf16 %v1780, %v1813
        %v1846 = vmax.bf16 %v1781, %v1814
        %v1847 = vmax.bf16 %v1782, %v1815
        %v1848 = vmax.bf16 %v1783, %v1816
        %v1849 = vmax.bf16 %v1784, %v1817
        %v1850 = vmax.bf16 %v1785, %v1818
        %v1851 = vmax.bf16 %v1786, %v1819
        %v1852 = vmax.bf16 %v1787, %v1820
        %v1853 = vmax.bf16 %v1788, %v1821
        %v1854 = vmax.bf16 %v1789, %v1822
        %v1855 = vmax.bf16 %v1790, %v1823
        %v1856 = vmax.bf16 %v1791, %v1824
        %v1857 = vmax.bf16 %v1792, %v1825
        %v1858 = vmax.bf16 %v1793, %v1826
        %1859 = vst [vmem:[%s1304] sm:$0xf] %v1827
        %1860 = vst [vmem:[%s1304 + $0x4] sm:$0xf] %v1828
        %1861 = vst [vmem:[%s1304 + $0x8] sm:$0xf] %v1829
        %1862 = vst [vmem:[%s1304 + $0xc] sm:$0xf] %v1830
        %1863 = vst [vmem:[%s1304 + $0x10] sm:$0xf] %v1831
        %1864 = vst [vmem:[%s1304 + $0x14] sm:$0xf] %v1832
        %1865 = vst [vmem:[%s1304 + $0x18] sm:$0xf] %v1833
        %1866 = vst [vmem:[%s1304 + $0x1c] sm:$0xf] %v1834
        %1867 = vst [vmem:[%s1304 + $0x20] sm:$0xf] %v1835
        %1868 = vst [vmem:[%s1304 + $0x24] sm:$0xf] %v1836
        %1869 = vst [vmem:[%s1304 + $0x28] sm:$0xf] %v1837
        %1870 = vst [vmem:[%s1304 + $0x2c] sm:$0xf] %v1838
        %1871 = vst [vmem:[%s1304 + $0x30] sm:$0xf] %v1839
        %1872 = vst [vmem:[%s1304 + $0x34] sm:$0xf] %v1840
        %1873 = vst [vmem:[%s1304 + $0x38] sm:$0xf] %v1841
        %1874 = vst [vmem:[%s1304 + $0x3c] sm:$0xf] %v1842
        %1875 = vst [vmem:[%s1304 + $0x40] sm:$0xf] %v1843
        %1876 = vst [vmem:[%s1304 + $0x44] sm:$0xf] %v1844
        %1877 = vst [vmem:[%s1304 + $0x48] sm:$0xf] %v1845
        %1878 = vst [vmem:[%s1304 + $0x4c] sm:$0xf] %v1846
        %1879 = vst [vmem:[%s1304 + $0x50] sm:$0xf] %v1847
        %1880 = vst [vmem:[%s1304 + $0x54] sm:$0xf] %v1848
        %1881 = vst [vmem:[%s1304 + $0x58] sm:$0xf] %v1849
        %1882 = vst [vmem:[%s1304 + $0x5c] sm:$0xf] %v1850
        %1883 = vst [vmem:[%s1304 + $0x60] sm:$0xf] %v1851
        %1884 = vst [vmem:[%s1304 + $0x64] sm:$0xf] %v1852
        %1885 = vst [vmem:[%s1304 + $0x68] sm:$0xf] %v1853
        %1886 = vst [vmem:[%s1304 + $0x6c] sm:$0xf] %v1854
        %1887 = vst [vmem:[%s1304 + $0x70] sm:$0xf] %v1855
        %1888 = vst [vmem:[%s1304 + $0x74] sm:$0xf] %v1856
        %1889 = vst [vmem:[%s1304 + $0x78] sm:$0xf] %v1857
        %1890 = vst [vmem:[%s1304 + $0x7c] sm:$0xf] %v1858
        %s1891 = sand.u32 %s49, 1
        %s1892 = scalar_lea.sflag [#allocation4], %s1891
        %s1893 = sand.u32 %s49, 1
        %s1894 = smul.addr %s1893, 128
        %s1895 = scalar_lea.vmem [#allocation3], %s1894
        // Predicated region
        $region66: #{stem_forward.3} parent=60 // pred_check
          %p1896 = pneg %p59
        $region67: #{stem_forward.3} parent=60 // pred_check_branch
          %1898 = sbr.rel (%p1896) target = $region69
        $region68: #{stem_forward.3} parent=60 // pred_region
          %s1899 = smul.u32 32, %s15
          %s1901 = ssub.s32 2048, 2048
          %1902 = vsyncadd %s1892, %s1901
          %s1903 = smul.addr %s1899, 64
          %s1904 = scalar_lea.hbm %s1, %s1903
          %s1905 = sshll.u32 %s1895, 4
          %s1906 = int_to_ptr.vmem [resolvable:$true] %s1905
          %1911 = dma.vmem_to_hbm [thread:$0]  %s1906, 2048, %s1904, %s1892, 64, 64, 4
        $region69: #{stem_forward.3} parent=60 // pred_fallthru
          _
      $region61: #{stem_forward.3} parent=5 // pred_fallthru
        _
      %p1912 = scmp.le.s32.totalorder 2, %s10
      // Predicated region
      $region70: #{stem_forward.3} parent=5 // pred_check
        %p1913 = pneg %p1912
      $region71: #{stem_forward.3} parent=5 // pred_check_branch
        %1915 = sbr.rel (%p1913) target = $region73
      $region72: #{stem_forward.3} parent=5 // pred_region
        %s1916 = ssub.s32 %s10, 2
        // Predicated region
        $region74: #{stem_forward.3} parent=72 // pred_check
          %p1917 = pneg %p65
        $region75: #{stem_forward.3} parent=72 // pred_check_branch
          %1919 = sbr.rel (%p1917) target = $region77
        $region76: #{stem_forward.3} parent=72 // pred_region
          %s1920 = sand.u32 %s50, 1
          %s1921 = scalar_lea.sflag [#allocation4], %s1920
          %s1922 = sand.u32 %s50, 1
          %s1923 = smul.addr %s1922, 128
          %s1924 = scalar_lea.vmem [#allocation3], %s1923
          %1925 = dma.done %s1921, 2048
        $region77: #{stem_forward.3} parent=72 // pred_fallthru
          _
      $region73: #{stem_forward.3} parent=5 // pred_fallthru
        _
    $region6: #{stem_forward.3} parent=1 // loop_footer
      %s14 = sadd.s32 1, %s10
    $region7: #{stem_forward.3} parent=1 // loop_footer_branch
      %9 = sbr.rel target = $region3
    $region8: #{stem_forward.3} parent=1 // loop_exit
      _
    %1926 = vsyncpa [#allocation4], 1
    %s1927 = scalar_lea.sflag [#allocation4], 1
    %1928 = vsyncpa %s1927, 1

</llo_original>
